<compile_context>
chip_gen: v7x
topology: tpu7x:2x2x1
jax: 0.10.0
libtpu: 0.0.40
codegen_flags: <defaults>
</compile_context>

<pallas_src>
import functools
import math

import jax
import jax.numpy as jnp
import numpy as np
from jax.experimental import pallas as pl
from jax.experimental.pallas import tpu as pltpu

LANE = 128
SUBLANE = 8


def _round_up(x, m):
    return (x + m - 1) // m * m


# ----------------------------------------------------------------------------
# Fused BasicBlock kernel (B images per grid step)
# ----------------------------------------------------------------------------

def _basic_block_kernel(p_ref, w1_ref, s1_ref, b1_ref, mask_ref,
                        w2_ref, s2_ref, b2_ref, r_ref, o_ref,
                        ypad_ref, *, n_pad, m_rows, wh, pp):
    """relu(bn2(conv2(relu(bn1(conv1(x))))) + shortcut(x)) for one batch slab.

    p_ref    : (m_rows, Kp)   bf16  conv1 im2col patches, B images stacked on rows
    w1_ref   : (Kp, Pp)       bf16  conv1 weights, (kh,kw,cin) x cout
    s1/b1    : (1, Pp)        f32   folded BN1 scale / bias
    mask_ref : (m_rows, 1)    f32   1 on interior rows, 0 on halo / tail rows
    w2_ref   : (3, 3*Pp, Pp)  bf16  conv2 weights, per-kh stack of the 3 kw taps
    s2/b2    : (1, Pp)        f32   folded BN2 scale / bias
    r_ref    : (m_rows, Pp)   bf16  shortcut, already on the haloed grid
    o_ref    : (m_rows, Pp)   bf16  block output on the haloed grid
    ypad_ref : (m_rows + 2*n_pad, 3*Pp) bf16 VMEM slab staging conv1's output,
               horizontally pre-shifted into 3 lane groups (one per kw tap).
    """
    # Zero the slab only once per launch: interior rows are fully rewritten
    # every step and stale pad rows only feed discarded halo/tail outputs.
    @pl.when(pl.program_id(0) == 0)
    def _init():
        ypad_ref[...] = jnp.zeros_like(ypad_ref)

    # ---- conv1 (one MXU matmul) + folded BN1 + ReLU, halo/tail masked -------
    acc1 = jnp.dot(p_ref[...], w1_ref[...], preferred_element_type=jnp.float32)
    y1 = (jnp.maximum(acc1 * s1_ref[...] + b1_ref[...], 0.0)
          * mask_ref[...]).astype(ypad_ref.dtype)

    # ---- stage y1: lane group g holds y1 shifted by (1 - g) rows ------------
    # (makes conv2's three kw taps a single contiguous lane read per kh)
    for g in range(3):
        ypad_ref[pl.ds(n_pad + 1 - g, m_rows), g * pp:(g + 1) * pp] = y1

    # ---- conv2 = 3 wide-K (K = 3*Pp) MXU matmuls, one per kh tap row --------
    acc2 = jnp.dot(ypad_ref[pl.ds(n_pad - wh, m_rows), :], w2_ref[0],
                   preferred_element_type=jnp.float32)
    acc2 = acc2 + jnp.dot(ypad_ref[pl.ds(n_pad, m_rows), :], w2_ref[1],
                          preferred_element_type=jnp.float32)
    acc2 = acc2 + jnp.dot(ypad_ref[pl.ds(n_pad + wh, m_rows), :], w2_ref[2],
                          preferred_element_type=jnp.float32)

    # ---- folded BN2 + residual + ReLU epilogue (f32 math, bf16 store) -------
    out = acc2 * s2_ref[...] + b2_ref[...] + r_ref[...].astype(jnp.float32)
    o_ref[...] = jnp.maximum(out, 0.0).astype(o_ref.dtype)


# ----------------------------------------------------------------------------
# One-time constant preparation (hoisted out of the per-call path)
# ----------------------------------------------------------------------------

def prepare_block_params(params, in_planes, planes, eps=1e-5):
    kp = _round_up(9 * in_planes, LANE)
    pp = _round_up(planes, LANE)

    def fold_bn(prefix):
        g, b = params[f"{prefix}_gamma"], params[f"{prefix}_beta"]
        m, v = params[f"{prefix}_mean"], params[f"{prefix}_var"]
        scale = g / jnp.sqrt(v + eps)
        bias = b - m * scale
        return (jnp.zeros((1, pp), jnp.float32).at[0, :planes].set(scale),
                jnp.zeros((1, pp), jnp.float32).at[0, :planes].set(bias))

    s1, b1 = fold_bn("bn1")
    s2, b2 = fold_bn("bn2")

    # conv1: (cout, cin, 3, 3) -> (kh, kw, cin, cout) -> (9*cin, cout), padded.
    w1 = jnp.transpose(params["conv1_w"], (2, 3, 1, 0)).reshape(9 * in_planes, planes)
    w1 = jnp.zeros((kp, pp), jnp.float32).at[:9 * in_planes, :planes].set(w1)
    # conv2: per-kh slab of the 3 kw taps stacked along K -> (3, 3*pp, pp).
    w2 = jnp.transpose(params["conv2_w"], (2, 3, 1, 0))           # (kh,kw,cin,cout)
    w2p = jnp.zeros((3, 3, pp, pp), jnp.float32).at[:, :, :planes, :planes].set(w2)
    w2p = w2p.reshape(3, 3 * pp, pp)

    return {"w1": w1.astype(jnp.bfloat16), "w2": w2p.astype(jnp.bfloat16),
            "s1": s1, "b1": b1, "s2": s2, "b2": b2}


# ----------------------------------------------------------------------------
# Forward wrapper
# ----------------------------------------------------------------------------

def basic_block_forward(x_nchw, prep, *, in_planes, planes, stride,
                        images_per_step=8):
    """BasicBlock forward; input/output in PyTorch NCHW layout."""
    x = jnp.transpose(x_nchw, (0, 2, 3, 1)).astype(jnp.float32)   # NHWC
    N, H, W, Cin = x.shape
    assert Cin == in_planes
    Ho = (H + 2 - 3) // stride + 1
    Wo = (W + 2 - 3) // stride + 1
    Hh, Wh = Ho + 2, Wo + 2                       # conv2-haloed output grid
    Mi = Hh * Wh
    Mi_g = _round_up(Mi, SUBLANE)                 # per-image row stride
    Kp = _round_up(9 * Cin, LANE)
    Pp = _round_up(planes, LANE)
    n_pad = _round_up(Wh, SUBLANE)                # slab head/tail pad rows

    # Images per grid step (amortizes per-step overhead; must divide N).
    B = min(images_per_step, N)
    while N % B:
        B -= 1
    m_rows = B * Mi_g

    # conv1 im2col patches, evaluated on the haloed grid (stride folded here).
    pad = stride + 1
    xp = jnp.pad(x, ((0, 0), (pad, pad), (pad, pad), (0, 0)))
    taps = [xp[:, kh:kh + stride * (Hh - 1) + 1:stride,
                  kw:kw + stride * (Wh - 1) + 1:stride, :]
            for kh in range(3) for kw in range(3)]
    patches = jnp.concatenate(taps, axis=-1).reshape(N, Mi, 9 * Cin)
    patches = jnp.pad(patches, ((0, 0), (0, Mi_g - Mi), (0, Kp - 9 * Cin)))
    patches = patches.astype(jnp.bfloat16).reshape(N * Mi_g, Kp)

    # Interior mask (zeroes conv1's halo ring == conv2's zero padding).
    mask = jnp.zeros((Hh, Wh), jnp.float32).at[1:1 + Ho, 1:1 + Wo].set(1.0)
    mask = jnp.pad(mask.reshape(Mi), (0, Mi_g - Mi))
    mask = jnp.tile(mask, (B,)).reshape(m_rows, 1)

    # Shortcut (option 'A' zero-pad, exactly like the PyTorch LambdaLayer),
    # laid out on the haloed grid so the kernel adds it in its epilogue.
    # TODO(synk): derive this in-kernel from the center conv1 tap instead.
    if stride != 1 or in_planes != planes:
        cpad = planes // 4
        assert in_planes + 2 * cpad == planes, "option-'A' shortcut shape mismatch"
        sc = x[:, ::2, ::2, :]
        sc = jnp.pad(sc, ((0, 0), (1, 1), (1, 1), (cpad, cpad + Pp - planes)))
    else:
        sc = jnp.pad(x, ((0, 0), (1, 1), (1, 1), (0, Pp - planes)))
    residual = jnp.pad(sc.reshape(N, Mi, Pp), ((0, 0), (0, Mi_g - Mi), (0, 0)))
    residual = residual.astype(jnp.bfloat16).reshape(N * Mi_g, Pp)

    out = pl.pallas_call(
        functools.partial(_basic_block_kernel, n_pad=n_pad, m_rows=m_rows,
                          wh=Wh, pp=Pp),
        out_shape=jax.ShapeDtypeStruct((N * Mi_g, Pp), jnp.bfloat16),
        grid=(N // B,),
        in_specs=[
            pl.BlockSpec((m_rows, Kp), lambda n: (n, 0)),        # patches
            pl.BlockSpec((Kp, Pp), lambda n: (0, 0)),            # w1
            pl.BlockSpec((1, Pp), lambda n: (0, 0)),             # bn1 scale
            pl.BlockSpec((1, Pp), lambda n: (0, 0)),             # bn1 bias
            pl.BlockSpec((m_rows, 1), lambda n: (0, 0)),         # halo mask
            pl.BlockSpec((3, 3 * Pp, Pp), lambda n: (0, 0, 0)),  # w2 (per-kh K-stack)
            pl.BlockSpec((1, Pp), lambda n: (0, 0)),             # bn2 scale
            pl.BlockSpec((1, Pp), lambda n: (0, 0)),             # bn2 bias
            pl.BlockSpec((m_rows, Pp), lambda n: (n, 0)),        # shortcut (bf16)
        ],
        out_specs=pl.BlockSpec((m_rows, Pp), lambda n: (n, 0)),
        scratch_shapes=[pltpu.VMEM((m_rows + 2 * n_pad, 3 * Pp), jnp.bfloat16)],
        compiler_params=pltpu.CompilerParams(
            dimension_semantics=("parallel",),
            vmem_limit_bytes=32 * 1024 * 1024),
    )(patches, prep["w1"], prep["s1"], prep["b1"], mask,
      prep["w2"], prep["s2"], prep["b2"], residual)

    # Drop lane padding, per-image tail rows and the halo ring (garbage rows).
    out = out.reshape(N, Mi_g, Pp)[:, :Mi, :planes]
    out = out.reshape(N, Hh, Wh, planes)[:, 1:1 + Ho, 1:1 + Wo, :]
    return jnp.transpose(out, (0, 3, 1, 2)).astype(jnp.float32)     # NCHW f32


# ----------------------------------------------------------------------------
# Pure-JAX reference (mirrors the PyTorch module) + test harness
# ----------------------------------------------------------------------------

def basic_block_reference(x_nchw, params, in_planes, planes, stride, eps=1e-5):
    def conv(v, w, s):
        return jax.lax.conv_general_dilated(
            v, w, window_strides=(s, s), padding=((1, 1), (1, 1)),
            dimension_numbers=("NCHW", "OIHW", "NCHW"))

    def bn(v, prefix):
        g = params[f"{prefix}_gamma"][None, :, None, None]
        b = params[f"{prefix}_beta"][None, :, None, None]
        m = params[f"{prefix}_mean"][None, :, None, None]
        var = params[f"{prefix}_var"][None, :, None, None]
        return (v - m) / jnp.sqrt(var + eps) * g + b

    x = x_nchw.astype(jnp.float32)
    out = jax.nn.relu(bn(conv(x, params["conv1_w"], stride), "bn1"))
    out = bn(conv(out, params["conv2_w"], 1), "bn2")
    if stride != 1 or in_planes != planes:
        sc = jnp.pad(x[:, :, ::2, ::2],
                     ((0, 0), (planes // 4, planes // 4), (0, 0), (0, 0)))
    else:
        sc = x
    return jax.nn.relu(out + sc)


def _make_block_params(key, in_planes, planes):
    ks = jax.random.split(key, 10)

    def conv_w(k, cout, cin):
        return (jax.random.normal(k, (cout, cin, 3, 3), jnp.float32)
                * math.sqrt(2.0 / (cin * 9)))

    p = {"conv1_w": conv_w(ks[0], planes, in_planes),
         "conv2_w": conv_w(ks[1], planes, planes)}
    for i, name in enumerate(("bn1", "bn2")):
        p[f"{name}_gamma"] = jax.random.uniform(ks[2 + 4 * i], (planes,),
                                                jnp.float32, 0.8, 1.2)
        p[f"{name}_beta"] = 0.1 * jax.random.normal(ks[3 + 4 * i], (planes,),
                                                    jnp.float32)
        p[f"{name}_mean"] = 0.1 * jax.random.normal(ks[4 + 4 * i], (planes,),
                                                    jnp.float32)
        p[f"{name}_var"] = jax.random.uniform(ks[5 + 4 * i], (planes,),
                                              jnp.float32, 0.8, 1.2)
    return p


def _run_case(key, *, n, in_planes, planes, stride, h, w, images_per_step):
    kp, kx = jax.random.split(key)
    params = _make_block_params(kp, in_planes, planes)
    prep = prepare_block_params(params, in_planes, planes)
    x = jax.random.normal(kx, (n, in_planes, h, w), jnp.float32)

    fwd = jax.jit(functools.partial(basic_block_forward, in_planes=in_planes,
                                    planes=planes, stride=stride,
                                    images_per_step=images_per_step))
    out = jax.block_until_ready(fwd(x, prep))

    ho = (h + 2 - 3) // stride + 1
    wo = (w + 2 - 3) // stride + 1
    assert out.shape == (n, planes, ho, wo) and out.dtype == jnp.float32

    ref = basic_block_reference(x, params, in_planes, planes, stride)
    np.testing.assert_allclose(np.asarray(out), np.asarray(ref),
                               atol=0.2, rtol=0.05)


if __name__ == "__main__":
    root = jax.random.PRNGKey(0)
    k_down, k_id = jax.random.split(root)
    # Down-sampling BasicBlock with option-'A' zero-pad shortcut (16 -> 32, /2);
    # 2 images per grid step -> a 2-step grid (exercises the multi-step path,
    # even grid length for v7x's two TensorCores).
    _run_case(k_down, n=4, in_planes=16, planes=32, stride=2, h=16, w=16,
              images_per_step=2)
    # Identity-shortcut BasicBlock (16 -> 16, stride 1).
    _run_case(k_id, n=4, in_planes=16, planes=16, stride=1, h=16, w=16,
              images_per_step=2)
    print("KERNEL_OK")
</pallas_src>

<mosaic_0001>
module attributes {stable_mosaic.version = 11 : i64} {
  func.func @_basic_block_kernel(%arg0: i32, %arg1: memref<208x256xbf16, #tpu.memory_space<vmem>>, %arg2: memref<256x128xbf16, #tpu.memory_space<vmem>>, %arg3: memref<1x128xf32, #tpu.memory_space<vmem>>, %arg4: memref<1x128xf32, #tpu.memory_space<vmem>>, %arg5: memref<208x1xf32, #tpu.memory_space<vmem>>, %arg6: memref<3x384x128xbf16, #tpu.memory_space<vmem>>, %arg7: memref<1x128xf32, #tpu.memory_space<vmem>>, %arg8: memref<1x128xf32, #tpu.memory_space<vmem>>, %arg9: memref<208x128xbf16, #tpu.memory_space<vmem>>, %arg10: memref<208x128xbf16, #tpu.memory_space<vmem>>, %arg11: memref<240x384xbf16, #tpu.memory_space<vmem>>) attributes {dimension_semantics = [#tpu.dimension_semantics<parallel>], iteration_bounds = array<i64: 2>, scalar_prefetch = 0 : i64, scratch_operands = 1 : i64, tpu.core_type = #tpu.core_type<tc>, window_params = [{transform_indices = @transform_0, window_bounds = array<i64: 208, 256>}, {pipeline_mode = #tpu.pipeline_mode<synchronous>, transform_indices = @transform_1, window_bounds = array<i64: 256, 128>}, {pipeline_mode = #tpu.pipeline_mode<synchronous>, transform_indices = @transform_2, window_bounds = array<i64: 1, 128>}, {pipeline_mode = #tpu.pipeline_mode<synchronous>, transform_indices = @transform_3, window_bounds = array<i64: 1, 128>}, {pipeline_mode = #tpu.pipeline_mode<synchronous>, transform_indices = @transform_4, window_bounds = array<i64: 208, 1>}, {pipeline_mode = #tpu.pipeline_mode<synchronous>, transform_indices = @transform_5, window_bounds = array<i64: 3, 384, 128>}, {pipeline_mode = #tpu.pipeline_mode<synchronous>, transform_indices = @transform_6, window_bounds = array<i64: 1, 128>}, {pipeline_mode = #tpu.pipeline_mode<synchronous>, transform_indices = @transform_7, window_bounds = array<i64: 1, 128>}, {transform_indices = @transform_8, window_bounds = array<i64: 208, 128>}, {transform_indices = @transform_9, window_bounds = array<i64: 208, 128>}]} {
    %c0_i32 = arith.constant 0 : i32
    %0 = arith.cmpi eq, %arg0, %c0_i32 : i32
    %1 = arith.extui %0 : i1 to i32
    %c0_i32_0 = arith.constant 0 : i32
    %2 = arith.cmpi ne, %1, %c0_i32_0 : i32
    scf.if %2 {
      %cst_35 = arith.constant 0.000000e+00 : bf16
      %48 = vector.broadcast %cst_35 : bf16 to vector<240x384xbf16>
      %c0_36 = arith.constant 0 : index
      %c0_37 = arith.constant 0 : index
      %49 = vector.load %arg11[%c0_36, %c0_37] : memref<240x384xbf16, #tpu.memory_space<vmem>>, vector<240x384xbf16>
      tpu.vector_store %arg11[%c0_36, %c0_37], %48 {strides = array<i32>} : memref<240x384xbf16, #tpu.memory_space<vmem>>, vector<240x384xbf16>,
    } else {
    }
    %c0 = arith.constant 0 : index
    %c0_1 = arith.constant 0 : index
    %3 = vector.load %arg1[%c0, %c0_1] : memref<208x256xbf16, #tpu.memory_space<vmem>>, vector<208x256xbf16>
    %c0_2 = arith.constant 0 : index
    %c0_3 = arith.constant 0 : index
    %4 = vector.load %arg2[%c0_2, %c0_3] : memref<256x128xbf16, #tpu.memory_space<vmem>>, vector<256x128xbf16>
    %cst = arith.constant dense<0.000000e+00> : vector<208x128xf32>
    %5 = tpu.matmul %3, %4, %cst {dimension_numbers = #tpu.dot_dimension_numbers<[1], [0], [0], [1], [0, 0, 1, 1], [], []>} : vector<208x256xbf16>, vector<256x128xbf16>, vector<208x128xf32> -> vector<208x128xf32>
    %c0_4 = arith.constant 0 : index
    %c0_5 = arith.constant 0 : index
    %6 = vector.load %arg3[%c0_4, %c0_5] : memref<1x128xf32, #tpu.memory_space<vmem>>, vector<1x128xf32>
    %7 = vector.broadcast %6 : vector<1x128xf32> to vector<208x128xf32>
    %8 = arith.mulf %5, %7 : vector<208x128xf32>
    %c0_6 = arith.constant 0 : index
    %c0_7 = arith.constant 0 : index
    %9 = vector.load %arg4[%c0_6, %c0_7] : memref<1x128xf32, #tpu.memory_space<vmem>>, vector<1x128xf32>
    %10 = vector.broadcast %9 : vector<1x128xf32> to vector<208x128xf32>
    %11 = arith.addf %8, %10 : vector<208x128xf32>
    %cst_8 = arith.constant 0.000000e+00 : f32
    %12 = vector.broadcast %cst_8 : f32 to vector<208x128xf32>
    %13 = arith.maximumf %11, %12 : vector<208x128xf32>
    %c0_9 = arith.constant 0 : index
    %c0_10 = arith.constant 0 : index
    %14 = vector.load %arg5[%c0_9, %c0_10] : memref<208x1xf32, #tpu.memory_space<vmem>>, vector<208x1xf32>
    %15 = vector.broadcast %14 : vector<208x1xf32> to vector<208x128xf32>
    %16 = arith.mulf %13, %15 : vector<208x128xf32>
    %17 = arith.truncf %16 : vector<208x128xf32> to vector<208x128xbf16>
    %c17 = arith.constant 17 : index
    %c0_11 = arith.constant 0 : index
    %18 = vector.load %arg11[%c17, %c0_11] : memref<240x384xbf16, #tpu.memory_space<vmem>>, vector<208x128xbf16>
    tpu.vector_store %arg11[%c17, %c0_11], %17 {strides = array<i32>} : memref<240x384xbf16, #tpu.memory_space<vmem>>, vector<208x128xbf16>,
    %c16 = arith.constant 16 : index
    %c128 = arith.constant 128 : index
    %19 = vector.load %arg11[%c16, %c128] : memref<240x384xbf16, #tpu.memory_space<vmem>>, vector<208x128xbf16>
    tpu.vector_store %arg11[%c16, %c128], %17 {strides = array<i32>} : memref<240x384xbf16, #tpu.memory_space<vmem>>, vector<208x128xbf16>,
    %c15 = arith.constant 15 : index
    %c256 = arith.constant 256 : index
    %20 = vector.load %arg11[%c15, %c256] : memref<240x384xbf16, #tpu.memory_space<vmem>>, vector<208x128xbf16>
    tpu.vector_store %arg11[%c15, %c256], %17 {strides = array<i32>} : memref<240x384xbf16, #tpu.memory_space<vmem>>, vector<208x128xbf16>,
    %c6 = arith.constant 6 : index
    %c0_12 = arith.constant 0 : index
    %21 = vector.load %arg11[%c6, %c0_12] : memref<240x384xbf16, #tpu.memory_space<vmem>>, vector<208x384xbf16>
    %c0_13 = arith.constant 0 : index
    %c0_14 = arith.constant 0 : index
    %c0_15 = arith.constant 0 : index
    %22 = vector.load %arg6[%c0_13, %c0_14, %c0_15] : memref<3x384x128xbf16, #tpu.memory_space<vmem>>, vector<1x384x128xbf16>
    %23 = vector.shape_cast %22 : vector<1x384x128xbf16> to vector<384x128xbf16>
    %cst_16 = arith.constant dense<0.000000e+00> : vector<208x128xf32>
    %24 = tpu.matmul %21, %23, %cst_16 {dimension_numbers = #tpu.dot_dimension_numbers<[1], [0], [0], [1], [0, 0, 1, 1], [], []>} : vector<208x384xbf16>, vector<384x128xbf16>, vector<208x128xf32> -> vector<208x128xf32>
    %c16_17 = arith.constant 16 : index
    %c0_18 = arith.constant 0 : index
    %25 = vector.load %arg11[%c16_17, %c0_18] : memref<240x384xbf16, #tpu.memory_space<vmem>>, vector<208x384xbf16>
    %c1 = arith.constant 1 : index
    %c0_19 = arith.constant 0 : index
    %c0_20 = arith.constant 0 : index
    %26 = vector.load %arg6[%c1, %c0_19, %c0_20] : memref<3x384x128xbf16, #tpu.memory_space<vmem>>, vector<1x384x128xbf16>
    %27 = vector.shape_cast %26 : vector<1x384x128xbf16> to vector<384x128xbf16>
    %cst_21 = arith.constant dense<0.000000e+00> : vector<208x128xf32>
    %28 = tpu.matmul %25, %27, %cst_21 {dimension_numbers = #tpu.dot_dimension_numbers<[1], [0], [0], [1], [0, 0, 1, 1], [], []>} : vector<208x384xbf16>, vector<384x128xbf16>, vector<208x128xf32> -> vector<208x128xf32>
    %29 = arith.addf %24, %28 : vector<208x128xf32>
    %c26 = arith.constant 26 : index
    %c0_22 = arith.constant 0 : index
    %30 = vector.load %arg11[%c26, %c0_22] : memref<240x384xbf16, #tpu.memory_space<vmem>>, vector<208x384xbf16>
    %c2 = arith.constant 2 : index
    %c0_23 = arith.constant 0 : index
    %c0_24 = arith.constant 0 : index
    %31 = vector.load %arg6[%c2, %c0_23, %c0_24] : memref<3x384x128xbf16, #tpu.memory_space<vmem>>, vector<1x384x128xbf16>
    %32 = vector.shape_cast %31 : vector<1x384x128xbf16> to vector<384x128xbf16>
    %cst_25 = arith.constant dense<0.000000e+00> : vector<208x128xf32>
    %33 = tpu.matmul %30, %32, %cst_25 {dimension_numbers = #tpu.dot_dimension_numbers<[1], [0], [0], [1], [0, 0, 1, 1], [], []>} : vector<208x384xbf16>, vector<384x128xbf16>, vector<208x128xf32> -> vector<208x128xf32>
    %34 = arith.addf %29, %33 : vector<208x128xf32>
    %c0_26 = arith.constant 0 : index
    %c0_27 = arith.constant 0 : index
    %35 = vector.load %arg7[%c0_26, %c0_27] : memref<1x128xf32, #tpu.memory_space<vmem>>, vector<1x128xf32>
    %36 = vector.broadcast %35 : vector<1x128xf32> to vector<208x128xf32>
    %37 = arith.mulf %34, %36 : vector<208x128xf32>
    %c0_28 = arith.constant 0 : index
    %c0_29 = arith.constant 0 : index
    %38 = vector.load %arg8[%c0_28, %c0_29] : memref<1x128xf32, #tpu.memory_space<vmem>>, vector<1x128xf32>
    %39 = vector.broadcast %38 : vector<1x128xf32> to vector<208x128xf32>
    %40 = arith.addf %37, %39 : vector<208x128xf32>
    %c0_30 = arith.constant 0 : index
    %c0_31 = arith.constant 0 : index
    %41 = vector.load %arg9[%c0_30, %c0_31] : memref<208x128xbf16, #tpu.memory_space<vmem>>, vector<208x128xbf16>
    %42 = arith.extf %41 : vector<208x128xbf16> to vector<208x128xf32>
    %43 = arith.addf %40, %42 : vector<208x128xf32>
    %cst_32 = arith.constant 0.000000e+00 : f32
    %44 = vector.broadcast %cst_32 : f32 to vector<208x128xf32>
    %45 = arith.maximumf %43, %44 : vector<208x128xf32>
    %46 = arith.truncf %45 : vector<208x128xf32> to vector<208x128xbf16>
    %c0_33 = arith.constant 0 : index
    %c0_34 = arith.constant 0 : index
    %47 = vector.load %arg10[%c0_33, %c0_34] : memref<208x128xbf16, #tpu.memory_space<vmem>>, vector<208x128xbf16>
    tpu.vector_store %arg10[%c0_33, %c0_34], %46 {strides = array<i32>} : memref<208x128xbf16, #tpu.memory_space<vmem>>, vector<208x128xbf16>,
    return
  }
  func.func @transform_0(%arg0: i32) -> (i32, i32) {
    %c0_i32 = arith.constant 0 : i32
    %c0_i32_0 = arith.constant 0 : i32
    return %arg0, %c0_i32 : i32, i32
  }
  func.func @transform_1(%arg0: i32) -> (i32, i32) {
    %c0_i32 = arith.constant 0 : i32
    %c0_i32_0 = arith.constant 0 : i32
    %c0_i32_1 = arith.constant 0 : i32
    return %c0_i32, %c0_i32_0 : i32, i32
  }
  func.func @transform_2(%arg0: i32) -> (i32, i32) {
    %c0_i32 = arith.constant 0 : i32
    %c0_i32_0 = arith.constant 0 : i32
    %c0_i32_1 = arith.constant 0 : i32
    return %c0_i32, %c0_i32_0 : i32, i32
  }
  func.func @transform_3(%arg0: i32) -> (i32, i32) {
    %c0_i32 = arith.constant 0 : i32
    %c0_i32_0 = arith.constant 0 : i32
    %c0_i32_1 = arith.constant 0 : i32
    return %c0_i32, %c0_i32_0 : i32, i32
  }
  func.func @transform_4(%arg0: i32) -> (i32, i32) {
    %c0_i32 = arith.constant 0 : i32
    %c0_i32_0 = arith.constant 0 : i32
    %c0_i32_1 = arith.constant 0 : i32
    return %c0_i32, %c0_i32_0 : i32, i32
  }
  func.func @transform_5(%arg0: i32) -> (i32, i32, i32) {
    %c0_i32 = arith.constant 0 : i32
    %c0_i32_0 = arith.constant 0 : i32
    %c0_i32_1 = arith.constant 0 : i32
    %c0_i32_2 = arith.constant 0 : i32
    return %c0_i32, %c0_i32_0, %c0_i32_1 : i32, i32, i32
  }
  func.func @transform_6(%arg0: i32) -> (i32, i32) {
    %c0_i32 = arith.constant 0 : i32
    %c0_i32_0 = arith.constant 0 : i32
    %c0_i32_1 = arith.constant 0 : i32
    return %c0_i32, %c0_i32_0 : i32, i32
  }
  func.func @transform_7(%arg0: i32) -> (i32, i32) {
    %c0_i32 = arith.constant 0 : i32
    %c0_i32_0 = arith.constant 0 : i32
    %c0_i32_1 = arith.constant 0 : i32
    return %c0_i32, %c0_i32_0 : i32, i32
  }
  func.func @transform_8(%arg0: i32) -> (i32, i32) {
    %c0_i32 = arith.constant 0 : i32
    %c0_i32_0 = arith.constant 0 : i32
    return %arg0, %c0_i32 : i32, i32
  }
  func.func @transform_9(%arg0: i32) -> (i32, i32) {
    %c0_i32 = arith.constant 0 : i32
    %c0_i32_0 = arith.constant 0 : i32
    return %arg0, %c0_i32 : i32, i32
  }
}

</mosaic_0001>

<llo_original>
// kernel: tile.8
$region0: #{tile.8}
  #allocation0 [shape = 's32[1]{0}', space=sflag, size = 0x4, scoped, tag = 'scoped memory for tile.8']
  %s0 = inlined_call_operand.vmem [shape: f32[104], index: 0, kind: input, shape index: {}]
  %s1 = inlined_call_operand.vmem [shape: f32[2,104], index: 1, kind: output, shape index: {}]
  // Predicated region
  $region2: #{tile.8} parent=0 // pred_check
    _
  $region3: #{tile.8} parent=0 // pred_check_branch
    %3 = sbr.rel (0) target = $region5
  $region4: #{tile.8} parent=0 // pred_region
    _
  $region5: #{tile.8} parent=0 // pred_fallthru
    _
  %v4 = vld [vmem:[%s0] ss:$0 sm:$0xff]
  %5 = vst [vmem:[%s1] sm:$0x3] %v4

// kernel: tile.0
$region0: #{tile.0}
  %s0 = inlined_call_operand.vmem [shape: f32[2,104], index: 0, kind: input, shape index: {}]
  %s1 = inlined_call_operand.vmem [shape: f32[208,1], index: 1, kind: output, shape index: {}]
  $region1: #{tile.0} parent=0
    #allocation0 [shape = 'u8[4096]{0}', space=vmem, size = 0x1000, scoped, tag = 'scoped mem for input reshape']
    %s3 = sshllo.u32 0, 2
    %v4 = vld [vmem:[%s0] sm:%s3]
    %5 = vst [vmem:[#allocation0] sm:%s3] %v4
    %v6 = vld [vmem:[#allocation0] sm:$0x3]
    %vm7 = vcmask 7168
    %8 = vst.msk [vmem:[%s1] ss:$104 sm:$0x3] %vm7, %v6
    %v9 = vld [vmem:[#allocation0] sm:$0x3]
    %10 = vrot.lane.b32.xlu0 %v9, 127
    %v11 = vpop.permute.xlu0 %10
    %vm12 = vcmask 7168
    %s13 = scalar_lea.vmem %s1, 1
    %14 = vst.msk [vmem:[%s13] ss:$104 sm:$0x3] %vm12, %v11
    %v15 = vld [vmem:[#allocation0] sm:$0x3]
    %16 = vrot.lane.b32.xlu0 %v15, 126
    %v17 = vpop.permute.xlu0 %16
    %vm18 = vcmask 7168
    %s19 = scalar_lea.vmem %s1, 2
    %20 = vst.msk [vmem:[%s19] ss:$104 sm:$0x3] %vm18, %v17
    %v21 = vld [vmem:[#allocation0] sm:$0x3]
    %22 = vrot.lane.b32.xlu0 %v21, 125
    %v23 = vpop.permute.xlu0 %22
    %vm24 = vcmask 7168
    %s25 = scalar_lea.vmem %s1, 3
    %26 = vst.msk [vmem:[%s25] ss:$104 sm:$0x3] %vm24, %v23
    %v27 = vld [vmem:[#allocation0] sm:$0x3]
    %28 = vrot.lane.b32.xlu0 %v27, 124
    %v29 = vpop.permute.xlu0 %28
    %vm30 = vcmask 7168
    %s31 = scalar_lea.vmem %s1, 4
    %32 = vst.msk [vmem:[%s31] ss:$104 sm:$0x3] %vm30, %v29
    %v33 = vld [vmem:[#allocation0] sm:$0x3]
    %34 = vrot.lane.b32.xlu0 %v33, 123
    %v35 = vpop.permute.xlu0 %34
    %vm36 = vcmask 7168
    %s37 = scalar_lea.vmem %s1, 5
    %38 = vst.msk [vmem:[%s37] ss:$104 sm:$0x3] %vm36, %v35
    %v39 = vld [vmem:[#allocation0] sm:$0x3]
    %40 = vrot.lane.b32.xlu0 %v39, 122
    %v41 = vpop.permute.xlu0 %40
    %vm42 = vcmask 7168
    %s43 = scalar_lea.vmem %s1, 6
    %44 = vst.msk [vmem:[%s43] ss:$104 sm:$0x3] %vm42, %v41
    %v45 = vld [vmem:[#allocation0] sm:$0x3]
    %46 = vrot.lane.b32.xlu0 %v45, 121
    %v47 = vpop.permute.xlu0 %46
    %vm48 = vcmask 7168
    %s49 = scalar_lea.vmem %s1, 7
    %50 = vst.msk [vmem:[%s49] ss:$104 sm:$0x3] %vm48, %v47
    %v51 = vld [vmem:[#allocation0] sm:$0x3]
    %52 = vrot.lane.b32.xlu0 %v51, 120
    %v53 = vpop.permute.xlu0 %52
    %vm54 = vcmask 7168
    %s55 = scalar_lea.vmem %s1, 8
    %56 = vst.msk [vmem:[%s55] ss:$104 sm:$0x3] %vm54, %v53
    %v57 = vld [vmem:[#allocation0] sm:$0x3]
    %58 = vrot.lane.b32.xlu0 %v57, 119
    %v59 = vpop.permute.xlu0 %58
    %vm60 = vcmask 7168
    %s61 = scalar_lea.vmem %s1, 9
    %62 = vst.msk [vmem:[%s61] ss:$104 sm:$0x3] %vm60, %v59
    %v63 = vld [vmem:[#allocation0] sm:$0x3]
    %64 = vrot.lane.b32.xlu0 %v63, 118
    %v65 = vpop.permute.xlu0 %64
    %vm66 = vcmask 7168
    %s67 = scalar_lea.vmem %s1, 10
    %68 = vst.msk [vmem:[%s67] ss:$104 sm:$0x3] %vm66, %v65
    %v69 = vld [vmem:[#allocation0] sm:$0x3]
    %70 = vrot.lane.b32.xlu0 %v69, 117
    %v71 = vpop.permute.xlu0 %70
    %vm72 = vcmask 7168
    %s73 = scalar_lea.vmem %s1, 11
    %74 = vst.msk [vmem:[%s73] ss:$104 sm:$0x3] %vm72, %v71
    %v75 = vld [vmem:[#allocation0] sm:$0x3]
    %76 = vrot.lane.b32.xlu0 %v75, 116
    %v77 = vpop.permute.xlu0 %76
    %vm78 = vcmask 7168
    %s79 = scalar_lea.vmem %s1, 12
    %80 = vst.msk [vmem:[%s79] ss:$104 sm:$0x3] %vm78, %v77
    %v81 = vld [vmem:[#allocation0] sm:$0x3]
    %82 = vrot.lane.b32.xlu0 %v81, 115
    %v83 = vpop.permute.xlu0 %82
    %vm84 = vcmask 7168
    %s85 = scalar_lea.vmem %s1, 13
    %86 = vst.msk [vmem:[%s85] ss:$104 sm:$0x3] %vm84, %v83
    %v87 = vld [vmem:[#allocation0] sm:$0x3]
    %88 = vrot.lane.b32.xlu0 %v87, 114
    %v89 = vpop.permute.xlu0 %88
    %vm90 = vcmask 7168
    %s91 = scalar_lea.vmem %s1, 14
    %92 = vst.msk [vmem:[%s91] ss:$104 sm:$0x3] %vm90, %v89
    %v93 = vld [vmem:[#allocation0] sm:$0x3]
    %94 = vrot.lane.b32.xlu0 %v93, 113
    %v95 = vpop.permute.xlu0 %94
    %vm96 = vcmask 7168
    %s97 = scalar_lea.vmem %s1, 15
    %98 = vst.msk [vmem:[%s97] ss:$104 sm:$0x3] %vm96, %v95
    %v99 = vld [vmem:[#allocation0] sm:$0x3]
    %100 = vrot.lane.b32.xlu0 %v99, 112
    %v101 = vpop.permute.xlu0 %100
    %vm102 = vcmask 7168
    %s103 = scalar_lea.vmem %s1, 16
    %104 = vst.msk [vmem:[%s103] ss:$104 sm:$0x3] %vm102, %v101
    %v105 = vld [vmem:[#allocation0] sm:$0x3]
    %106 = vrot.lane.b32.xlu0 %v105, 111
    %v107 = vpop.permute.xlu0 %106
    %vm108 = vcmask 7168
    %s109 = scalar_lea.vmem %s1, 17
    %110 = vst.msk [vmem:[%s109] ss:$104 sm:$0x3] %vm108, %v107
    %v111 = vld [vmem:[#allocation0] sm:$0x3]
    %112 = vrot.lane.b32.xlu0 %v111, 110
    %v113 = vpop.permute.xlu0 %112
    %vm114 = vcmask 7168
    %s115 = scalar_lea.vmem %s1, 18
    %116 = vst.msk [vmem:[%s115] ss:$104 sm:$0x3] %vm114, %v113
    %v117 = vld [vmem:[#allocation0] sm:$0x3]
    %118 = vrot.lane.b32.xlu0 %v117, 109
    %v119 = vpop.permute.xlu0 %118
    %vm120 = vcmask 7168
    %s121 = scalar_lea.vmem %s1, 19
    %122 = vst.msk [vmem:[%s121] ss:$104 sm:$0x3] %vm120, %v119
    %v123 = vld [vmem:[#allocation0] sm:$0x3]
    %124 = vrot.lane.b32.xlu0 %v123, 108
    %v125 = vpop.permute.xlu0 %124
    %vm126 = vcmask 7168
    %s127 = scalar_lea.vmem %s1, 20
    %128 = vst.msk [vmem:[%s127] ss:$104 sm:$0x3] %vm126, %v125
    %v129 = vld [vmem:[#allocation0] sm:$0x3]
    %130 = vrot.lane.b32.xlu0 %v129, 107
    %v131 = vpop.permute.xlu0 %130
    %vm132 = vcmask 7168
    %s133 = scalar_lea.vmem %s1, 21
    %134 = vst.msk [vmem:[%s133] ss:$104 sm:$0x3] %vm132, %v131
    %v135 = vld [vmem:[#allocation0] sm:$0x3]
    %136 = vrot.lane.b32.xlu0 %v135, 106
    %v137 = vpop.permute.xlu0 %136
    %vm138 = vcmask 7168
    %s139 = scalar_lea.vmem %s1, 22
    %140 = vst.msk [vmem:[%s139] ss:$104 sm:$0x3] %vm138, %v137
    %v141 = vld [vmem:[#allocation0] sm:$0x3]
    %142 = vrot.lane.b32.xlu0 %v141, 105
    %v143 = vpop.permute.xlu0 %142
    %vm144 = vcmask 7168
    %s145 = scalar_lea.vmem %s1, 23
    %146 = vst.msk [vmem:[%s145] ss:$104 sm:$0x3] %vm144, %v143
    %s147 = scalar_lea.vmem [#allocation0], 1
    %s148 = smov 3
    %v149 = vld [vmem:[%s147] ss:$-1 sm:%s148]
    %150 = vrot.lane.b32.xlu0 %v149, 104
    %v151 = vpop.permute.xlu0 %150
    %vm152 = vcmask 7168
    %s153 = scalar_lea.vmem %s1, 128
    %154 = vst.msk [vmem:[%s153] ss:$-104 sm:$0x3] %vm152, %v151
    %s155 = scalar_lea.vmem [#allocation0], 1
    %s156 = smov 3
    %v157 = vld [vmem:[%s155] ss:$-1 sm:%s156]
    %158 = vrot.lane.b32.xlu0 %v157, 103
    %v159 = vpop.permute.xlu0 %158
    %vm160 = vcmask 7168
    %s161 = scalar_lea.vmem %s1, 129
    %162 = vst.msk [vmem:[%s161] ss:$-104 sm:$0x3] %vm160, %v159
    %s163 = scalar_lea.vmem [#allocation0], 1
    %s164 = smov 3
    %v165 = vld [vmem:[%s163] ss:$-1 sm:%s164]
    %166 = vrot.lane.b32.xlu0 %v165, 102
    %v167 = vpop.permute.xlu0 %166
    %vm168 = vcmask 7168
    %s169 = scalar_lea.vmem %s1, 130
    %170 = vst.msk [vmem:[%s169] ss:$-104 sm:$0x3] %vm168, %v167
    %s171 = scalar_lea.vmem [#allocation0], 1
    %s172 = smov 3
    %v173 = vld [vmem:[%s171] ss:$-1 sm:%s172]
    %174 = vrot.lane.b32.xlu0 %v173, 101
    %v175 = vpop.permute.xlu0 %174
    %vm176 = vcmask 7168
    %s177 = scalar_lea.vmem %s1, 131
    %178 = vst.msk [vmem:[%s177] ss:$-104 sm:$0x3] %vm176, %v175
    %s179 = scalar_lea.vmem [#allocation0], 1
    %s180 = smov 3
    %v181 = vld [vmem:[%s179] ss:$-1 sm:%s180]
    %182 = vrot.lane.b32.xlu0 %v181, 100
    %v183 = vpop.permute.xlu0 %182
    %vm184 = vcmask 7168
    %s185 = scalar_lea.vmem %s1, 132
    %186 = vst.msk [vmem:[%s185] ss:$-104 sm:$0x3] %vm184, %v183
    %s187 = scalar_lea.vmem [#allocation0], 1
    %s188 = smov 3
    %v189 = vld [vmem:[%s187] ss:$-1 sm:%s188]
    %190 = vrot.lane.b32.xlu0 %v189, 99
    %v191 = vpop.permute.xlu0 %190
    %vm192 = vcmask 7168
    %s193 = scalar_lea.vmem %s1, 133
    %194 = vst.msk [vmem:[%s193] ss:$-104 sm:$0x3] %vm192, %v191
    %s195 = scalar_lea.vmem [#allocation0], 1
    %s196 = smov 3
    %v197 = vld [vmem:[%s195] ss:$-1 sm:%s196]
    %198 = vrot.lane.b32.xlu0 %v197, 98
    %v199 = vpop.permute.xlu0 %198
    %vm200 = vcmask 7168
    %s201 = scalar_lea.vmem %s1, 134
    %202 = vst.msk [vmem:[%s201] ss:$-104 sm:$0x3] %vm200, %v199
    %s203 = scalar_lea.vmem [#allocation0], 1
    %s204 = smov 3
    %v205 = vld [vmem:[%s203] ss:$-1 sm:%s204]
    %206 = vrot.lane.b32.xlu0 %v205, 97
    %v207 = vpop.permute.xlu0 %206
    %vm208 = vcmask 7168
    %s209 = scalar_lea.vmem %s1, 135
    %210 = vst.msk [vmem:[%s209] ss:$-104 sm:$0x3] %vm208, %v207
    %v211 = vld [vmem:[#allocation0] sm:$0x3]
    %212 = vrot.lane.b32.xlu0 %v211, 96
    %v213 = vpop.permute.xlu0 %212
    %vm214 = vcmask 7168
    %s215 = scalar_lea.vmem %s1, 32
    %216 = vst.msk [vmem:[%s215] ss:$104 sm:$0x3] %vm214, %v213
    %v217 = vld [vmem:[#allocation0] sm:$0x3]
    %218 = vrot.lane.b32.xlu0 %v217, 95
    %v219 = vpop.permute.xlu0 %218
    %vm220 = vcmask 7168
    %s221 = scalar_lea.vmem %s1, 33
    %222 = vst.msk [vmem:[%s221] ss:$104 sm:$0x3] %vm220, %v219
    %v223 = vld [vmem:[#allocation0] sm:$0x3]
    %224 = vrot.lane.b32.xlu0 %v223, 94
    %v225 = vpop.permute.xlu0 %224
    %vm226 = vcmask 7168
    %s227 = scalar_lea.vmem %s1, 34
    %228 = vst.msk [vmem:[%s227] ss:$104 sm:$0x3] %vm226, %v225
    %v229 = vld [vmem:[#allocation0] sm:$0x3]
    %230 = vrot.lane.b32.xlu0 %v229, 93
    %v231 = vpop.permute.xlu0 %230
    %vm232 = vcmask 7168
    %s233 = scalar_lea.vmem %s1, 35
    %234 = vst.msk [vmem:[%s233] ss:$104 sm:$0x3] %vm232, %v231
    %v235 = vld [vmem:[#allocation0] sm:$0x3]
    %236 = vrot.lane.b32.xlu0 %v235, 92
    %v237 = vpop.permute.xlu0 %236
    %vm238 = vcmask 7168
    %s239 = scalar_lea.vmem %s1, 36
    %240 = vst.msk [vmem:[%s239] ss:$104 sm:$0x3] %vm238, %v237
    %v241 = vld [vmem:[#allocation0] sm:$0x3]
    %242 = vrot.lane.b32.xlu0 %v241, 91
    %v243 = vpop.permute.xlu0 %242
    %vm244 = vcmask 7168
    %s245 = scalar_lea.vmem %s1, 37
    %246 = vst.msk [vmem:[%s245] ss:$104 sm:$0x3] %vm244, %v243
    %v247 = vld [vmem:[#allocation0] sm:$0x3]
    %248 = vrot.lane.b32.xlu0 %v247, 90
    %v249 = vpop.permute.xlu0 %248
    %vm250 = vcmask 7168
    %s251 = scalar_lea.vmem %s1, 38
    %252 = vst.msk [vmem:[%s251] ss:$104 sm:$0x3] %vm250, %v249
    %v253 = vld [vmem:[#allocation0] sm:$0x3]
    %254 = vrot.lane.b32.xlu0 %v253, 89
    %v255 = vpop.permute.xlu0 %254
    %vm256 = vcmask 7168
    %s257 = scalar_lea.vmem %s1, 39
    %258 = vst.msk [vmem:[%s257] ss:$104 sm:$0x3] %vm256, %v255
    %v259 = vld [vmem:[#allocation0] sm:$0x3]
    %260 = vrot.lane.b32.xlu0 %v259, 88
    %v261 = vpop.permute.xlu0 %260
    %vm262 = vcmask 7168
    %s263 = scalar_lea.vmem %s1, 40
    %264 = vst.msk [vmem:[%s263] ss:$104 sm:$0x3] %vm262, %v261
    %v265 = vld [vmem:[#allocation0] sm:$0x3]
    %266 = vrot.lane.b32.xlu0 %v265, 87
    %v267 = vpop.permute.xlu0 %266
    %vm268 = vcmask 7168
    %s269 = scalar_lea.vmem %s1, 41
    %270 = vst.msk [vmem:[%s269] ss:$104 sm:$0x3] %vm268, %v267
    %v271 = vld [vmem:[#allocation0] sm:$0x3]
    %272 = vrot.lane.b32.xlu0 %v271, 86
    %v273 = vpop.permute.xlu0 %272
    %vm274 = vcmask 7168
    %s275 = scalar_lea.vmem %s1, 42
    %276 = vst.msk [vmem:[%s275] ss:$104 sm:$0x3] %vm274, %v273
    %v277 = vld [vmem:[#allocation0] sm:$0x3]
    %278 = vrot.lane.b32.xlu0 %v277, 85
    %v279 = vpop.permute.xlu0 %278
    %vm280 = vcmask 7168
    %s281 = scalar_lea.vmem %s1, 43
    %282 = vst.msk [vmem:[%s281] ss:$104 sm:$0x3] %vm280, %v279
    %v283 = vld [vmem:[#allocation0] sm:$0x3]
    %284 = vrot.lane.b32.xlu0 %v283, 84
    %v285 = vpop.permute.xlu0 %284
    %vm286 = vcmask 7168
    %s287 = scalar_lea.vmem %s1, 44
    %288 = vst.msk [vmem:[%s287] ss:$104 sm:$0x3] %vm286, %v285
    %v289 = vld [vmem:[#allocation0] sm:$0x3]
    %290 = vrot.lane.b32.xlu0 %v289, 83
    %v291 = vpop.permute.xlu0 %290
    %vm292 = vcmask 7168
    %s293 = scalar_lea.vmem %s1, 45
    %294 = vst.msk [vmem:[%s293] ss:$104 sm:$0x3] %vm292, %v291
    %v295 = vld [vmem:[#allocation0] sm:$0x3]
    %296 = vrot.lane.b32.xlu0 %v295, 82
    %v297 = vpop.permute.xlu0 %296
    %vm298 = vcmask 7168
    %s299 = scalar_lea.vmem %s1, 46
    %300 = vst.msk [vmem:[%s299] ss:$104 sm:$0x3] %vm298, %v297
    %v301 = vld [vmem:[#allocation0] sm:$0x3]
    %302 = vrot.lane.b32.xlu0 %v301, 81
    %v303 = vpop.permute.xlu0 %302
    %vm304 = vcmask 7168
    %s305 = scalar_lea.vmem %s1, 47
    %306 = vst.msk [vmem:[%s305] ss:$104 sm:$0x3] %vm304, %v303
    %v307 = vld [vmem:[#allocation0] sm:$0x3]
    %308 = vrot.lane.b32.xlu0 %v307, 80
    %v309 = vpop.permute.xlu0 %308
    %vm310 = vcmask 7168
    %s311 = scalar_lea.vmem %s1, 48
    %312 = vst.msk [vmem:[%s311] ss:$104 sm:$0x3] %vm310, %v309
    %v313 = vld [vmem:[#allocation0] sm:$0x3]
    %314 = vrot.lane.b32.xlu0 %v313, 79
    %v315 = vpop.permute.xlu0 %314
    %vm316 = vcmask 7168
    %s317 = scalar_lea.vmem %s1, 49
    %318 = vst.msk [vmem:[%s317] ss:$104 sm:$0x3] %vm316, %v315
    %v319 = vld [vmem:[#allocation0] sm:$0x3]
    %320 = vrot.lane.b32.xlu0 %v319, 78
    %v321 = vpop.permute.xlu0 %320
    %vm322 = vcmask 7168
    %s323 = scalar_lea.vmem %s1, 50
    %324 = vst.msk [vmem:[%s323] ss:$104 sm:$0x3] %vm322, %v321
    %v325 = vld [vmem:[#allocation0] sm:$0x3]
    %326 = vrot.lane.b32.xlu0 %v325, 77
    %v327 = vpop.permute.xlu0 %326
    %vm328 = vcmask 7168
    %s329 = scalar_lea.vmem %s1, 51
    %330 = vst.msk [vmem:[%s329] ss:$104 sm:$0x3] %vm328, %v327
    %v331 = vld [vmem:[#allocation0] sm:$0x3]
    %332 = vrot.lane.b32.xlu0 %v331, 76
    %v333 = vpop.permute.xlu0 %332
    %vm334 = vcmask 7168
    %s335 = scalar_lea.vmem %s1, 52
    %336 = vst.msk [vmem:[%s335] ss:$104 sm:$0x3] %vm334, %v333
    %v337 = vld [vmem:[#allocation0] sm:$0x3]
    %338 = vrot.lane.b32.xlu0 %v337, 75
    %v339 = vpop.permute.xlu0 %338
    %vm340 = vcmask 7168
    %s341 = scalar_lea.vmem %s1, 53
    %342 = vst.msk [vmem:[%s341] ss:$104 sm:$0x3] %vm340, %v339
    %v343 = vld [vmem:[#allocation0] sm:$0x3]
    %344 = vrot.lane.b32.xlu0 %v343, 74
    %v345 = vpop.permute.xlu0 %344
    %vm346 = vcmask 7168
    %s347 = scalar_lea.vmem %s1, 54
    %348 = vst.msk [vmem:[%s347] ss:$104 sm:$0x3] %vm346, %v345
    %v349 = vld [vmem:[#allocation0] sm:$0x3]
    %350 = vrot.lane.b32.xlu0 %v349, 73
    %v351 = vpop.permute.xlu0 %350
    %vm352 = vcmask 7168
    %s353 = scalar_lea.vmem %s1, 55
    %354 = vst.msk [vmem:[%s353] ss:$104 sm:$0x3] %vm352, %v351
    %s355 = scalar_lea.vmem [#allocation0], 1
    %s356 = smov 3
    %v357 = vld [vmem:[%s355] ss:$-1 sm:%s356]
    %358 = vrot.lane.b32.xlu0 %v357, 72
    %v359 = vpop.permute.xlu0 %358
    %vm360 = vcmask 7168
    %s361 = scalar_lea.vmem %s1, 160
    %362 = vst.msk [vmem:[%s361] ss:$-104 sm:$0x3] %vm360, %v359
    %s363 = scalar_lea.vmem [#allocation0], 1
    %s364 = smov 3
    %v365 = vld [vmem:[%s363] ss:$-1 sm:%s364]
    %366 = vrot.lane.b32.xlu0 %v365, 71
    %v367 = vpop.permute.xlu0 %366
    %vm368 = vcmask 7168
    %s369 = scalar_lea.vmem %s1, 161
    %370 = vst.msk [vmem:[%s369] ss:$-104 sm:$0x3] %vm368, %v367
    %s371 = scalar_lea.vmem [#allocation0], 1
    %s372 = smov 3
    %v373 = vld [vmem:[%s371] ss:$-1 sm:%s372]
    %374 = vrot.lane.b32.xlu0 %v373, 70
    %v375 = vpop.permute.xlu0 %374
    %vm376 = vcmask 7168
    %s377 = scalar_lea.vmem %s1, 162
    %378 = vst.msk [vmem:[%s377] ss:$-104 sm:$0x3] %vm376, %v375
    %s379 = scalar_lea.vmem [#allocation0], 1
    %s380 = smov 3
    %v381 = vld [vmem:[%s379] ss:$-1 sm:%s380]
    %382 = vrot.lane.b32.xlu0 %v381, 69
    %v383 = vpop.permute.xlu0 %382
    %vm384 = vcmask 7168
    %s385 = scalar_lea.vmem %s1, 163
    %386 = vst.msk [vmem:[%s385] ss:$-104 sm:$0x3] %vm384, %v383
    %s387 = scalar_lea.vmem [#allocation0], 1
    %s388 = smov 3
    %v389 = vld [vmem:[%s387] ss:$-1 sm:%s388]
    %390 = vrot.lane.b32.xlu0 %v389, 68
    %v391 = vpop.permute.xlu0 %390
    %vm392 = vcmask 7168
    %s393 = scalar_lea.vmem %s1, 164
    %394 = vst.msk [vmem:[%s393] ss:$-104 sm:$0x3] %vm392, %v391
    %s395 = scalar_lea.vmem [#allocation0], 1
    %s396 = smov 3
    %v397 = vld [vmem:[%s395] ss:$-1 sm:%s396]
    %398 = vrot.lane.b32.xlu0 %v397, 67
    %v399 = vpop.permute.xlu0 %398
    %vm400 = vcmask 7168
    %s401 = scalar_lea.vmem %s1, 165
    %402 = vst.msk [vmem:[%s401] ss:$-104 sm:$0x3] %vm400, %v399
    %s403 = scalar_lea.vmem [#allocation0], 1
    %s404 = smov 3
    %v405 = vld [vmem:[%s403] ss:$-1 sm:%s404]
    %406 = vrot.lane.b32.xlu0 %v405, 66
    %v407 = vpop.permute.xlu0 %406
    %vm408 = vcmask 7168
    %s409 = scalar_lea.vmem %s1, 166
    %410 = vst.msk [vmem:[%s409] ss:$-104 sm:$0x3] %vm408, %v407
    %s411 = scalar_lea.vmem [#allocation0], 1
    %s412 = smov 3
    %v413 = vld [vmem:[%s411] ss:$-1 sm:%s412]
    %414 = vrot.lane.b32.xlu0 %v413, 65
    %v415 = vpop.permute.xlu0 %414
    %vm416 = vcmask 7168
    %s417 = scalar_lea.vmem %s1, 167
    %418 = vst.msk [vmem:[%s417] ss:$-104 sm:$0x3] %vm416, %v415
    %v419 = vld [vmem:[#allocation0] sm:$0x3]
    %420 = vrot.lane.b32.xlu0 %v419, 64
    %v421 = vpop.permute.xlu0 %420
    %vm422 = vcmask 7168
    %s423 = scalar_lea.vmem %s1, 64
    %424 = vst.msk [vmem:[%s423] ss:$104 sm:$0x3] %vm422, %v421
    %v425 = vld [vmem:[#allocation0] sm:$0x3]
    %426 = vrot.lane.b32.xlu0 %v425, 63
    %v427 = vpop.permute.xlu0 %426
    %vm428 = vcmask 7168
    %s429 = scalar_lea.vmem %s1, 65
    %430 = vst.msk [vmem:[%s429] ss:$104 sm:$0x3] %vm428, %v427
    %v431 = vld [vmem:[#allocation0] sm:$0x3]
    %432 = vrot.lane.b32.xlu0 %v431, 62
    %v433 = vpop.permute.xlu0 %432
    %vm434 = vcmask 7168
    %s435 = scalar_lea.vmem %s1, 66
    %436 = vst.msk [vmem:[%s435] ss:$104 sm:$0x3] %vm434, %v433
    %v437 = vld [vmem:[#allocation0] sm:$0x3]
    %438 = vrot.lane.b32.xlu0 %v437, 61
    %v439 = vpop.permute.xlu0 %438
    %vm440 = vcmask 7168
    %s441 = scalar_lea.vmem %s1, 67
    %442 = vst.msk [vmem:[%s441] ss:$104 sm:$0x3] %vm440, %v439
    %v443 = vld [vmem:[#allocation0] sm:$0x3]
    %444 = vrot.lane.b32.xlu0 %v443, 60
    %v445 = vpop.permute.xlu0 %444
    %vm446 = vcmask 7168
    %s447 = scalar_lea.vmem %s1, 68
    %448 = vst.msk [vmem:[%s447] ss:$104 sm:$0x3] %vm446, %v445
    %v449 = vld [vmem:[#allocation0] sm:$0x3]
    %450 = vrot.lane.b32.xlu0 %v449, 59
    %v451 = vpop.permute.xlu0 %450
    %vm452 = vcmask 7168
    %s453 = scalar_lea.vmem %s1, 69
    %454 = vst.msk [vmem:[%s453] ss:$104 sm:$0x3] %vm452, %v451
    %v455 = vld [vmem:[#allocation0] sm:$0x3]
    %456 = vrot.lane.b32.xlu0 %v455, 58
    %v457 = vpop.permute.xlu0 %456
    %vm458 = vcmask 7168
    %s459 = scalar_lea.vmem %s1, 70
    %460 = vst.msk [vmem:[%s459] ss:$104 sm:$0x3] %vm458, %v457
    %v461 = vld [vmem:[#allocation0] sm:$0x3]
    %462 = vrot.lane.b32.xlu0 %v461, 57
    %v463 = vpop.permute.xlu0 %462
    %vm464 = vcmask 7168
    %s465 = scalar_lea.vmem %s1, 71
    %466 = vst.msk [vmem:[%s465] ss:$104 sm:$0x3] %vm464, %v463
    %v467 = vld [vmem:[#allocation0] sm:$0x3]
    %468 = vrot.lane.b32.xlu0 %v467, 56
    %v469 = vpop.permute.xlu0 %468
    %vm470 = vcmask 7168
    %s471 = scalar_lea.vmem %s1, 72
    %472 = vst.msk [vmem:[%s471] ss:$104 sm:$0x3] %vm470, %v469
    %v473 = vld [vmem:[#allocation0] sm:$0x3]
    %474 = vrot.lane.b32.xlu0 %v473, 55
    %v475 = vpop.permute.xlu0 %474
    %vm476 = vcmask 7168
    %s477 = scalar_lea.vmem %s1, 73
    %478 = vst.msk [vmem:[%s477] ss:$104 sm:$0x3] %vm476, %v475
    %v479 = vld [vmem:[#allocation0] sm:$0x3]
    %480 = vrot.lane.b32.xlu0 %v479, 54
    %v481 = vpop.permute.xlu0 %480
    %vm482 = vcmask 7168
    %s483 = scalar_lea.vmem %s1, 74
    %484 = vst.msk [vmem:[%s483] ss:$104 sm:$0x3] %vm482, %v481
    %v485 = vld [vmem:[#allocation0] sm:$0x3]
    %486 = vrot.lane.b32.xlu0 %v485, 53
    %v487 = vpop.permute.xlu0 %486
    %vm488 = vcmask 7168
    %s489 = scalar_lea.vmem %s1, 75
    %490 = vst.msk [vmem:[%s489] ss:$104 sm:$0x3] %vm488, %v487
    %v491 = vld [vmem:[#allocation0] sm:$0x3]
    %492 = vrot.lane.b32.xlu0 %v491, 52
    %v493 = vpop.permute.xlu0 %492
    %vm494 = vcmask 7168
    %s495 = scalar_lea.vmem %s1, 76
    %496 = vst.msk [vmem:[%s495] ss:$104 sm:$0x3] %vm494, %v493
    %v497 = vld [vmem:[#allocation0] sm:$0x3]
    %498 = vrot.lane.b32.xlu0 %v497, 51
    %v499 = vpop.permute.xlu0 %498
    %vm500 = vcmask 7168
    %s501 = scalar_lea.vmem %s1, 77
    %502 = vst.msk [vmem:[%s501] ss:$104 sm:$0x3] %vm500, %v499
    %v503 = vld [vmem:[#allocation0] sm:$0x3]
    %504 = vrot.lane.b32.xlu0 %v503, 50
    %v505 = vpop.permute.xlu0 %504
    %vm506 = vcmask 7168
    %s507 = scalar_lea.vmem %s1, 78
    %508 = vst.msk [vmem:[%s507] ss:$104 sm:$0x3] %vm506, %v505
    %v509 = vld [vmem:[#allocation0] sm:$0x3]
    %510 = vrot.lane.b32.xlu0 %v509, 49
    %v511 = vpop.permute.xlu0 %510
    %vm512 = vcmask 7168
    %s513 = scalar_lea.vmem %s1, 79
    %514 = vst.msk [vmem:[%s513] ss:$104 sm:$0x3] %vm512, %v511
    %v515 = vld [vmem:[#allocation0] sm:$0x3]
    %516 = vrot.lane.b32.xlu0 %v515, 48
    %v517 = vpop.permute.xlu0 %516
    %vm518 = vcmask 7168
    %s519 = scalar_lea.vmem %s1, 80
    %520 = vst.msk [vmem:[%s519] ss:$104 sm:$0x3] %vm518, %v517
    %v521 = vld [vmem:[#allocation0] sm:$0x3]
    %522 = vrot.lane.b32.xlu0 %v521, 47
    %v523 = vpop.permute.xlu0 %522
    %vm524 = vcmask 7168
    %s525 = scalar_lea.vmem %s1, 81
    %526 = vst.msk [vmem:[%s525] ss:$104 sm:$0x3] %vm524, %v523
    %v527 = vld [vmem:[#allocation0] sm:$0x3]
    %528 = vrot.lane.b32.xlu0 %v527, 46
    %v529 = vpop.permute.xlu0 %528
    %vm530 = vcmask 7168
    %s531 = scalar_lea.vmem %s1, 82
    %532 = vst.msk [vmem:[%s531] ss:$104 sm:$0x3] %vm530, %v529
    %v533 = vld [vmem:[#allocation0] sm:$0x3]
    %534 = vrot.lane.b32.xlu0 %v533, 45
    %v535 = vpop.permute.xlu0 %534
    %vm536 = vcmask 7168
    %s537 = scalar_lea.vmem %s1, 83
    %538 = vst.msk [vmem:[%s537] ss:$104 sm:$0x3] %vm536, %v535
    %v539 = vld [vmem:[#allocation0] sm:$0x3]
    %540 = vrot.lane.b32.xlu0 %v539, 44
    %v541 = vpop.permute.xlu0 %540
    %vm542 = vcmask 7168
    %s543 = scalar_lea.vmem %s1, 84
    %544 = vst.msk [vmem:[%s543] ss:$104 sm:$0x3] %vm542, %v541
    %v545 = vld [vmem:[#allocation0] sm:$0x3]
    %546 = vrot.lane.b32.xlu0 %v545, 43
    %v547 = vpop.permute.xlu0 %546
    %vm548 = vcmask 7168
    %s549 = scalar_lea.vmem %s1, 85
    %550 = vst.msk [vmem:[%s549] ss:$104 sm:$0x3] %vm548, %v547
    %v551 = vld [vmem:[#allocation0] sm:$0x3]
    %552 = vrot.lane.b32.xlu0 %v551, 42
    %v553 = vpop.permute.xlu0 %552
    %vm554 = vcmask 7168
    %s555 = scalar_lea.vmem %s1, 86
    %556 = vst.msk [vmem:[%s555] ss:$104 sm:$0x3] %vm554, %v553
    %v557 = vld [vmem:[#allocation0] sm:$0x3]
    %558 = vrot.lane.b32.xlu0 %v557, 41
    %v559 = vpop.permute.xlu0 %558
    %vm560 = vcmask 7168
    %s561 = scalar_lea.vmem %s1, 87
    %562 = vst.msk [vmem:[%s561] ss:$104 sm:$0x3] %vm560, %v559
    %s563 = scalar_lea.vmem [#allocation0], 1
    %s564 = smov 3
    %v565 = vld [vmem:[%s563] ss:$-1 sm:%s564]
    %566 = vrot.lane.b32.xlu0 %v565, 40
    %v567 = vpop.permute.xlu0 %566
    %vm568 = vcmask 7168
    %s569 = scalar_lea.vmem %s1, 192
    %570 = vst.msk [vmem:[%s569] ss:$-104 sm:$0x3] %vm568, %v567
    %s571 = scalar_lea.vmem [#allocation0], 1
    %s572 = smov 3
    %v573 = vld [vmem:[%s571] ss:$-1 sm:%s572]
    %574 = vrot.lane.b32.xlu0 %v573, 39
    %v575 = vpop.permute.xlu0 %574
    %vm576 = vcmask 7168
    %s577 = scalar_lea.vmem %s1, 193
    %578 = vst.msk [vmem:[%s577] ss:$-104 sm:$0x3] %vm576, %v575
    %s579 = scalar_lea.vmem [#allocation0], 1
    %s580 = smov 3
    %v581 = vld [vmem:[%s579] ss:$-1 sm:%s580]
    %582 = vrot.lane.b32.xlu0 %v581, 38
    %v583 = vpop.permute.xlu0 %582
    %vm584 = vcmask 7168
    %s585 = scalar_lea.vmem %s1, 194
    %586 = vst.msk [vmem:[%s585] ss:$-104 sm:$0x3] %vm584, %v583
    %s587 = scalar_lea.vmem [#allocation0], 1
    %s588 = smov 3
    %v589 = vld [vmem:[%s587] ss:$-1 sm:%s588]
    %590 = vrot.lane.b32.xlu0 %v589, 37
    %v591 = vpop.permute.xlu0 %590
    %vm592 = vcmask 7168
    %s593 = scalar_lea.vmem %s1, 195
    %594 = vst.msk [vmem:[%s593] ss:$-104 sm:$0x3] %vm592, %v591
    %s595 = scalar_lea.vmem [#allocation0], 1
    %s596 = smov 3
    %v597 = vld [vmem:[%s595] ss:$-1 sm:%s596]
    %598 = vrot.lane.b32.xlu0 %v597, 36
    %v599 = vpop.permute.xlu0 %598
    %vm600 = vcmask 7168
    %s601 = scalar_lea.vmem %s1, 196
    %602 = vst.msk [vmem:[%s601] ss:$-104 sm:$0x3] %vm600, %v599
    %s603 = scalar_lea.vmem [#allocation0], 1
    %s604 = smov 3
    %v605 = vld [vmem:[%s603] ss:$-1 sm:%s604]
    %606 = vrot.lane.b32.xlu0 %v605, 35
    %v607 = vpop.permute.xlu0 %606
    %vm608 = vcmask 7168
    %s609 = scalar_lea.vmem %s1, 197
    %610 = vst.msk [vmem:[%s609] ss:$-104 sm:$0x3] %vm608, %v607
    %s611 = scalar_lea.vmem [#allocation0], 1
    %s612 = smov 3
    %v613 = vld [vmem:[%s611] ss:$-1 sm:%s612]
    %614 = vrot.lane.b32.xlu0 %v613, 34
    %v615 = vpop.permute.xlu0 %614
    %vm616 = vcmask 7168
    %s617 = scalar_lea.vmem %s1, 198
    %618 = vst.msk [vmem:[%s617] ss:$-104 sm:$0x3] %vm616, %v615
    %s619 = scalar_lea.vmem [#allocation0], 1
    %s620 = smov 3
    %v621 = vld [vmem:[%s619] ss:$-1 sm:%s620]
    %622 = vrot.lane.b32.xlu0 %v621, 33
    %v623 = vpop.permute.xlu0 %622
    %vm624 = vcmask 7168
    %s625 = scalar_lea.vmem %s1, 199
    %626 = vst.msk [vmem:[%s625] ss:$-104 sm:$0x3] %vm624, %v623
    %v627 = vld [vmem:[#allocation0] sm:$0x3]
    %628 = vrot.lane.b32.xlu0 %v627, 32
    %v629 = vpop.permute.xlu0 %628
    %vm630 = vcmask 7168
    %s631 = scalar_lea.vmem %s1, 96
    %632 = vst.msk [vmem:[%s631] ss:$104 sm:$0x3] %vm630, %v629
    %v633 = vld [vmem:[#allocation0] sm:$0x3]
    %634 = vrot.lane.b32.xlu0 %v633, 31
    %v635 = vpop.permute.xlu0 %634
    %vm636 = vcmask 7168
    %s637 = scalar_lea.vmem %s1, 97
    %638 = vst.msk [vmem:[%s637] ss:$104 sm:$0x3] %vm636, %v635
    %v639 = vld [vmem:[#allocation0] sm:$0x3]
    %640 = vrot.lane.b32.xlu0 %v639, 30
    %v641 = vpop.permute.xlu0 %640
    %vm642 = vcmask 7168
    %s643 = scalar_lea.vmem %s1, 98
    %644 = vst.msk [vmem:[%s643] ss:$104 sm:$0x3] %vm642, %v641
    %v645 = vld [vmem:[#allocation0] sm:$0x3]
    %646 = vrot.lane.b32.xlu0 %v645, 29
    %v647 = vpop.permute.xlu0 %646
    %vm648 = vcmask 7168
    %s649 = scalar_lea.vmem %s1, 99
    %650 = vst.msk [vmem:[%s649] ss:$104 sm:$0x3] %vm648, %v647
    %v651 = vld [vmem:[#allocation0] sm:$0x3]
    %652 = vrot.lane.b32.xlu0 %v651, 28
    %v653 = vpop.permute.xlu0 %652
    %vm654 = vcmask 7168
    %s655 = scalar_lea.vmem %s1, 100
    %656 = vst.msk [vmem:[%s655] ss:$104 sm:$0x3] %vm654, %v653
    %v657 = vld [vmem:[#allocation0] sm:$0x3]
    %658 = vrot.lane.b32.xlu0 %v657, 27
    %v659 = vpop.permute.xlu0 %658
    %vm660 = vcmask 7168
    %s661 = scalar_lea.vmem %s1, 101
    %662 = vst.msk [vmem:[%s661] ss:$104 sm:$0x3] %vm660, %v659
    %v663 = vld [vmem:[#allocation0] sm:$0x3]
    %664 = vrot.lane.b32.xlu0 %v663, 26
    %v665 = vpop.permute.xlu0 %664
    %vm666 = vcmask 7168
    %s667 = scalar_lea.vmem %s1, 102
    %668 = vst.msk [vmem:[%s667] ss:$104 sm:$0x3] %vm666, %v665
    %v669 = vld [vmem:[#allocation0] sm:$0x3]
    %670 = vrot.lane.b32.xlu0 %v669, 25
    %v671 = vpop.permute.xlu0 %670
    %vm672 = vcmask 7168
    %s673 = scalar_lea.vmem %s1, 103
    %674 = vst.msk [vmem:[%s673] ss:$104 sm:$0x3] %vm672, %v671

// kernel: basic_block_forward.1
$region0: #{basic_block_forward.1}
  #allocation0 [shape = 'u32[]', space=smem, size = 0x4, offset = 0x4, fixed_abs, tag = 'smem constant byte address 0x4 - core index']
  #allocation1 [shape = 'u32[144,128]{1,0:T(1,128)}', space=vmem, size = 0x12000, scoped, tag = 'internal scratch']
  #allocation2 [shape = 'bf16[240,384]{1,0:T(16,128)(2,1)}', space=vmem, size = 0x2d000, scoped, tag = 'scratch operand']
  %s0 = inlined_call_operand.vmem [shape: bf16[416,256], index: 0, kind: input, shape index: {}]
  %s1 = inlined_call_operand.vmem [shape: bf16[256,128], index: 1, kind: input, shape index: {}]
  %s2 = inlined_call_operand.vmem [shape: f32[1,128], index: 2, kind: input, shape index: {}]
  %s3 = inlined_call_operand.vmem [shape: f32[1,128], index: 3, kind: input, shape index: {}]
  %s4 = inlined_call_operand.vmem [shape: f32[208,1], index: 4, kind: input, shape index: {}]
  %s5 = inlined_call_operand.vmem [shape: bf16[3,384,128], index: 5, kind: input, shape index: {}]
  %s6 = inlined_call_operand.vmem [shape: f32[1,128], index: 6, kind: input, shape index: {}]
  %s7 = inlined_call_operand.vmem [shape: f32[1,128], index: 7, kind: input, shape index: {}]
  %s8 = inlined_call_operand.vmem [shape: bf16[416,128], index: 8, kind: input, shape index: {}]
  %s9 = inlined_call_operand.vmem [shape: bf16[416,128], index: 9, kind: output, shape index: {}]
  %s10 = sld [smem:[#allocation0]]
  $region73: #{basic_block_forward.1} parent=0
    _
  %s12 = ssub.s32 1, %s10
  %s13 = scalar_select 0, %s12, %s10
  loop: start=0, step=1, limit=4
  $region2: #{basic_block_forward.1} parent=0 // loop_pre_header
    _
  $region3: #{basic_block_forward.1} parent=0 // loop_header
    %s15 = sphi 0, %s19
    %p16 = scmp.ge.s32.totalorder %s15, 4
    %s25 = sphi 0, %s27
    %s28 = sphi 0, %s25
    %s29 = sphi 0, %s28
    %s45 = sphi 0, %s29
    %s49 = sphi 0, %s49
    %s51 = sphi 0, %s49
    %s52 = sphi 0, %s51
    %s66 = sphi 0, %s52
    %s70 = sphi 0, %s70
    %s72 = sphi 0, %s70
    %s73 = sphi 0, %s72
    %s87 = sphi 0, %s73
    %s91 = sphi 0, %s91
    %s93 = sphi 0, %s91
    %s94 = sphi 0, %s93
    %s108 = sphi 0, %s94
    %s112 = sphi 0, %s112
    %s114 = sphi 0, %s112
    %s115 = sphi 0, %s114
    %s129 = sphi 0, %s115
    %s133 = sphi 0, %s133
    %s135 = sphi 0, %s133
    %s136 = sphi 0, %s135
    %s150 = sphi 0, %s136
    %s154 = sphi 0, %s154
    %s156 = sphi 0, %s154
    %s157 = sphi 0, %s156
    %s171 = sphi 0, %s157
    %s175 = sphi 0, %s175
    %s177 = sphi 0, %s175
    %s178 = sphi 0, %s177
    %s192 = sphi 0, %s178
    %s198 = sphi 0, %s200
    %s201 = sphi 0, %s198
    %s202 = sphi 0, %s201
    %s218 = sphi 0, %s202
    %s224 = sphi 0, %s226
    %s227 = sphi 0, %s224
    %s228 = sphi 0, %s227
    %s244 = sphi 0, %s228
  $region4: #{basic_block_forward.1} parent=0 // loop_header_branch
    %18 = sbr.rel (%p16) target = $region8
  $region5: #{basic_block_forward.1} parent=0 // loop_body
    %s20 = ssub.s32 %s15, 1
    %s21 = ssub.s32 %s15, 2
    %s22 = sadd.s32 %s15, 1
    %s23 = ssub.s32 %s15, %s22
    %p24 = scmp.eq.s32.totalorder %s23, 0
    %s26 = sadd.s32 %s25, 1
    %s27 = scalar_select %p24, %s25, %s26
    %p30 = pneg %p24
    %p31 = scmp.eq.s32.totalorder %s15, 1
    %p32 = por %p30, %p31
    %p33 = scmp.ne.s32.totalorder %s25, %s28
    %p34 = scmp.eq.s32.totalorder %s15, 0
    %p35 = por %p33, %p34
    %p36 = scmp.ne.s32.totalorder %s25, %s28
    %p37 = scmp.eq.s32.totalorder %s20, 1
    %p38 = por %p36, %p37
    %p39 = scmp.ne.s32.totalorder %s28, %s29
    %p40 = scmp.eq.s32.totalorder %s20, 0
    %p41 = por %p39, %p40
    %p42 = scmp.ne.s32.totalorder %s28, %s29
    %p43 = scmp.eq.s32.totalorder %s21, 1
    %p44 = por %p42, %p43
    %p46 = scmp.ne.s32.totalorder %s29, %s45
    %p47 = scmp.eq.s32.totalorder %s21, 0
    %p48 = por %p46, %p47
    %s50 = sadd.s32 %s49, 1
    %p53 = scmp.eq.s32.totalorder %s15, 1
    %p54 = scmp.ne.s32.totalorder %s49, %s51
    %p55 = scmp.eq.s32.totalorder %s15, 0
    %p56 = por %p54, %p55
    %p57 = scmp.ne.s32.totalorder %s49, %s51
    %p58 = scmp.eq.s32.totalorder %s20, 1
    %p59 = por %p57, %p58
    %p60 = scmp.ne.s32.totalorder %s51, %s52
    %p61 = scmp.eq.s32.totalorder %s20, 0
    %p62 = por %p60, %p61
    %p63 = scmp.ne.s32.totalorder %s51, %s52
    %p64 = scmp.eq.s32.totalorder %s21, 1
    %p65 = por %p63, %p64
    %p67 = scmp.ne.s32.totalorder %s52, %s66
    %p68 = scmp.eq.s32.totalorder %s21, 0
    %p69 = por %p67, %p68
    %s71 = sadd.s32 %s70, 1
    %p74 = scmp.eq.s32.totalorder %s15, 1
    %p75 = scmp.ne.s32.totalorder %s70, %s72
    %p76 = scmp.eq.s32.totalorder %s15, 0
    %p77 = por %p75, %p76
    %p78 = scmp.ne.s32.totalorder %s70, %s72
    %p79 = scmp.eq.s32.totalorder %s20, 1
    %p80 = por %p78, %p79
    %p81 = scmp.ne.s32.totalorder %s72, %s73
    %p82 = scmp.eq.s32.totalorder %s20, 0
    %p83 = por %p81, %p82
    %p84 = scmp.ne.s32.totalorder %s72, %s73
    %p85 = scmp.eq.s32.totalorder %s21, 1
    %p86 = por %p84, %p85
    %p88 = scmp.ne.s32.totalorder %s73, %s87
    %p89 = scmp.eq.s32.totalorder %s21, 0
    %p90 = por %p88, %p89
    %s92 = sadd.s32 %s91, 1
    %p95 = scmp.eq.s32.totalorder %s15, 1
    %p96 = scmp.ne.s32.totalorder %s91, %s93
    %p97 = scmp.eq.s32.totalorder %s15, 0
    %p98 = por %p96, %p97
    %p99 = scmp.ne.s32.totalorder %s91, %s93
    %p100 = scmp.eq.s32.totalorder %s20, 1
    %p101 = por %p99, %p100
    %p102 = scmp.ne.s32.totalorder %s93, %s94
    %p103 = scmp.eq.s32.totalorder %s20, 0
    %p104 = por %p102, %p103
    %p105 = scmp.ne.s32.totalorder %s93, %s94
    %p106 = scmp.eq.s32.totalorder %s21, 1
    %p107 = por %p105, %p106
    %p109 = scmp.ne.s32.totalorder %s94, %s108
    %p110 = scmp.eq.s32.totalorder %s21, 0
    %p111 = por %p109, %p110
    %s113 = sadd.s32 %s112, 1
    %p116 = scmp.eq.s32.totalorder %s15, 1
    %p117 = scmp.ne.s32.totalorder %s112, %s114
    %p118 = scmp.eq.s32.totalorder %s15, 0
    %p119 = por %p117, %p118
    %p120 = scmp.ne.s32.totalorder %s112, %s114
    %p121 = scmp.eq.s32.totalorder %s20, 1
    %p122 = por %p120, %p121
    %p123 = scmp.ne.s32.totalorder %s114, %s115
    %p124 = scmp.eq.s32.totalorder %s20, 0
    %p125 = por %p123, %p124
    %p126 = scmp.ne.s32.totalorder %s114, %s115
    %p127 = scmp.eq.s32.totalorder %s21, 1
    %p128 = por %p126, %p127
    %p130 = scmp.ne.s32.totalorder %s115, %s129
    %p131 = scmp.eq.s32.totalorder %s21, 0
    %p132 = por %p130, %p131
    %s134 = sadd.s32 %s133, 1
    %p137 = scmp.eq.s32.totalorder %s15, 1
    %p138 = scmp.ne.s32.totalorder %s133, %s135
    %p139 = scmp.eq.s32.totalorder %s15, 0
    %p140 = por %p138, %p139
    %p141 = scmp.ne.s32.totalorder %s133, %s135
    %p142 = scmp.eq.s32.totalorder %s20, 1
    %p143 = por %p141, %p142
    %p144 = scmp.ne.s32.totalorder %s135, %s136
    %p145 = scmp.eq.s32.totalorder %s20, 0
    %p146 = por %p144, %p145
    %p147 = scmp.ne.s32.totalorder %s135, %s136
    %p148 = scmp.eq.s32.totalorder %s21, 1
    %p149 = por %p147, %p148
    %p151 = scmp.ne.s32.totalorder %s136, %s150
    %p152 = scmp.eq.s32.totalorder %s21, 0
    %p153 = por %p151, %p152
    %s155 = sadd.s32 %s154, 1
    %p158 = scmp.eq.s32.totalorder %s15, 1
    %p159 = scmp.ne.s32.totalorder %s154, %s156
    %p160 = scmp.eq.s32.totalorder %s15, 0
    %p161 = por %p159, %p160
    %p162 = scmp.ne.s32.totalorder %s154, %s156
    %p163 = scmp.eq.s32.totalorder %s20, 1
    %p164 = por %p162, %p163
    %p165 = scmp.ne.s32.totalorder %s156, %s157
    %p166 = scmp.eq.s32.totalorder %s20, 0
    %p167 = por %p165, %p166
    %p168 = scmp.ne.s32.totalorder %s156, %s157
    %p169 = scmp.eq.s32.totalorder %s21, 1
    %p170 = por %p168, %p169
    %p172 = scmp.ne.s32.totalorder %s157, %s171
    %p173 = scmp.eq.s32.totalorder %s21, 0
    %p174 = por %p172, %p173
    %s176 = sadd.s32 %s175, 1
    %p179 = scmp.eq.s32.totalorder %s15, 1
    %p180 = scmp.ne.s32.totalorder %s175, %s177
    %p181 = scmp.eq.s32.totalorder %s15, 0
    %p182 = por %p180, %p181
    %p183 = scmp.ne.s32.totalorder %s175, %s177
    %p184 = scmp.eq.s32.totalorder %s20, 1
    %p185 = por %p183, %p184
    %p186 = scmp.ne.s32.totalorder %s177, %s178
    %p187 = scmp.eq.s32.totalorder %s20, 0
    %p188 = por %p186, %p187
    %p189 = scmp.ne.s32.totalorder %s177, %s178
    %p190 = scmp.eq.s32.totalorder %s21, 1
    %p191 = por %p189, %p190
    %p193 = scmp.ne.s32.totalorder %s178, %s192
    %p194 = scmp.eq.s32.totalorder %s21, 0
    %p195 = por %p193, %p194
    %s196 = ssub.s32 %s15, %s22
    %p197 = scmp.eq.s32.totalorder %s196, 0
    %s199 = sadd.s32 %s198, 1
    %s200 = scalar_select %p197, %s198, %s199
    %p203 = pneg %p197
    %p204 = scmp.eq.s32.totalorder %s15, 1
    %p205 = por %p203, %p204
    %p206 = scmp.ne.s32.totalorder %s198, %s201
    %p207 = scmp.eq.s32.totalorder %s15, 0
    %p208 = por %p206, %p207
    %p209 = scmp.ne.s32.totalorder %s198, %s201
    %p210 = scmp.eq.s32.totalorder %s20, 1
    %p211 = por %p209, %p210
    %p212 = scmp.ne.s32.totalorder %s201, %s202
    %p213 = scmp.eq.s32.totalorder %s20, 0
    %p214 = por %p212, %p213
    %p215 = scmp.ne.s32.totalorder %s201, %s202
    %p216 = scmp.eq.s32.totalorder %s21, 1
    %p217 = por %p215, %p216
    %p219 = scmp.ne.s32.totalorder %s202, %s218
    %p220 = scmp.eq.s32.totalorder %s21, 0
    %p221 = por %p219, %p220
    %s222 = ssub.s32 %s15, %s22
    %p223 = scmp.eq.s32.totalorder %s222, 0
    %s225 = sadd.s32 %s224, 1
    %s226 = scalar_select %p223, %s224, %s225
    %p229 = pneg %p223
    %p230 = scmp.eq.s32.totalorder %s15, 1
    %p231 = por %p229, %p230
    %p232 = scmp.ne.s32.totalorder %s224, %s227
    %p233 = scmp.eq.s32.totalorder %s15, 0
    %p234 = por %p232, %p233
    %p235 = scmp.ne.s32.totalorder %s224, %s227
    %p236 = scmp.eq.s32.totalorder %s20, 1
    %p237 = por %p235, %p236
    %p238 = scmp.ne.s32.totalorder %s227, %s228
    %p239 = scmp.eq.s32.totalorder %s20, 0
    %p240 = por %p238, %p239
    %p241 = scmp.ne.s32.totalorder %s227, %s228
    %p242 = scmp.eq.s32.totalorder %s21, 1
    %p243 = por %p241, %p242
    %p245 = scmp.ne.s32.totalorder %s228, %s244
    %p246 = scmp.eq.s32.totalorder %s21, 0
    %p247 = por %p245, %p246
    %p248 = scmp.le.s32.totalorder 1, %s15
    %p249 = scmp.lt.s32.totalorder %s15, 3
    %p250 = pnand %p248, %p249
    %p251 = pneg %p250
    // Predicated region
    $region9: #{basic_block_forward.1} parent=5 // pred_check
      _
    $region10: #{basic_block_forward.1} parent=5 // pred_check_branch
      %253 = sbr.rel (%p250) target = $region12
    $region11: #{basic_block_forward.1} parent=5 // pred_region
      %s254 = ssub.s32 %s15, 1
      // Predicated region
      $region13: #{basic_block_forward.1} parent=11 // pred_check
        %p255 = pneg %p62
      $region14: #{basic_block_forward.1} parent=11 // pred_check_branch
        %257 = sbr.rel (%p255) target = $region16
      $region15: #{basic_block_forward.1} parent=11 // pred_region
        _
      $region16: #{basic_block_forward.1} parent=11 // pred_fallthru
        _
      // Predicated region
      $region17: #{basic_block_forward.1} parent=11 // pred_check
        %p258 = pneg %p83
      $region18: #{basic_block_forward.1} parent=11 // pred_check_branch
        %260 = sbr.rel (%p258) target = $region20
      $region19: #{basic_block_forward.1} parent=11 // pred_region
        _
      $region20: #{basic_block_forward.1} parent=11 // pred_fallthru
        _
      // Predicated region
      $region21: #{basic_block_forward.1} parent=11 // pred_check
        %p261 = pneg %p104
      $region22: #{basic_block_forward.1} parent=11 // pred_check_branch
        %263 = sbr.rel (%p261) target = $region24
      $region23: #{basic_block_forward.1} parent=11 // pred_region
        _
      $region24: #{basic_block_forward.1} parent=11 // pred_fallthru
        _
      // Predicated region
      $region25: #{basic_block_forward.1} parent=11 // pred_check
        %p264 = pneg %p125
      $region26: #{basic_block_forward.1} parent=11 // pred_check_branch
        %266 = sbr.rel (%p264) target = $region28
      $region27: #{basic_block_forward.1} parent=11 // pred_region
        _
      $region28: #{basic_block_forward.1} parent=11 // pred_fallthru
        _
      // Predicated region
      $region29: #{basic_block_forward.1} parent=11 // pred_check
        %p267 = pneg %p146
      $region30: #{basic_block_forward.1} parent=11 // pred_check_branch
        %269 = sbr.rel (%p267) target = $region32
      $region31: #{basic_block_forward.1} parent=11 // pred_region
        _
      $region32: #{basic_block_forward.1} parent=11 // pred_fallthru
        _
      // Predicated region
      $region33: #{basic_block_forward.1} parent=11 // pred_check
        %p270 = pneg %p167
      $region34: #{basic_block_forward.1} parent=11 // pred_check_branch
        %272 = sbr.rel (%p270) target = $region36
      $region35: #{basic_block_forward.1} parent=11 // pred_region
        _
      $region36: #{basic_block_forward.1} parent=11 // pred_fallthru
        _
      // Predicated region
      $region37: #{basic_block_forward.1} parent=11 // pred_check
        %p273 = pneg %p188
      $region38: #{basic_block_forward.1} parent=11 // pred_check_branch
        %275 = sbr.rel (%p273) target = $region40
      $region39: #{basic_block_forward.1} parent=11 // pred_region
        _
      $region40: #{basic_block_forward.1} parent=11 // pred_fallthru
        _
    $region12: #{basic_block_forward.1} parent=5 // pred_fallthru
      _
    %p276 = scmp.lt.s32.totalorder %s15, 2
    // Predicated region
    $region41: #{basic_block_forward.1} parent=5 // pred_check
      %p277 = pneg %p276
    $region42: #{basic_block_forward.1} parent=5 // pred_check_branch
      %279 = sbr.rel (%p277) target = $region44
    $region43: #{basic_block_forward.1} parent=5 // pred_region
      // Predicated region
      $region45: #{basic_block_forward.1} parent=43 // pred_check
        %p280 = pneg %p35
      $region46: #{basic_block_forward.1} parent=43 // pred_check_branch
        %282 = sbr.rel (%p280) target = $region48
      $region47: #{basic_block_forward.1} parent=43 // pred_region
        %s283 = smul.u32 26, %s15
        %p284 = scmp.lt.s32.totalorder %s283, 51
        %s285 = scalar_select %p284, %s283, 51
        %s286 = smul.addr %s285, 2
        %s287 = smul.addr %s286, 4
        %s288 = scalar_lea.vmem %s0, %s287
        %s289 = smul.u32 26, %s15
      $region48: #{basic_block_forward.1} parent=43 // pred_fallthru
        _
      // Predicated region
      $region49: #{basic_block_forward.1} parent=43 // pred_check
        %p290 = pneg %p208
      $region50: #{basic_block_forward.1} parent=43 // pred_check_branch
        %292 = sbr.rel (%p290) target = $region52
      $region51: #{basic_block_forward.1} parent=43 // pred_region
        %s293 = smul.u32 26, %s15
        %p294 = scmp.lt.s32.totalorder %s293, 51
        %s295 = scalar_select %p294, %s293, 51
        %s296 = smul.addr %s295, 4
        %s297 = scalar_lea.vmem %s8, %s296
        %s298 = smul.u32 26, %s15
      $region52: #{basic_block_forward.1} parent=43 // pred_fallthru
        _
    $region44: #{basic_block_forward.1} parent=5 // pred_fallthru
      _
    %p299 = scmp.le.s32.totalorder 1, %s15
    %p300 = scmp.lt.s32.totalorder %s15, 3
    %p301 = pnand %p299, %p300
    %p302 = pneg %p301
    // Predicated region
    $region53: #{basic_block_forward.1} parent=5 // pred_check
      _
    $region54: #{basic_block_forward.1} parent=5 // pred_check_branch
      %304 = sbr.rel (%p301) target = $region56
    $region55: #{basic_block_forward.1} parent=5 // pred_region
      %s305 = ssub.s32 %s15, 1
      %s306 = smul.u32 26, %s20
      %p307 = scmp.lt.s32.totalorder %s306, 51
      %s308 = scalar_select %p307, %s306, 51
      %s309 = smul.addr %s308, 2
      %s310 = smul.addr %s309, 4
      %s311 = scalar_lea.vmem %s0, %s310
      %p312 = pneg %p41
      %p313 = pneg %p38
      %p314 = pneg %p62
      %p315 = pneg %p59
      %p316 = pneg %p83
      %p317 = pneg %p80
      %p318 = pneg %p104
      %p319 = pneg %p101
      %p320 = pneg %p125
      %p321 = pneg %p122
      %p322 = pneg %p146
      %p323 = pneg %p143
      %p324 = pneg %p167
      %p325 = pneg %p164
      %p326 = pneg %p188
      %p327 = pneg %p185
      %s328 = smul.u32 26, %s20
      %p329 = scmp.lt.s32.totalorder %s328, 51
      %s330 = scalar_select %p329, %s328, 51
      %s331 = smul.addr %s330, 4
      %s332 = scalar_lea.vmem %s8, %s331
      %p333 = pneg %p214
      %p334 = pneg %p211
      %p335 = pneg %p240
      %p336 = pneg %p237
      %s337 = smul.u32 26, %s20
      %p338 = scmp.lt.s32.totalorder %s337, 51
      %s339 = scalar_select %p338, %s337, 51
      %s340 = smul.addr %s339, 4
      %s341 = scalar_lea.vmem %s9, %s340
      %s342 = smul.u32 26, %s20
      %p343 = scmp.lt.s32.totalorder %s342, 51
      %s344 = scalar_select %p343, %s342, 51
      %s345 = smul.addr %s344, 2
      %s346 = smul.addr %s345, 4
      %s347 = scalar_lea.vmem %s0, %s346
      %s348 = smul.u32 26, %s20
      %s349 = smul.u32 26, %s20
      %p350 = scmp.lt.s32.totalorder %s349, 51
      %s351 = scalar_select %p350, %s349, 51
      %s352 = smul.addr %s351, 4
      %s353 = scalar_lea.vmem %s8, %s352
      %s354 = smul.u32 26, %s20
      %s355 = smul.u32 26, %s20
      %p356 = scmp.lt.s32.totalorder %s355, 51
      %s357 = scalar_select %p356, %s355, 51
      %s358 = smul.addr %s357, 4
      %s359 = scalar_lea.vmem %s9, %s358
      %s360 = smul.u32 26, %s20
      %p362 = scmp.eq.s32.totalorder %s20, 0
      // Predicated region
      $region57: #{basic_block_forward.1} parent=55 // pred_check
        %p363 = pneg %p362
      $region58: #{basic_block_forward.1} parent=55 // pred_check_branch
        %365 = sbr.rel (%p363) target = $region60
      $region59: #{basic_block_forward.1} parent=55 // pred_region
        %366 = vst [vmem:[#allocation2] sm:$0xff] 0
        %367 = vst [vmem:[#allocation2 + $0x8] sm:$0xff] 0
        %368 = vst [vmem:[#allocation2 + $0x10] sm:$0xff] 0
        %369 = vst [vmem:[#allocation2 + $0x18] sm:$0xff] 0
        %370 = vst [vmem:[#allocation2 + $0x20] sm:$0xff] 0
        %371 = vst [vmem:[#allocation2 + $0x28] sm:$0xff] 0
        %372 = vst [vmem:[#allocation2 + $0x30] sm:$0xff] 0
        %373 = vst [vmem:[#allocation2 + $0x38] sm:$0xff] 0
        %374 = vst [vmem:[#allocation2 + $0x40] sm:$0xff] 0
        %375 = vst [vmem:[#allocation2 + $0x48] sm:$0xff] 0
        %376 = vst [vmem:[#allocation2 + $0x50] sm:$0xff] 0
        %377 = vst [vmem:[#allocation2 + $0x58] sm:$0xff] 0
        %378 = vst [vmem:[#allocation2 + $0x60] sm:$0xff] 0
        %379 = vst [vmem:[#allocation2 + $0x68] sm:$0xff] 0
        %380 = vst [vmem:[#allocation2 + $0x70] sm:$0xff] 0
        %381 = vst [vmem:[#allocation2 + $0x78] sm:$0xff] 0
        %382 = vst [vmem:[#allocation2 + $0x80] sm:$0xff] 0
        %383 = vst [vmem:[#allocation2 + $0x88] sm:$0xff] 0
        %384 = vst [vmem:[#allocation2 + $0x90] sm:$0xff] 0
        %385 = vst [vmem:[#allocation2 + $0x98] sm:$0xff] 0
        %386 = vst [vmem:[#allocation2 + $0xa0] sm:$0xff] 0
        %387 = vst [vmem:[#allocation2 + $0xa8] sm:$0xff] 0
        %388 = vst [vmem:[#allocation2 + $0xb0] sm:$0xff] 0
        %389 = vst [vmem:[#allocation2 + $0xb8] sm:$0xff] 0
        %390 = vst [vmem:[#allocation2 + $0xc0] sm:$0xff] 0
        %391 = vst [vmem:[#allocation2 + $0xc8] sm:$0xff] 0
        %392 = vst [vmem:[#allocation2 + $0xd0] sm:$0xff] 0
        %393 = vst [vmem:[#allocation2 + $0xd8] sm:$0xff] 0
        %394 = vst [vmem:[#allocation2 + $0xe0] sm:$0xff] 0
        %395 = vst [vmem:[#allocation2 + $0xe8] sm:$0xff] 0
        %396 = vst [vmem:[#allocation2 + $0xf0] sm:$0xff] 0
        %397 = vst [vmem:[#allocation2 + $0xf8] sm:$0xff] 0
        %398 = vst [vmem:[#allocation2 + $0x100] sm:$0xff] 0
        %399 = vst [vmem:[#allocation2 + $0x108] sm:$0xff] 0
        %400 = vst [vmem:[#allocation2 + $0x110] sm:$0xff] 0
        %401 = vst [vmem:[#allocation2 + $0x118] sm:$0xff] 0
        %402 = vst [vmem:[#allocation2 + $0x120] sm:$0xff] 0
        %403 = vst [vmem:[#allocation2 + $0x128] sm:$0xff] 0
        %404 = vst [vmem:[#allocation2 + $0x130] sm:$0xff] 0
        %405 = vst [vmem:[#allocation2 + $0x138] sm:$0xff] 0
        %406 = vst [vmem:[#allocation2 + $0x140] sm:$0xff] 0
        %407 = vst [vmem:[#allocation2 + $0x148] sm:$0xff] 0
        %408 = vst [vmem:[#allocation2 + $0x150] sm:$0xff] 0
        %409 = vst [vmem:[#allocation2 + $0x158] sm:$0xff] 0
        %410 = vst [vmem:[#allocation2 + $0x160] sm:$0xff] 0
      $region60: #{basic_block_forward.1} parent=55 // pred_fallthru
        _
      %v411 = vld [vmem:[%s347] sm:$0xff]
      %v412 = vld [vmem:[%s347 + $0x8] sm:$0xff]
      %v413 = vld [vmem:[%s347 + $0x10] sm:$0xff]
      %v414 = vld [vmem:[%s347 + $0x18] sm:$0xff]
      %v415 = vld [vmem:[%s347 + $0x20] sm:$0xff]
      %v416 = vld [vmem:[%s347 + $0x28] sm:$0xff]
      %v417 = vld [vmem:[%s347 + $0x30] sm:$0xff]
      %v418 = vld [vmem:[%s347 + $0x38] sm:$0xff]
      %v419 = vld [vmem:[%s347 + $0x40] sm:$0xff]
      %v420 = vld [vmem:[%s347 + $0x48] sm:$0xff]
      %v421 = vld [vmem:[%s347 + $0x50] sm:$0xff]
      %v422 = vld [vmem:[%s347 + $0x58] sm:$0xff]
      %v423 = vld [vmem:[%s347 + $0x60] sm:$0xff]
      %v424 = vld [vmem:[%s347 + $0x68] sm:$0xff]
      %v425 = vld [vmem:[%s347 + $0x70] sm:$0xff]
      %v426 = vld [vmem:[%s347 + $0x78] sm:$0xff]
      %v427 = vld [vmem:[%s347 + $0x80] sm:$0xff]
      %v428 = vld [vmem:[%s347 + $0x88] sm:$0xff]
      %v429 = vld [vmem:[%s347 + $0x90] sm:$0xff]
      %v430 = vld [vmem:[%s347 + $0x98] sm:$0xff]
      %v431 = vld [vmem:[%s347 + $0xa0] sm:$0xff]
      %v432 = vld [vmem:[%s347 + $0xa8] sm:$0xff]
      %v433 = vld [vmem:[%s347 + $0xb0] sm:$0xff]
      %v434 = vld [vmem:[%s347 + $0xb8] sm:$0xff]
      %v435 = vld [vmem:[%s347 + $0xc0] sm:$0xff]
      %v436 = vld [vmem:[%s347 + $0xc8] sm:$0xff]
      %v437 = vld [vmem:[%s1] sm:$0xf]
      %v438 = vld [vmem:[%s1 + $0x4] sm:$0xf]
      %v439 = vld [vmem:[%s1 + $0x8] sm:$0xf]
      %v440 = vld [vmem:[%s1 + $0xc] sm:$0xf]
      %v441 = vld [vmem:[%s1 + $0x10] sm:$0xf]
      %v442 = vld [vmem:[%s1 + $0x14] sm:$0xf]
      %v443 = vld [vmem:[%s1 + $0x18] sm:$0xf]
      %v444 = vld [vmem:[%s1 + $0x1c] sm:$0xf]
      %v445 = vld [vmem:[%s1 + $0x20] sm:$0xf]
      %v446 = vld [vmem:[%s1 + $0x24] sm:$0xf]
      %v447 = vld [vmem:[%s1 + $0x28] sm:$0xf]
      %v448 = vld [vmem:[%s1 + $0x2c] sm:$0xf]
      %v449 = vld [vmem:[%s1 + $0x30] sm:$0xf]
      %v450 = vld [vmem:[%s1 + $0x34] sm:$0xf]
      %v451 = vld [vmem:[%s1 + $0x38] sm:$0xf]
      %v452 = vld [vmem:[%s1 + $0x3c] sm:$0xf]
      %v453 = vld [vmem:[%s1 + $0x40] sm:$0xf]
      %v454 = vld [vmem:[%s1 + $0x44] sm:$0xf]
      %v455 = vld [vmem:[%s1 + $0x48] sm:$0xf]
      %v456 = vld [vmem:[%s1 + $0x4c] sm:$0xf]
      %v457 = vld [vmem:[%s1 + $0x50] sm:$0xf]
      %v458 = vld [vmem:[%s1 + $0x54] sm:$0xf]
      %v459 = vld [vmem:[%s1 + $0x58] sm:$0xf]
      %v460 = vld [vmem:[%s1 + $0x5c] sm:$0xf]
      %v461 = vld [vmem:[%s1 + $0x60] sm:$0xf]
      %v462 = vld [vmem:[%s1 + $0x64] sm:$0xf]
      %v463 = vld [vmem:[%s1 + $0x68] sm:$0xf]
      %v464 = vld [vmem:[%s1 + $0x6c] sm:$0xf]
      %v465 = vld [vmem:[%s1 + $0x70] sm:$0xf]
      %v466 = vld [vmem:[%s1 + $0x74] sm:$0xf]
      %v467 = vld [vmem:[%s1 + $0x78] sm:$0xf]
      %v468 = vld [vmem:[%s1 + $0x7c] sm:$0xf]
      %v495 = vunpack.c.l.b16 %v411
      %v496 = vunpack.c.h.b16 %v411
      %v497 = vunpack.c.l.b16 %v412
      %v498 = vunpack.c.h.b16 %v412
      %v499 = vunpack.c.l.b16 %v413
      %v500 = vunpack.c.h.b16 %v413
      %v501 = vunpack.c.l.b16 %v414
      %v502 = vunpack.c.h.b16 %v414
      %v503 = vunpack.c.l.b16 %v415
      %v504 = vunpack.c.h.b16 %v415
      %v505 = vunpack.c.l.b16 %v416
      %v506 = vunpack.c.h.b16 %v416
      %v507 = vunpack.c.l.b16 %v417
      %v508 = vunpack.c.h.b16 %v417
      %v509 = vunpack.c.l.b16 %v418
      %v510 = vunpack.c.h.b16 %v418
      %v511 = vunpack.c.l.b16 %v419
      %v512 = vunpack.c.h.b16 %v419
      %v513 = vunpack.c.l.b16 %v420
      %v514 = vunpack.c.h.b16 %v420
      %v515 = vunpack.c.l.b16 %v421
      %v516 = vunpack.c.h.b16 %v421
      %v517 = vunpack.c.l.b16 %v422
      %v518 = vunpack.c.h.b16 %v422
      %v519 = vunpack.c.l.b16 %v423
      %v520 = vunpack.c.h.b16 %v423
      %v521 = vunpack.c.l.b16 %v424
      %v522 = vunpack.c.h.b16 %v424
      %v523 = vunpack.c.l.b16 %v425
      %v524 = vunpack.c.h.b16 %v425
      %v525 = vunpack.c.l.b16 %v426
      %v526 = vunpack.c.h.b16 %v426
      %v527 = vunpack.c.l.b16 %v427
      %v528 = vunpack.c.h.b16 %v427
      %v529 = vunpack.c.l.b16 %v428
      %v530 = vunpack.c.h.b16 %v428
      %v531 = vunpack.c.l.b16 %v429
      %v532 = vunpack.c.h.b16 %v429
      %v533 = vunpack.c.l.b16 %v430
      %v534 = vunpack.c.h.b16 %v430
      %v535 = vunpack.c.l.b16 %v431
      %v536 = vunpack.c.h.b16 %v431
      %v537 = vunpack.c.l.b16 %v432
      %v538 = vunpack.c.h.b16 %v432
      %v539 = vunpack.c.l.b16 %v433
      %v540 = vunpack.c.h.b16 %v433
      %v541 = vunpack.c.l.b16 %v434
      %v542 = vunpack.c.h.b16 %v434
      %v543 = vunpack.c.l.b16 %v435
      %v544 = vunpack.c.h.b16 %v435
      %v545 = vunpack.c.l.b16 %v436
      %v546 = vunpack.c.h.b16 %v436
      %v547 = vpack.c.b16 %v497, %v495
      %v548 = vpack.c.b16 %v498, %v496
      %v549 = vpack.c.b16 %v501, %v499
      %v550 = vpack.c.b16 %v502, %v500
      %v551 = vpack.c.b16 %v505, %v503
      %v552 = vpack.c.b16 %v506, %v504
      %v553 = vpack.c.b16 %v509, %v507
      %v554 = vpack.c.b16 %v510, %v508
      %v555 = vpack.c.b16 %v513, %v511
      %v556 = vpack.c.b16 %v514, %v512
      %v557 = vpack.c.b16 %v517, %v515
      %v558 = vpack.c.b16 %v518, %v516
      %v559 = vpack.c.b16 %v521, %v519
      %v560 = vpack.c.b16 %v522, %v520
      %v561 = vpack.c.b16 %v525, %v523
      %v562 = vpack.c.b16 %v526, %v524
      %v563 = vpack.c.b16 %v529, %v527
      %v564 = vpack.c.b16 %v530, %v528
      %v565 = vpack.c.b16 %v533, %v531
      %v566 = vpack.c.b16 %v534, %v532
      %v567 = vpack.c.b16 %v537, %v535
      %v568 = vpack.c.b16 %v538, %v536
      %v569 = vpack.c.b16 %v541, %v539
      %v570 = vpack.c.b16 %v542, %v540
      %v571 = vpack.c.b16 %v545, %v543
      %v572 = vpack.c.b16 %v546, %v544
      %v631 = vunpack.c.l.b16 %v437
      %v632 = vunpack.c.l.b16 %v438
      %v633 = vunpack.c.l.b16 %v439
      %v634 = vunpack.c.l.b16 %v440
      %v635 = vunpack.c.l.b16 %v441
      %v636 = vunpack.c.l.b16 %v442
      %v637 = vunpack.c.l.b16 %v443
      %v638 = vunpack.c.l.b16 %v444
      %v639 = vunpack.c.l.b16 %v445
      %v640 = vunpack.c.l.b16 %v446
      %v641 = vunpack.c.l.b16 %v447
      %v642 = vunpack.c.l.b16 %v448
      %v643 = vunpack.c.l.b16 %v449
      %v644 = vunpack.c.l.b16 %v450
      %v645 = vunpack.c.l.b16 %v451
      %v646 = vunpack.c.l.b16 %v452
      %v647 = vunpack.c.l.b16 %v453
      %v648 = vunpack.c.l.b16 %v454
      %v649 = vunpack.c.l.b16 %v455
      %v650 = vunpack.c.l.b16 %v456
      %v651 = vunpack.c.l.b16 %v457
      %v652 = vunpack.c.l.b16 %v458
      %v653 = vunpack.c.l.b16 %v459
      %v654 = vunpack.c.l.b16 %v460
      %v655 = vunpack.c.l.b16 %v461
      %v656 = vunpack.c.l.b16 %v462
      %v657 = vunpack.c.l.b16 %v463
      %v658 = vunpack.c.l.b16 %v464
      %v659 = vunpack.c.l.b16 %v465
      %v660 = vunpack.c.l.b16 %v466
      %v661 = vunpack.c.l.b16 %v467
      %v662 = vunpack.c.l.b16 %v468
      %v663 = vpack.c.b16 %v632, %v631
      %v664 = vpack.c.b16 %v634, %v633
      %v665 = vpack.c.b16 %v636, %v635
      %v666 = vpack.c.b16 %v638, %v637
      %v667 = vpack.c.b16 %v640, %v639
      %v668 = vpack.c.b16 %v642, %v641
      %v669 = vpack.c.b16 %v644, %v643
      %v670 = vpack.c.b16 %v646, %v645
      %v671 = vpack.c.b16 %v648, %v647
      %v672 = vpack.c.b16 %v650, %v649
      %v673 = vpack.c.b16 %v652, %v651
      %v674 = vpack.c.b16 %v654, %v653
      %v675 = vpack.c.b16 %v656, %v655
      %v676 = vpack.c.b16 %v658, %v657
      %v677 = vpack.c.b16 %v660, %v659
      %v678 = vpack.c.b16 %v662, %v661
      %695 = vmatprep.subr.bf16.mxu0 0
      %696 = vmatpush1.bf16.msra.mxu0 %v663
      %697 = vmatprep.subr.bf16.mxu0 0
      %698 = vmatpush1.bf16.msra.mxu0 %v664
      %699 = vmatprep.subr.bf16.mxu0 0
      %700 = vmatpush1.bf16.msra.mxu0 %v665
      %701 = vmatprep.subr.bf16.mxu0 0
      %702 = vmatpush1.bf16.msra.mxu0 %v666
      %703 = vmatprep.subr.bf16.mxu0 0
      %704 = vmatpush1.bf16.msra.mxu0 %v667
      %705 = vmatprep.subr.bf16.mxu0 0
      %706 = vmatpush1.bf16.msra.mxu0 %v668
      %707 = vmatprep.subr.bf16.mxu0 0
      %708 = vmatpush1.bf16.msra.mxu0 %v669
      %709 = vmatprep.subr.bf16.mxu0 0
      %710 = vmatpush1.bf16.msra.mxu0 %v670
      %711 = vmatprep.subr.bf16.mxu0 0
      %712 = vmatpush1.bf16.msra.mxu0 %v671
      %713 = vmatprep.subr.bf16.mxu0 0
      %714 = vmatpush1.bf16.msra.mxu0 %v672
      %715 = vmatprep.subr.bf16.mxu0 0
      %716 = vmatpush1.bf16.msra.mxu0 %v673
      %717 = vmatprep.subr.bf16.mxu0 0
      %718 = vmatpush1.bf16.msra.mxu0 %v674
      %719 = vmatprep.subr.bf16.mxu0 0
      %720 = vmatpush1.bf16.msra.mxu0 %v675
      %721 = vmatprep.subr.bf16.mxu0 0
      %722 = vmatpush1.bf16.msra.mxu0 %v676
      %723 = vmatprep.subr.bf16.mxu0 0
      %724 = vmatpush1.bf16.msra.mxu0 %v677
      %725 = vmatprep.subr.bf16.mxu0 0
      %726 = vmatpush1.bf16.msra.mxu0 %v678
      %727 = vmatprep.mubr.bf16.mxu0 %v548
      %728 = vmatmul.mubr.bf16.gmra.mrb[0].mxu0 %v547
      %v729 = vpop.f32.mrb[0].mxu0
      %v730 = vadd.f32 0.0, %v729
      %v731 = vpop.f32.mrb[0].mxu0
      %v732 = vpop.f32.mrb[0].mxu0
      %v733 = vadd.f32 0.0, %v732
      %v734 = vpop.f32.mrb[0].mxu0
      %735 = vmatprep.mubr.bf16.mxu0 %v550
      %736 = vmatmul.mubr.bf16.gmra.mrb[0].mxu0 %v549
      %v737 = vpop.f32.mrb[0].mxu0
      %v738 = vadd.f32 0.0, %v737
      %v739 = vpop.f32.mrb[0].mxu0
      %v740 = vpop.f32.mrb[0].mxu0
      %v741 = vadd.f32 0.0, %v740
      %v742 = vpop.f32.mrb[0].mxu0
      %743 = vmatprep.mubr.bf16.mxu0 %v552
      %744 = vmatmul.mubr.bf16.gmra.mrb[0].mxu0 %v551
      %v745 = vpop.f32.mrb[0].mxu0
      %v746 = vadd.f32 0.0, %v745
      %v747 = vpop.f32.mrb[0].mxu0
      %v748 = vpop.f32.mrb[0].mxu0
      %v749 = vadd.f32 0.0, %v748
      %v750 = vpop.f32.mrb[0].mxu0
      %751 = vmatprep.mubr.bf16.mxu0 %v554
      %752 = vmatmul.mubr.bf16.gmra.mrb[0].mxu0 %v553
      %v753 = vpop.f32.mrb[0].mxu0
      %v754 = vadd.f32 0.0, %v753
      %v755 = vpop.f32.mrb[0].mxu0
      %v756 = vpop.f32.mrb[0].mxu0
      %v757 = vadd.f32 0.0, %v756
      %v758 = vpop.f32.mrb[0].mxu0
      %759 = vmatprep.mubr.bf16.mxu0 %v556
      %760 = vmatmul.mubr.bf16.gmra.mrb[0].mxu0 %v555
      %v761 = vpop.f32.mrb[0].mxu0
      %v762 = vadd.f32 0.0, %v761
      %v763 = vpop.f32.mrb[0].mxu0
      %v764 = vpop.f32.mrb[0].mxu0
      %v765 = vadd.f32 0.0, %v764
      %v766 = vpop.f32.mrb[0].mxu0
      %767 = vmatprep.mubr.bf16.mxu0 %v558
      %768 = vmatmul.mubr.bf16.gmra.mrb[0].mxu0 %v557
      %v769 = vpop.f32.mrb[0].mxu0
      %v770 = vadd.f32 0.0, %v769
      %v771 = vpop.f32.mrb[0].mxu0
      %v772 = vpop.f32.mrb[0].mxu0
      %v773 = vadd.f32 0.0, %v772
      %v774 = vpop.f32.mrb[0].mxu0
      %775 = vmatprep.mubr.bf16.mxu0 %v560
      %776 = vmatmul.mubr.bf16.gmra.mrb[0].mxu0 %v559
      %v777 = vpop.f32.mrb[0].mxu0
      %v778 = vadd.f32 0.0, %v777
      %v779 = vpop.f32.mrb[0].mxu0
      %v780 = vpop.f32.mrb[0].mxu0
      %v781 = vadd.f32 0.0, %v780
      %v782 = vpop.f32.mrb[0].mxu0
      %783 = vmatprep.mubr.bf16.mxu0 %v562
      %784 = vmatmul.mubr.bf16.gmra.mrb[0].mxu0 %v561
      %v785 = vpop.f32.mrb[0].mxu0
      %v786 = vadd.f32 0.0, %v785
      %v787 = vpop.f32.mrb[0].mxu0
      %v788 = vpop.f32.mrb[0].mxu0
      %v789 = vadd.f32 0.0, %v788
      %v790 = vpop.f32.mrb[0].mxu0
      %791 = vmatprep.mubr.bf16.mxu0 %v564
      %792 = vmatmul.mubr.bf16.gmra.mrb[0].mxu0 %v563
      %v793 = vpop.f32.mrb[0].mxu0
      %v794 = vadd.f32 0.0, %v793
      %v795 = vpop.f32.mrb[0].mxu0
      %v796 = vpop.f32.mrb[0].mxu0
      %v797 = vadd.f32 0.0, %v796
      %v798 = vpop.f32.mrb[0].mxu0
      %799 = vmatprep.mubr.bf16.mxu0 %v566
      %800 = vmatmul.mubr.bf16.gmra.mrb[0].mxu0 %v565
      %v801 = vpop.f32.mrb[0].mxu0
      %v802 = vadd.f32 0.0, %v801
      %v803 = vpop.f32.mrb[0].mxu0
      %v804 = vpop.f32.mrb[0].mxu0
      %v805 = vadd.f32 0.0, %v804
      %v806 = vpop.f32.mrb[0].mxu0
      %807 = vmatprep.mubr.bf16.mxu0 %v568
      %808 = vmatmul.mubr.bf16.gmra.mrb[0].mxu0 %v567
      %v809 = vpop.f32.mrb[0].mxu0
      %v810 = vadd.f32 0.0, %v809
      %v811 = vpop.f32.mrb[0].mxu0
      %v812 = vpop.f32.mrb[0].mxu0
      %v813 = vadd.f32 0.0, %v812
      %v814 = vpop.f32.mrb[0].mxu0
      %815 = vmatprep.mubr.bf16.mxu0 %v570
      %816 = vmatmul.mubr.bf16.gmra.mrb[0].mxu0 %v569
      %v817 = vpop.f32.mrb[0].mxu0
      %v818 = vadd.f32 0.0, %v817
      %v819 = vpop.f32.mrb[0].mxu0
      %v820 = vpop.f32.mrb[0].mxu0
      %v821 = vadd.f32 0.0, %v820
      %v822 = vpop.f32.mrb[0].mxu0
      %823 = vmatprep.mubr.bf16.mxu0 %v572
      %824 = vmatmul.mubr.bf16.gmra.mrb[0].mxu0 %v571
      %v825 = vpop.f32.mrb[0].mxu0
      %v826 = vadd.f32 0.0, %v825
      %v827 = vpop.f32.mrb[0].mxu0
      %v828 = vpop.f32.mrb[0].mxu0
      %v829 = vadd.f32 0.0, %v828
      %v830 = vpop.f32.mrb[0].mxu0
      %831 = vdwg.mxu0
      %v832 = vld [vmem:[%s2] sm:$0x1]
      %v834 = vlaneseq
      %v835 = vshrl.u32 %v834, 7
      %v836 = vsub.s32 0, %v835
      %v837 = vrot.slane %v832, %v836
      %v839 = vmul.f32 %v730, %v837
      %v840 = vmul.f32 %v733, %v837
      %v841 = vmul.f32 %v738, %v837
      %v842 = vmul.f32 %v741, %v837
      %v843 = vmul.f32 %v746, %v837
      %v844 = vmul.f32 %v749, %v837
      %v845 = vmul.f32 %v754, %v837
      %v846 = vmul.f32 %v757, %v837
      %v847 = vmul.f32 %v762, %v837
      %v848 = vmul.f32 %v765, %v837
      %v849 = vmul.f32 %v770, %v837
      %v850 = vmul.f32 %v773, %v837
      %v851 = vmul.f32 %v778, %v837
      %v852 = vmul.f32 %v781, %v837
      %v853 = vmul.f32 %v786, %v837
      %v854 = vmul.f32 %v789, %v837
      %v855 = vmul.f32 %v794, %v837
      %v856 = vmul.f32 %v797, %v837
      %v857 = vmul.f32 %v802, %v837
      %v858 = vmul.f32 %v805, %v837
      %v859 = vmul.f32 %v810, %v837
      %v860 = vmul.f32 %v813, %v837
      %v861 = vmul.f32 %v818, %v837
      %v862 = vmul.f32 %v821, %v837
      %v863 = vmul.f32 %v826, %v837
      %v864 = vmul.f32 %v829, %v837
      %v865 = vld [vmem:[%s3] sm:$0x1]
      %v867 = vlaneseq
      %v868 = vshrl.u32 %v867, 7
      %v869 = vsub.s32 0, %v868
      %v870 = vrot.slane %v865, %v869
      %v872 = vadd.f32 %v839, %v870
      %v873 = vadd.f32 %v840, %v870
      %v874 = vadd.f32 %v841, %v870
      %v875 = vadd.f32 %v842, %v870
      %v876 = vadd.f32 %v843, %v870
      %v877 = vadd.f32 %v844, %v870
      %v878 = vadd.f32 %v845, %v870
      %v879 = vadd.f32 %v846, %v870
      %v880 = vadd.f32 %v847, %v870
      %v881 = vadd.f32 %v848, %v870
      %v882 = vadd.f32 %v849, %v870
      %v883 = vadd.f32 %v850, %v870
      %v884 = vadd.f32 %v851, %v870
      %v885 = vadd.f32 %v852, %v870
      %v886 = vadd.f32 %v853, %v870
      %v887 = vadd.f32 %v854, %v870
      %v888 = vadd.f32 %v855, %v870
      %v889 = vadd.f32 %v856, %v870
      %v890 = vadd.f32 %v857, %v870
      %v891 = vadd.f32 %v858, %v870
      %v892 = vadd.f32 %v859, %v870
      %v893 = vadd.f32 %v860, %v870
      %v894 = vadd.f32 %v861, %v870
      %v895 = vadd.f32 %v862, %v870
      %v896 = vadd.f32 %v863, %v870
      %v897 = vadd.f32 %v864, %v870
      %v898 = vmax.f32 %v872, 0.0
      %v899 = vmax.f32 %v873, 0.0
      %v900 = vmax.f32 %v874, 0.0
      %v901 = vmax.f32 %v875, 0.0
      %v902 = vmax.f32 %v876, 0.0
      %v903 = vmax.f32 %v877, 0.0
      %v904 = vmax.f32 %v878, 0.0
      %v905 = vmax.f32 %v879, 0.0
      %v906 = vmax.f32 %v880, 0.0
      %v907 = vmax.f32 %v881, 0.0
      %v908 = vmax.f32 %v882, 0.0
      %v909 = vmax.f32 %v883, 0.0
      %v910 = vmax.f32 %v884, 0.0
      %v911 = vmax.f32 %v885, 0.0
      %v912 = vmax.f32 %v886, 0.0
      %v913 = vmax.f32 %v887, 0.0
      %v914 = vmax.f32 %v888, 0.0
      %v915 = vmax.f32 %v889, 0.0
      %v916 = vmax.f32 %v890, 0.0
      %v917 = vmax.f32 %v891, 0.0
      %v918 = vmax.f32 %v892, 0.0
      %v919 = vmax.f32 %v893, 0.0
      %v920 = vmax.f32 %v894, 0.0
      %v921 = vmax.f32 %v895, 0.0
      %v922 = vmax.f32 %v896, 0.0
      %v923 = vmax.f32 %v897, 0.0
      %v924 = vld [vmem:[%s4] sm:$0xff]
      %v925 = vld [vmem:[%s4 + $0x8] sm:$0xff]
      %v926 = vld [vmem:[%s4 + $0x10] sm:$0xff]
      %v927 = vld [vmem:[%s4 + $0x18] sm:$0xff]
      %v928 = vld [vmem:[%s4 + $0x20] sm:$0xff]
      %v929 = vld [vmem:[%s4 + $0x28] sm:$0xff]
      %v930 = vld [vmem:[%s4 + $0x30] sm:$0xff]
      %v931 = vld [vmem:[%s4 + $0x38] sm:$0xff]
      %v932 = vld [vmem:[%s4 + $0x40] sm:$0xff]
      %v933 = vld [vmem:[%s4 + $0x48] sm:$0xff]
      %v934 = vld [vmem:[%s4 + $0x50] sm:$0xff]
      %v935 = vld [vmem:[%s4 + $0x58] sm:$0xff]
      %v936 = vld [vmem:[%s4 + $0x60] sm:$0xff]
      %v937 = vld [vmem:[%s4 + $0x68] sm:$0xff]
      %v938 = vld [vmem:[%s4 + $0x70] sm:$0xff]
      %v939 = vld [vmem:[%s4 + $0x78] sm:$0xff]
      %v940 = vld [vmem:[%s4 + $0x80] sm:$0xff]
      %v941 = vld [vmem:[%s4 + $0x88] sm:$0xff]
      %v942 = vld [vmem:[%s4 + $0x90] sm:$0xff]
      %v943 = vld [vmem:[%s4 + $0x98] sm:$0xff]
      %v944 = vld [vmem:[%s4 + $0xa0] sm:$0xff]
      %v945 = vld [vmem:[%s4 + $0xa8] sm:$0xff]
      %v946 = vld [vmem:[%s4 + $0xb0] sm:$0xff]
      %v947 = vld [vmem:[%s4 + $0xb8] sm:$0xff]
      %v948 = vld [vmem:[%s4 + $0xc0] sm:$0xff]
      %v949 = vld [vmem:[%s4 + $0xc8] sm:$0xff]
      %951 = vset.pattern.permute.xlu0 0
      %952 = vperm.xlu0 %951, %v924
      %v953 = vpop.permute.xlu0 %952
      %956 = vset.pattern.permute.xlu0 0
      %957 = vperm.xlu0 %956, %v925
      %v958 = vpop.permute.xlu0 %957
      %961 = vset.pattern.permute.xlu0 0
      %962 = vperm.xlu0 %961, %v926
      %v963 = vpop.permute.xlu0 %962
      %966 = vset.pattern.permute.xlu0 0
      %967 = vperm.xlu0 %966, %v927
      %v968 = vpop.permute.xlu0 %967
      %971 = vset.pattern.permute.xlu0 0
      %972 = vperm.xlu0 %971, %v928
      %v973 = vpop.permute.xlu0 %972
      %976 = vset.pattern.permute.xlu0 0
      %977 = vperm.xlu0 %976, %v929
      %v978 = vpop.permute.xlu0 %977
      %981 = vset.pattern.permute.xlu0 0
      %982 = vperm.xlu0 %981, %v930
      %v983 = vpop.permute.xlu0 %982
      %986 = vset.pattern.permute.xlu0 0
      %987 = vperm.xlu0 %986, %v931
      %v988 = vpop.permute.xlu0 %987
      %991 = vset.pattern.permute.xlu0 0
      %992 = vperm.xlu0 %991, %v932
      %v993 = vpop.permute.xlu0 %992
      %996 = vset.pattern.permute.xlu0 0
      %997 = vperm.xlu0 %996, %v933
      %v998 = vpop.permute.xlu0 %997
      %1001 = vset.pattern.permute.xlu0 0
      %1002 = vperm.xlu0 %1001, %v934
      %v1003 = vpop.permute.xlu0 %1002
      %1006 = vset.pattern.permute.xlu0 0
      %1007 = vperm.xlu0 %1006, %v935
      %v1008 = vpop.permute.xlu0 %1007
      %1011 = vset.pattern.permute.xlu0 0
      %1012 = vperm.xlu0 %1011, %v936
      %v1013 = vpop.permute.xlu0 %1012
      %1016 = vset.pattern.permute.xlu0 0
      %1017 = vperm.xlu0 %1016, %v937
      %v1018 = vpop.permute.xlu0 %1017
      %1021 = vset.pattern.permute.xlu0 0
      %1022 = vperm.xlu0 %1021, %v938
      %v1023 = vpop.permute.xlu0 %1022
      %1026 = vset.pattern.permute.xlu0 0
      %1027 = vperm.xlu0 %1026, %v939
      %v1028 = vpop.permute.xlu0 %1027
      %1031 = vset.pattern.permute.xlu0 0
      %1032 = vperm.xlu0 %1031, %v940
      %v1033 = vpop.permute.xlu0 %1032
      %1036 = vset.pattern.permute.xlu0 0
      %1037 = vperm.xlu0 %1036, %v941
      %v1038 = vpop.permute.xlu0 %1037
      %1041 = vset.pattern.permute.xlu0 0
      %1042 = vperm.xlu0 %1041, %v942
      %v1043 = vpop.permute.xlu0 %1042
      %1046 = vset.pattern.permute.xlu0 0
      %1047 = vperm.xlu0 %1046, %v943
      %v1048 = vpop.permute.xlu0 %1047
      %1051 = vset.pattern.permute.xlu0 0
      %1052 = vperm.xlu0 %1051, %v944
      %v1053 = vpop.permute.xlu0 %1052
      %1056 = vset.pattern.permute.xlu0 0
      %1057 = vperm.xlu0 %1056, %v945
      %v1058 = vpop.permute.xlu0 %1057
      %1061 = vset.pattern.permute.xlu0 0
      %1062 = vperm.xlu0 %1061, %v946
      %v1063 = vpop.permute.xlu0 %1062
      %1066 = vset.pattern.permute.xlu0 0
      %1067 = vperm.xlu0 %1066, %v947
      %v1068 = vpop.permute.xlu0 %1067
      %1071 = vset.pattern.permute.xlu0 0
      %1072 = vperm.xlu0 %1071, %v948
      %v1073 = vpop.permute.xlu0 %1072
      %1076 = vset.pattern.permute.xlu0 0
      %1077 = vperm.xlu0 %1076, %v949
      %v1078 = vpop.permute.xlu0 %1077
      %v1080 = vmul.f32 %v898, %v953
      %v1081 = vmul.f32 %v899, %v958
      %v1082 = vmul.f32 %v900, %v963
      %v1083 = vmul.f32 %v901, %v968
      %v1084 = vmul.f32 %v902, %v973
      %v1085 = vmul.f32 %v903, %v978
      %v1086 = vmul.f32 %v904, %v983
      %v1087 = vmul.f32 %v905, %v988
      %v1088 = vmul.f32 %v906, %v993
      %v1089 = vmul.f32 %v907, %v998
      %v1090 = vmul.f32 %v908, %v1003
      %v1091 = vmul.f32 %v909, %v1008
      %v1092 = vmul.f32 %v910, %v1013
      %v1093 = vmul.f32 %v911, %v1018
      %v1094 = vmul.f32 %v912, %v1023
      %v1095 = vmul.f32 %v913, %v1028
      %v1096 = vmul.f32 %v914, %v1033
      %v1097 = vmul.f32 %v915, %v1038
      %v1098 = vmul.f32 %v916, %v1043
      %v1099 = vmul.f32 %v917, %v1048
      %v1100 = vmul.f32 %v918, %v1053
      %v1101 = vmul.f32 %v919, %v1058
      %v1102 = vmul.f32 %v920, %v1063
      %v1103 = vmul.f32 %v921, %v1068
      %v1104 = vmul.f32 %v922, %v1073
      %v1105 = vmul.f32 %v923, %v1078
      %v1106 = vpack.c.bf16 %v1081, %v1080
      %v1107 = vpack.c.bf16 %v1083, %v1082
      %v1108 = vpack.c.bf16 %v1085, %v1084
      %v1109 = vpack.c.bf16 %v1087, %v1086
      %v1110 = vpack.c.bf16 %v1089, %v1088
      %v1111 = vpack.c.bf16 %v1091, %v1090
      %v1112 = vpack.c.bf16 %v1093, %v1092
      %v1113 = vpack.c.bf16 %v1095, %v1094
      %v1114 = vpack.c.bf16 %v1097, %v1096
      %v1115 = vpack.c.bf16 %v1099, %v1098
      %v1116 = vpack.c.bf16 %v1101, %v1100
      %v1117 = vpack.c.bf16 %v1103, %v1102
      %v1118 = vpack.c.bf16 %v1105, %v1104
      %vm1119 = vsmask.f32 256
      %v1121 = vshrl.u32 %v1106, 16
      %v1123 = vrot.slane %v1121, 7
      %v1124 = vshll.u32 %v1106, 16
      %v1126 = vor.u32 %v1123, %v1124
      %v1128 = vshrl.u32 %v1107, 16
      %v1130 = vrot.slane %v1128, 7
      %v1131 = vshll.u32 %v1107, 16
      %v1133 = vor.u32 %v1130, %v1131
      %v1134 = vsel %vm1119, %v1123, %v1133
      %v1136 = vshrl.u32 %v1108, 16
      %v1138 = vrot.slane %v1136, 7
      %v1139 = vshll.u32 %v1108, 16
      %v1141 = vor.u32 %v1138, %v1139
      %v1142 = vsel %vm1119, %v1130, %v1141
      %v1144 = vshrl.u32 %v1109, 16
      %v1146 = vrot.slane %v1144, 7
      %v1147 = vshll.u32 %v1109, 16
      %v1149 = vor.u32 %v1146, %v1147
      %v1150 = vsel %vm1119, %v1138, %v1149
      %v1152 = vshrl.u32 %v1110, 16
      %v1154 = vrot.slane %v1152, 7
      %v1155 = vshll.u32 %v1110, 16
      %v1157 = vor.u32 %v1154, %v1155
      %v1158 = vsel %vm1119, %v1146, %v1157
      %v1160 = vshrl.u32 %v1111, 16
      %v1162 = vrot.slane %v1160, 7
      %v1163 = vshll.u32 %v1111, 16
      %v1165 = vor.u32 %v1162, %v1163
      %v1166 = vsel %vm1119, %v1154, %v1165
      %v1168 = vshrl.u32 %v1112, 16
      %v1170 = vrot.slane %v1168, 7
      %v1171 = vshll.u32 %v1112, 16
      %v1173 = vor.u32 %v1170, %v1171
      %v1174 = vsel %vm1119, %v1162, %v1173
      %v1176 = vshrl.u32 %v1113, 16
      %v1178 = vrot.slane %v1176, 7
      %v1179 = vshll.u32 %v1113, 16
      %v1181 = vor.u32 %v1178, %v1179
      %v1182 = vsel %vm1119, %v1170, %v1181
      %v1184 = vshrl.u32 %v1114, 16
      %v1186 = vrot.slane %v1184, 7
      %v1187 = vshll.u32 %v1114, 16
      %v1189 = vor.u32 %v1186, %v1187
      %v1190 = vsel %vm1119, %v1178, %v1189
      %v1192 = vshrl.u32 %v1115, 16
      %v1194 = vrot.slane %v1192, 7
      %v1195 = vshll.u32 %v1115, 16
      %v1197 = vor.u32 %v1194, %v1195
      %v1198 = vsel %vm1119, %v1186, %v1197
      %v1200 = vshrl.u32 %v1116, 16
      %v1202 = vrot.slane %v1200, 7
      %v1203 = vshll.u32 %v1116, 16
      %v1205 = vor.u32 %v1202, %v1203
      %v1206 = vsel %vm1119, %v1194, %v1205
      %v1208 = vshrl.u32 %v1117, 16
      %v1210 = vrot.slane %v1208, 7
      %v1211 = vshll.u32 %v1117, 16
      %v1213 = vor.u32 %v1210, %v1211
      %v1214 = vsel %vm1119, %v1202, %v1213
      %v1216 = vshrl.u32 %v1118, 16
      %v1218 = vrot.slane %v1216, 7
      %v1219 = vshll.u32 %v1118, 16
      %v1221 = vor.u32 %v1218, %v1219
      %v1222 = vsel %vm1119, %v1210, %v1221
      %vm1237 = vcmask 1047552
      %vm1238 = vsmask.f32 7938
      %vm1239 = vmand %vm1237, %vm1238
      %v1240 = vld [vmem:[#allocation2 + $0x18] sm:$0xff]
      %v1241 = vsel %vm1239, %v1126, %v1240
      %1242 = vst [vmem:[#allocation2 + $0x18] sm:$0xff] %v1241
      %1243 = vst [vmem:[#allocation2 + $0x30] sm:$0xff] %v1134
      %1244 = vst [vmem:[#allocation2 + $0x48] sm:$0xff] %v1142
      %1245 = vst [vmem:[#allocation2 + $0x60] sm:$0xff] %v1150
      %1246 = vst [vmem:[#allocation2 + $0x78] sm:$0xff] %v1158
      %1247 = vst [vmem:[#allocation2 + $0x90] sm:$0xff] %v1166
      %1248 = vst [vmem:[#allocation2 + $0xa8] sm:$0xff] %v1174
      %1249 = vst [vmem:[#allocation2 + $0xc0] sm:$0xff] %v1182
      %1250 = vst [vmem:[#allocation2 + $0xd8] sm:$0xff] %v1190
      %1251 = vst [vmem:[#allocation2 + $0xf0] sm:$0xff] %v1198
      %1252 = vst [vmem:[#allocation2 + $0x108] sm:$0xff] %v1206
      %1253 = vst [vmem:[#allocation2 + $0x120] sm:$0xff] %v1214
      %1254 = vst [vmem:[#allocation2 + $0x138] sm:$0xff] %v1222
      %vm1255 = vcmask 1040384
      %vm1256 = vmand %vm1255, %vm1119
      %v1257 = vld [vmem:[#allocation2 + $0x150] sm:$0x1]
      %v1258 = vsel %vm1256, %v1218, %v1257
      %1259 = vst [vmem:[#allocation2 + $0x150] sm:$0x1] %v1258
      %1260 = vst [vmem:[#allocation2 + $0x20] sm:$0xff] %v1106
      %1261 = vst [vmem:[#allocation2 + $0x38] sm:$0xff] %v1107
      %1262 = vst [vmem:[#allocation2 + $0x50] sm:$0xff] %v1108
      %1263 = vst [vmem:[#allocation2 + $0x68] sm:$0xff] %v1109
      %1264 = vst [vmem:[#allocation2 + $0x80] sm:$0xff] %v1110
      %1265 = vst [vmem:[#allocation2 + $0x98] sm:$0xff] %v1111
      %1266 = vst [vmem:[#allocation2 + $0xb0] sm:$0xff] %v1112
      %1267 = vst [vmem:[#allocation2 + $0xc8] sm:$0xff] %v1113
      %1268 = vst [vmem:[#allocation2 + $0xe0] sm:$0xff] %v1114
      %1269 = vst [vmem:[#allocation2 + $0xf8] sm:$0xff] %v1115
      %1270 = vst [vmem:[#allocation2 + $0x110] sm:$0xff] %v1116
      %1271 = vst [vmem:[#allocation2 + $0x128] sm:$0xff] %v1117
      %1272 = vst [vmem:[#allocation2 + $0x140] sm:$0xff] %v1118
      %vm1273 = vsmask.f32 7424
      %v1274 = vrot.slane %v1124, 1
      %v1275 = vor.u32 %v1121, %v1274
      %v1276 = vrot.slane %v1131, 1
      %v1277 = vsel %vm1273, %v1275, %v1276
      %v1278 = vor.u32 %v1128, %v1276
      %v1279 = vrot.slane %v1139, 1
      %v1280 = vsel %vm1273, %v1278, %v1279
      %v1281 = vor.u32 %v1136, %v1279
      %v1282 = vrot.slane %v1147, 1
      %v1283 = vsel %vm1273, %v1281, %v1282
      %v1284 = vor.u32 %v1144, %v1282
      %v1285 = vrot.slane %v1155, 1
      %v1286 = vsel %vm1273, %v1284, %v1285
      %v1287 = vor.u32 %v1152, %v1285
      %v1288 = vrot.slane %v1163, 1
      %v1289 = vsel %vm1273, %v1287, %v1288
      %v1290 = vor.u32 %v1160, %v1288
      %v1291 = vrot.slane %v1171, 1
      %v1292 = vsel %vm1273, %v1290, %v1291
      %v1293 = vor.u32 %v1168, %v1291
      %v1294 = vrot.slane %v1179, 1
      %v1295 = vsel %vm1273, %v1293, %v1294
      %v1296 = vor.u32 %v1176, %v1294
      %v1297 = vrot.slane %v1187, 1
      %v1298 = vsel %vm1273, %v1296, %v1297
      %v1299 = vor.u32 %v1184, %v1297
      %v1300 = vrot.slane %v1195, 1
      %v1301 = vsel %vm1273, %v1299, %v1300
      %v1302 = vor.u32 %v1192, %v1300
      %v1303 = vrot.slane %v1203, 1
      %v1304 = vsel %vm1273, %v1302, %v1303
      %v1305 = vor.u32 %v1200, %v1303
      %v1306 = vrot.slane %v1211, 1
      %v1307 = vsel %vm1273, %v1305, %v1306
      %v1308 = vor.u32 %v1208, %v1306
      %v1309 = vrot.slane %v1219, 1
      %v1310 = vsel %vm1273, %v1308, %v1309
      %v1311 = vor.u32 %v1216, %v1309
      %vm1326 = vcmask 1047559
      %vm1327 = vsmask.f32 7966
      %vm1328 = vmand %vm1326, %vm1327
      %v1329 = vld [vmem:[#allocation2 + $0x10] sm:$0x80]
      %v1330 = vsel %vm1328, %v1274, %v1329
      %1331 = vst [vmem:[#allocation2 + $0x10] sm:$0x80] %v1330
      %1332 = vst [vmem:[#allocation2 + $0x28] sm:$0xff] %v1277
      %1333 = vst [vmem:[#allocation2 + $0x40] sm:$0xff] %v1280
      %1334 = vst [vmem:[#allocation2 + $0x58] sm:$0xff] %v1283
      %1335 = vst [vmem:[#allocation2 + $0x70] sm:$0xff] %v1286
      %1336 = vst [vmem:[#allocation2 + $0x88] sm:$0xff] %v1289
      %1337 = vst [vmem:[#allocation2 + $0xa0] sm:$0xff] %v1292
      %1338 = vst [vmem:[#allocation2 + $0xb8] sm:$0xff] %v1295
      %1339 = vst [vmem:[#allocation2 + $0xd0] sm:$0xff] %v1298
      %1340 = vst [vmem:[#allocation2 + $0xe8] sm:$0xff] %v1301
      %1341 = vst [vmem:[#allocation2 + $0x100] sm:$0xff] %v1304
      %1342 = vst [vmem:[#allocation2 + $0x118] sm:$0xff] %v1307
      %1343 = vst [vmem:[#allocation2 + $0x130] sm:$0xff] %v1310
      %vm1344 = vmand %vm1237, %vm1273
      %v1345 = vld [vmem:[#allocation2 + $0x148] sm:$0xff]
      %v1346 = vsel %vm1344, %v1311, %v1345
      %1347 = vst [vmem:[#allocation2 + $0x148] sm:$0xff] %v1346
      %v1348 = vld [vmem:[#allocation2] sm:$0xf8]
      %v1349 = vld [vmem:[#allocation2 + $0x8] sm:$0xf8]
      %v1350 = vld [vmem:[#allocation2 + $0x10] sm:$0xf8]
      %v1351 = vld [vmem:[#allocation2 + $0x18] sm:$0xff]
      %v1352 = vld [vmem:[#allocation2 + $0x20] sm:$0xff]
      %v1353 = vld [vmem:[#allocation2 + $0x28] sm:$0xff]
      %v1354 = vld [vmem:[#allocation2 + $0x30] sm:$0xff]
      %v1355 = vld [vmem:[#allocation2 + $0x38] sm:$0xff]
      %v1356 = vld [vmem:[#allocation2 + $0x40] sm:$0xff]
      %v1357 = vld [vmem:[#allocation2 + $0x48] sm:$0xff]
      %v1358 = vld [vmem:[#allocation2 + $0x50] sm:$0xff]
      %v1359 = vld [vmem:[#allocation2 + $0x58] sm:$0xff]
      %v1360 = vld [vmem:[#allocation2 + $0x60] sm:$0xff]
      %v1361 = vld [vmem:[#allocation2 + $0x68] sm:$0xff]
      %v1362 = vld [vmem:[#allocation2 + $0x70] sm:$0xff]
      %v1363 = vld [vmem:[#allocation2 + $0x78] sm:$0xff]
      %v1364 = vld [vmem:[#allocation2 + $0x80] sm:$0xff]
      %v1365 = vld [vmem:[#allocation2 + $0x88] sm:$0xff]
      %v1366 = vld [vmem:[#allocation2 + $0x90] sm:$0xff]
      %v1367 = vld [vmem:[#allocation2 + $0x98] sm:$0xff]
      %v1368 = vld [vmem:[#allocation2 + $0xa0] sm:$0xff]
      %v1369 = vld [vmem:[#allocation2 + $0xa8] sm:$0xff]
      %v1370 = vld [vmem:[#allocation2 + $0xb0] sm:$0xff]
      %v1371 = vld [vmem:[#allocation2 + $0xb8] sm:$0xff]
      %v1372 = vld [vmem:[#allocation2 + $0xc0] sm:$0xff]
      %v1373 = vld [vmem:[#allocation2 + $0xc8] sm:$0xff]
      %v1374 = vld [vmem:[#allocation2 + $0xd0] sm:$0xff]
      %v1375 = vld [vmem:[#allocation2 + $0xd8] sm:$0xff]
      %v1376 = vld [vmem:[#allocation2 + $0xe0] sm:$0xff]
      %v1377 = vld [vmem:[#allocation2 + $0xe8] sm:$0xff]
      %v1378 = vld [vmem:[#allocation2 + $0xf0] sm:$0xff]
      %v1379 = vld [vmem:[#allocation2 + $0xf8] sm:$0xff]
      %v1380 = vld [vmem:[#allocation2 + $0x100] sm:$0xff]
      %v1381 = vld [vmem:[#allocation2 + $0x108] sm:$0xff]
      %v1382 = vld [vmem:[#allocation2 + $0x110] sm:$0xff]
      %v1383 = vld [vmem:[#allocation2 + $0x118] sm:$0xff]
      %v1384 = vld [vmem:[#allocation2 + $0x120] sm:$0xff]
      %v1385 = vld [vmem:[#allocation2 + $0x128] sm:$0xff]
      %v1386 = vld [vmem:[#allocation2 + $0x130] sm:$0xff]
      %v1387 = vld [vmem:[#allocation2 + $0x138] sm:$0x7]
      %v1388 = vld [vmem:[#allocation2 + $0x140] sm:$0x7]
      %v1389 = vld [vmem:[#allocation2 + $0x148] sm:$0x7]
      %v1390 = vld [vmem:[%s5] sm:$0xf]
      %v1391 = vld [vmem:[%s5 + $0x4] sm:$0xf]
      %v1392 = vld [vmem:[%s5 + $0x8] sm:$0xf]
      %v1393 = vld [vmem:[%s5 + $0xc] sm:$0xf]
      %v1394 = vld [vmem:[%s5 + $0x10] sm:$0xf]
      %v1395 = vld [vmem:[%s5 + $0x14] sm:$0xf]
      %v1396 = vld [vmem:[%s5 + $0x18] sm:$0xf]
      %v1397 = vld [vmem:[%s5 + $0x1c] sm:$0xf]
      %v1398 = vld [vmem:[%s5 + $0x20] sm:$0xf]
      %v1399 = vld [vmem:[%s5 + $0x24] sm:$0xf]
      %v1400 = vld [vmem:[%s5 + $0x28] sm:$0xf]
      %v1401 = vld [vmem:[%s5 + $0x2c] sm:$0xf]
      %v1402 = vld [vmem:[%s5 + $0x30] sm:$0xf]
      %v1403 = vld [vmem:[%s5 + $0x34] sm:$0xf]
      %v1404 = vld [vmem:[%s5 + $0x38] sm:$0xf]
      %v1405 = vld [vmem:[%s5 + $0x3c] sm:$0xf]
      %v1406 = vld [vmem:[%s5 + $0x40] sm:$0xf]
      %v1407 = vld [vmem:[%s5 + $0x44] sm:$0xf]
      %v1408 = vld [vmem:[%s5 + $0x48] sm:$0xf]
      %v1409 = vld [vmem:[%s5 + $0x4c] sm:$0xf]
      %v1410 = vld [vmem:[%s5 + $0x50] sm:$0xf]
      %v1411 = vld [vmem:[%s5 + $0x54] sm:$0xf]
      %v1412 = vld [vmem:[%s5 + $0x58] sm:$0xf]
      %v1413 = vld [vmem:[%s5 + $0x5c] sm:$0xf]
      %v1414 = vld [vmem:[%s5 + $0x60] sm:$0xf]
      %v1415 = vld [vmem:[%s5 + $0x64] sm:$0xf]
      %v1416 = vld [vmem:[%s5 + $0x68] sm:$0xf]
      %v1417 = vld [vmem:[%s5 + $0x6c] sm:$0xf]
      %v1418 = vld [vmem:[%s5 + $0x70] sm:$0xf]
      %v1419 = vld [vmem:[%s5 + $0x74] sm:$0xf]
      %v1420 = vld [vmem:[%s5 + $0x78] sm:$0xf]
      %v1421 = vld [vmem:[%s5 + $0x7c] sm:$0xf]
      %v1422 = vld [vmem:[%s5 + $0x80] sm:$0xf]
      %v1423 = vld [vmem:[%s5 + $0x84] sm:$0xf]
      %v1424 = vld [vmem:[%s5 + $0x88] sm:$0xf]
      %v1425 = vld [vmem:[%s5 + $0x8c] sm:$0xf]
      %v1426 = vld [vmem:[%s5 + $0x90] sm:$0xf]
      %v1427 = vld [vmem:[%s5 + $0x94] sm:$0xf]
      %v1428 = vld [vmem:[%s5 + $0x98] sm:$0xf]
      %v1429 = vld [vmem:[%s5 + $0x9c] sm:$0xf]
      %v1430 = vld [vmem:[%s5 + $0xa0] sm:$0xf]
      %v1431 = vld [vmem:[%s5 + $0xa4] sm:$0xf]
      %v1432 = vld [vmem:[%s5 + $0xa8] sm:$0xf]
      %v1433 = vld [vmem:[%s5 + $0xac] sm:$0xf]
      %v1434 = vld [vmem:[%s5 + $0xb0] sm:$0xf]
      %v1435 = vld [vmem:[%s5 + $0xb4] sm:$0xf]
      %v1436 = vld [vmem:[%s5 + $0xb8] sm:$0xf]
      %v1437 = vld [vmem:[%s5 + $0xbc] sm:$0xf]
      %v1438 = vld [vmem:[#allocation2 + $0x138] sm:$0xff]
      %v1439 = vld [vmem:[#allocation2 + $0x140] sm:$0xff]
      %v1440 = vld [vmem:[#allocation2 + $0x148] sm:$0xff]
      %s1441 = scalar_lea.vmem %s5, 192
      %v1442 = vld [vmem:[%s1441] sm:$0xf]
      %v1443 = vld [vmem:[%s1441 + $0x4] sm:$0xf]
      %v1444 = vld [vmem:[%s1441 + $0x8] sm:$0xf]
      %v1445 = vld [vmem:[%s1441 + $0xc] sm:$0xf]
      %v1446 = vld [vmem:[%s1441 + $0x10] sm:$0xf]
      %v1447 = vld [vmem:[%s1441 + $0x14] sm:$0xf]
      %v1448 = vld [vmem:[%s1441 + $0x18] sm:$0xf]
      %v1449 = vld [vmem:[%s1441 + $0x1c] sm:$0xf]
      %v1450 = vld [vmem:[%s1441 + $0x20] sm:$0xf]
      %v1451 = vld [vmem:[%s1441 + $0x24] sm:$0xf]
      %v1452 = vld [vmem:[%s1441 + $0x28] sm:$0xf]
      %v1453 = vld [vmem:[%s1441 + $0x2c] sm:$0xf]
      %v1454 = vld [vmem:[%s1441 + $0x30] sm:$0xf]
      %v1455 = vld [vmem:[%s1441 + $0x34] sm:$0xf]
      %v1456 = vld [vmem:[%s1441 + $0x38] sm:$0xf]
      %v1457 = vld [vmem:[%s1441 + $0x3c] sm:$0xf]
      %v1458 = vld [vmem:[%s1441 + $0x40] sm:$0xf]
      %v1459 = vld [vmem:[%s1441 + $0x44] sm:$0xf]
      %v1460 = vld [vmem:[%s1441 + $0x48] sm:$0xf]
      %v1461 = vld [vmem:[%s1441 + $0x4c] sm:$0xf]
      %v1462 = vld [vmem:[%s1441 + $0x50] sm:$0xf]
      %v1463 = vld [vmem:[%s1441 + $0x54] sm:$0xf]
      %v1464 = vld [vmem:[%s1441 + $0x58] sm:$0xf]
      %v1465 = vld [vmem:[%s1441 + $0x5c] sm:$0xf]
      %v1466 = vld [vmem:[%s1441 + $0x60] sm:$0xf]
      %v1467 = vld [vmem:[%s1441 + $0x64] sm:$0xf]
      %v1468 = vld [vmem:[%s1441 + $0x68] sm:$0xf]
      %v1469 = vld [vmem:[%s1441 + $0x6c] sm:$0xf]
      %v1470 = vld [vmem:[%s1441 + $0x70] sm:$0xf]
      %v1471 = vld [vmem:[%s1441 + $0x74] sm:$0xf]
      %v1472 = vld [vmem:[%s1441 + $0x78] sm:$0xf]
      %v1473 = vld [vmem:[%s1441 + $0x7c] sm:$0xf]
      %v1474 = vld [vmem:[%s1441 + $0x80] sm:$0xf]
      %v1475 = vld [vmem:[%s1441 + $0x84] sm:$0xf]
      %v1476 = vld [vmem:[%s1441 + $0x88] sm:$0xf]
      %v1477 = vld [vmem:[%s1441 + $0x8c] sm:$0xf]
      %v1478 = vld [vmem:[%s1441 + $0x90] sm:$0xf]
      %v1479 = vld [vmem:[%s1441 + $0x94] sm:$0xf]
      %v1480 = vld [vmem:[%s1441 + $0x98] sm:$0xf]
      %v1481 = vld [vmem:[%s1441 + $0x9c] sm:$0xf]
      %v1482 = vld [vmem:[%s1441 + $0xa0] sm:$0xf]
      %v1483 = vld [vmem:[%s1441 + $0xa4] sm:$0xf]
      %v1484 = vld [vmem:[%s1441 + $0xa8] sm:$0xf]
      %v1485 = vld [vmem:[%s1441 + $0xac] sm:$0xf]
      %v1486 = vld [vmem:[%s1441 + $0xb0] sm:$0xf]
      %v1487 = vld [vmem:[%s1441 + $0xb4] sm:$0xf]
      %v1488 = vld [vmem:[%s1441 + $0xb8] sm:$0xf]
      %v1489 = vld [vmem:[%s1441 + $0xbc] sm:$0xf]
      %v1538 = vunpack.c.l.b16 %v1442
      %v1539 = vunpack.c.l.b16 %v1443
      %v1540 = vunpack.c.l.b16 %v1444
      %v1541 = vunpack.c.l.b16 %v1445
      %v1542 = vunpack.c.l.b16 %v1446
      %v1543 = vunpack.c.l.b16 %v1447
      %v1544 = vunpack.c.l.b16 %v1448
      %v1545 = vunpack.c.l.b16 %v1449
      %v1546 = vunpack.c.l.b16 %v1450
      %v1547 = vunpack.c.l.b16 %v1451
      %v1548 = vunpack.c.l.b16 %v1452
      %v1549 = vunpack.c.l.b16 %v1453
      %v1550 = vunpack.c.l.b16 %v1454
      %v1551 = vunpack.c.l.b16 %v1455
      %v1552 = vunpack.c.l.b16 %v1456
      %v1553 = vunpack.c.l.b16 %v1457
      %v1554 = vunpack.c.l.b16 %v1458
      %v1555 = vunpack.c.l.b16 %v1459
      %v1556 = vunpack.c.l.b16 %v1460
      %v1557 = vunpack.c.l.b16 %v1461
      %v1558 = vunpack.c.l.b16 %v1462
      %v1559 = vunpack.c.l.b16 %v1463
      %v1560 = vunpack.c.l.b16 %v1464
      %v1561 = vunpack.c.l.b16 %v1465
      %v1562 = vunpack.c.l.b16 %v1466
      %v1563 = vunpack.c.l.b16 %v1467
      %v1564 = vunpack.c.l.b16 %v1468
      %v1565 = vunpack.c.l.b16 %v1469
      %v1566 = vunpack.c.l.b16 %v1470
      %v1567 = vunpack.c.l.b16 %v1471
      %v1568 = vunpack.c.l.b16 %v1472
      %v1569 = vunpack.c.l.b16 %v1473
      %v1570 = vunpack.c.l.b16 %v1474
      %v1571 = vunpack.c.l.b16 %v1475
      %v1572 = vunpack.c.l.b16 %v1476
      %v1573 = vunpack.c.l.b16 %v1477
      %v1574 = vunpack.c.l.b16 %v1478
      %v1575 = vunpack.c.l.b16 %v1479
      %v1576 = vunpack.c.l.b16 %v1480
      %v1577 = vunpack.c.l.b16 %v1481
      %v1578 = vunpack.c.l.b16 %v1482
      %v1579 = vunpack.c.l.b16 %v1483
      %v1580 = vunpack.c.l.b16 %v1484
      %v1581 = vunpack.c.l.b16 %v1485
      %v1582 = vunpack.c.l.b16 %v1486
      %v1583 = vunpack.c.l.b16 %v1487
      %v1584 = vunpack.c.l.b16 %v1488
      %v1585 = vunpack.c.l.b16 %v1489
      %v1586 = vpack.c.b16 %v1539, %v1538
      %v1587 = vpack.c.b16 %v1541, %v1540
      %v1588 = vpack.c.b16 %v1543, %v1542
      %v1589 = vpack.c.b16 %v1545, %v1544
      %v1590 = vpack.c.b16 %v1547, %v1546
      %v1591 = vpack.c.b16 %v1549, %v1548
      %v1592 = vpack.c.b16 %v1551, %v1550
      %v1593 = vpack.c.b16 %v1553, %v1552
      %v1594 = vpack.c.b16 %v1555, %v1554
      %v1595 = vpack.c.b16 %v1557, %v1556
      %v1596 = vpack.c.b16 %v1559, %v1558
      %v1597 = vpack.c.b16 %v1561, %v1560
      %v1598 = vpack.c.b16 %v1563, %v1562
      %v1599 = vpack.c.b16 %v1565, %v1564
      %v1600 = vpack.c.b16 %v1567, %v1566
      %v1601 = vpack.c.b16 %v1569, %v1568
      %v1602 = vpack.c.b16 %v1571, %v1570
      %v1603 = vpack.c.b16 %v1573, %v1572
      %v1604 = vpack.c.b16 %v1575, %v1574
      %v1605 = vpack.c.b16 %v1577, %v1576
      %v1606 = vpack.c.b16 %v1579, %v1578
      %v1607 = vpack.c.b16 %v1581, %v1580
      %v1608 = vpack.c.b16 %v1583, %v1582
      %v1609 = vpack.c.b16 %v1585, %v1584
      %1634 = vmatprep.subr.bf16.mxu0 0
      %1635 = vmatpush1.bf16.msra.mxu0 %v1586
      %1636 = vmatprep.subr.bf16.mxu0 0
      %1637 = vmatpush1.bf16.msra.mxu0 %v1587
      %1638 = vmatprep.subr.bf16.mxu0 0
      %1639 = vmatpush1.bf16.msra.mxu0 %v1588
      %1640 = vmatprep.subr.bf16.mxu0 0
      %1641 = vmatpush1.bf16.msra.mxu0 %v1589
      %1642 = vmatprep.subr.bf16.mxu0 0
      %1643 = vmatpush1.bf16.msra.mxu0 %v1590
      %1644 = vmatprep.subr.bf16.mxu0 0
      %1645 = vmatpush1.bf16.msra.mxu0 %v1591
      %1646 = vmatprep.subr.bf16.mxu0 0
      %1647 = vmatpush1.bf16.msra.mxu0 %v1592
      %1648 = vmatprep.subr.bf16.mxu0 0
      %1649 = vmatpush1.bf16.msra.mxu0 %v1593
      %1650 = vmatprep.subr.bf16.mxu0 0
      %1651 = vmatpush1.bf16.msra.mxu0 %v1594
      %1652 = vmatprep.subr.bf16.mxu0 0
      %1653 = vmatpush1.bf16.msra.mxu0 %v1595
      %1654 = vmatprep.subr.bf16.mxu0 0
      %1655 = vmatpush1.bf16.msra.mxu0 %v1596
      %1656 = vmatprep.subr.bf16.mxu0 0
      %1657 = vmatpush1.bf16.msra.mxu0 %v1597
      %1658 = vmatprep.subr.bf16.mxu0 0
      %1659 = vmatpush1.bf16.msra.mxu0 %v1598
      %1660 = vmatprep.subr.bf16.mxu0 0
      %1661 = vmatpush1.bf16.msra.mxu0 %v1599
      %1662 = vmatprep.subr.bf16.mxu0 0
      %1663 = vmatpush1.bf16.msra.mxu0 %v1600
      %1664 = vmatprep.subr.bf16.mxu0 0
      %1665 = vmatpush1.bf16.msra.mxu0 %v1601
      %1666 = vmatprep.mubr.bf16.mxu0 %v1352
      %1667 = vmatmul.mubr.bf16.gmra.mrb[0].mxu0 %v1351
      %v1668 = vpop.f32.mrb[0].mxu0
      %v1669 = vadd.f32 0.0, %v1668
      %v1670 = vpop.f32.mrb[0].mxu0
      %v1671 = vpop.f32.mrb[0].mxu0
      %v1672 = vadd.f32 0.0, %v1671
      %v1673 = vpop.f32.mrb[0].mxu0
      %1674 = vmatprep.mubr.bf16.mxu0 %v1355
      %1675 = vmatmul.mubr.bf16.gmra.mrb[0].mxu0 %v1354
      %v1676 = vpop.f32.mrb[0].mxu0
      %v1677 = vadd.f32 0.0, %v1676
      %v1678 = vpop.f32.mrb[0].mxu0
      %v1679 = vpop.f32.mrb[0].mxu0
      %v1680 = vadd.f32 0.0, %v1679
      %v1681 = vpop.f32.mrb[0].mxu0
      %1682 = vmatprep.mubr.bf16.mxu0 %v1358
      %1683 = vmatmul.mubr.bf16.gmra.mrb[0].mxu0 %v1357
      %v1684 = vpop.f32.mrb[0].mxu0
      %v1685 = vadd.f32 0.0, %v1684
      %v1686 = vpop.f32.mrb[0].mxu0
      %v1687 = vpop.f32.mrb[0].mxu0
      %v1688 = vadd.f32 0.0, %v1687
      %v1689 = vpop.f32.mrb[0].mxu0
      %1690 = vmatprep.mubr.bf16.mxu0 %v1361
      %1691 = vmatmul.mubr.bf16.gmra.mrb[0].mxu0 %v1360
      %v1692 = vpop.f32.mrb[0].mxu0
      %v1693 = vadd.f32 0.0, %v1692
      %v1694 = vpop.f32.mrb[0].mxu0
      %v1695 = vpop.f32.mrb[0].mxu0
      %v1696 = vadd.f32 0.0, %v1695
      %v1697 = vpop.f32.mrb[0].mxu0
      %1698 = vmatprep.mubr.bf16.mxu0 %v1364
      %1699 = vmatmul.mubr.bf16.gmra.mrb[0].mxu0 %v1363
      %v1700 = vpop.f32.mrb[0].mxu0
      %v1701 = vadd.f32 0.0, %v1700
      %v1702 = vpop.f32.mrb[0].mxu0
      %v1703 = vpop.f32.mrb[0].mxu0
      %v1704 = vadd.f32 0.0, %v1703
      %v1705 = vpop.f32.mrb[0].mxu0
      %1706 = vmatprep.mubr.bf16.mxu0 %v1367
      %1707 = vmatmul.mubr.bf16.gmra.mrb[0].mxu0 %v1366
      %v1708 = vpop.f32.mrb[0].mxu0
      %v1709 = vadd.f32 0.0, %v1708
      %v1710 = vpop.f32.mrb[0].mxu0
      %v1711 = vpop.f32.mrb[0].mxu0
      %v1712 = vadd.f32 0.0, %v1711
      %v1713 = vpop.f32.mrb[0].mxu0
      %1714 = vmatprep.mubr.bf16.mxu0 %v1370
      %1715 = vmatmul.mubr.bf16.gmra.mrb[0].mxu0 %v1369
      %v1716 = vpop.f32.mrb[0].mxu0
      %v1717 = vadd.f32 0.0, %v1716
      %v1718 = vpop.f32.mrb[0].mxu0
      %v1719 = vpop.f32.mrb[0].mxu0
      %v1720 = vadd.f32 0.0, %v1719
      %v1721 = vpop.f32.mrb[0].mxu0
      %1722 = vmatprep.mubr.bf16.mxu0 %v1373
      %1723 = vmatmul.mubr.bf16.gmra.mrb[0].mxu0 %v1372
      %v1724 = vpop.f32.mrb[0].mxu0
      %v1725 = vadd.f32 0.0, %v1724
      %v1726 = vpop.f32.mrb[0].mxu0
      %v1727 = vpop.f32.mrb[0].mxu0
      %v1728 = vadd.f32 0.0, %v1727
      %v1729 = vpop.f32.mrb[0].mxu0
      %1730 = vmatprep.mubr.bf16.mxu0 %v1376
      %1731 = vmatmul.mubr.bf16.gmra.mrb[0].mxu0 %v1375
      %v1732 = vpop.f32.mrb[0].mxu0
      %v1733 = vadd.f32 0.0, %v1732
      %v1734 = vpop.f32.mrb[0].mxu0
      %v1735 = vpop.f32.mrb[0].mxu0
      %v1736 = vadd.f32 0.0, %v1735
      %v1737 = vpop.f32.mrb[0].mxu0
      %1738 = vmatprep.mubr.bf16.mxu0 %v1379
      %1739 = vmatmul.mubr.bf16.gmra.mrb[0].mxu0 %v1378
      %v1740 = vpop.f32.mrb[0].mxu0
      %v1741 = vadd.f32 0.0, %v1740
      %v1742 = vpop.f32.mrb[0].mxu0
      %v1743 = vpop.f32.mrb[0].mxu0
      %v1744 = vadd.f32 0.0, %v1743
      %v1745 = vpop.f32.mrb[0].mxu0
      %1746 = vmatprep.mubr.bf16.mxu0 %v1382
      %1747 = vmatmul.mubr.bf16.gmra.mrb[0].mxu0 %v1381
      %v1748 = vpop.f32.mrb[0].mxu0
      %v1749 = vadd.f32 0.0, %v1748
      %v1750 = vpop.f32.mrb[0].mxu0
      %v1751 = vpop.f32.mrb[0].mxu0
      %v1752 = vadd.f32 0.0, %v1751
      %v1753 = vpop.f32.mrb[0].mxu0
      %1754 = vmatprep.mubr.bf16.mxu0 %v1385
      %1755 = vmatmul.mubr.bf16.gmra.mrb[0].mxu0 %v1384
      %v1756 = vpop.f32.mrb[0].mxu0
      %v1757 = vadd.f32 0.0, %v1756
      %v1758 = vpop.f32.mrb[0].mxu0
      %v1759 = vpop.f32.mrb[0].mxu0
      %v1760 = vadd.f32 0.0, %v1759
      %v1761 = vpop.f32.mrb[0].mxu0
      %1762 = vmatprep.mubr.bf16.mxu0 %v1439
      %1763 = vmatmul.mubr.bf16.gmra.mrb[0].mxu0 %v1438
      %v1764 = vpop.f32.mrb[0].mxu0
      %v1765 = vadd.f32 0.0, %v1764
      %v1766 = vpop.f32.mrb[0].mxu0
      %v1767 = vpop.f32.mrb[0].mxu0
      %v1768 = vadd.f32 0.0, %v1767
      %v1769 = vpop.f32.mrb[0].mxu0
      %1770 = vdwg.mxu0
      %1771 = vmatprep.subr.bf16.mxu0 0
      %1772 = vmatpush1.bf16.msra.mxu0 %v1602
      %1773 = vmatprep.subr.bf16.mxu0 0
      %1774 = vmatpush1.bf16.msra.mxu0 %v1603
      %1775 = vmatprep.subr.bf16.mxu0 0
      %1776 = vmatpush1.bf16.msra.mxu0 %v1604
      %1777 = vmatprep.subr.bf16.mxu0 0
      %1778 = vmatpush1.bf16.msra.mxu0 %v1605
      %1779 = vmatprep.subr.bf16.mxu0 0
      %1780 = vmatpush1.bf16.msra.mxu0 %v1606
      %1781 = vmatprep.subr.bf16.mxu0 0
      %1782 = vmatpush1.bf16.msra.mxu0 %v1607
      %1783 = vmatprep.subr.bf16.mxu0 0
      %1784 = vmatpush1.bf16.msra.mxu0 %v1608
      %1785 = vmatprep.subr.bf16.mxu0 0
      %1786 = vmatpush1.bf16.msra.mxu0 %v1609
      %1787 = vmatprep.subr.bf16.mxu0 0
      %1788 = vmatpush1.bf16.msra.mxu0 0
      %1789 = vmatprep.subr.bf16.mxu0 0
      %1790 = vmatpush1.bf16.msra.mxu0 0
      %1791 = vmatprep.subr.bf16.mxu0 0
      %1792 = vmatpush1.bf16.msra.mxu0 0
      %1793 = vmatprep.subr.bf16.mxu0 0
      %1794 = vmatpush1.bf16.msra.mxu0 0
      %1795 = vmatprep.subr.bf16.mxu0 0
      %1796 = vmatpush1.bf16.msra.mxu0 0
      %1797 = vmatprep.subr.bf16.mxu0 0
      %1798 = vmatpush1.bf16.msra.mxu0 0
      %1799 = vmatprep.subr.bf16.mxu0 0
      %1800 = vmatpush1.bf16.msra.mxu0 0
      %1801 = vmatprep.subr.bf16.mxu0 0
      %1802 = vmatpush1.bf16.msra.mxu0 0
      %1803 = vmatprep.mubr.bf16.mxu0 0
      %1804 = vmatmul.mubr.bf16.gmra.mrb[0].mxu0 %v1353
      %v1805 = vpop.f32.mrb[0].mxu0
      %v1806 = vadd.f32 %v1669, %v1805
      %v1807 = vpop.f32.mrb[0].mxu0
      %v1808 = vpop.f32.mrb[0].mxu0
      %v1809 = vadd.f32 %v1672, %v1808
      %v1810 = vpop.f32.mrb[0].mxu0
      %1811 = vmatprep.mubr.bf16.mxu0 0
      %1812 = vmatmul.mubr.bf16.gmra.mrb[0].mxu0 %v1356
      %v1813 = vpop.f32.mrb[0].mxu0
      %v1814 = vadd.f32 %v1677, %v1813
      %v1815 = vpop.f32.mrb[0].mxu0
      %v1816 = vpop.f32.mrb[0].mxu0
      %v1817 = vadd.f32 %v1680, %v1816
      %v1818 = vpop.f32.mrb[0].mxu0
      %1819 = vmatprep.mubr.bf16.mxu0 0
      %1820 = vmatmul.mubr.bf16.gmra.mrb[0].mxu0 %v1359
      %v1821 = vpop.f32.mrb[0].mxu0
      %v1822 = vadd.f32 %v1685, %v1821
      %v1823 = vpop.f32.mrb[0].mxu0
      %v1824 = vpop.f32.mrb[0].mxu0
      %v1825 = vadd.f32 %v1688, %v1824
      %v1826 = vpop.f32.mrb[0].mxu0
      %1827 = vmatprep.mubr.bf16.mxu0 0
      %1828 = vmatmul.mubr.bf16.gmra.mrb[0].mxu0 %v1362
      %v1829 = vpop.f32.mrb[0].mxu0
      %v1830 = vadd.f32 %v1693, %v1829
      %v1831 = vpop.f32.mrb[0].mxu0
      %v1832 = vpop.f32.mrb[0].mxu0
      %v1833 = vadd.f32 %v1696, %v1832
      %v1834 = vpop.f32.mrb[0].mxu0
      %1835 = vmatprep.mubr.bf16.mxu0 0
      %1836 = vmatmul.mubr.bf16.gmra.mrb[0].mxu0 %v1365
      %v1837 = vpop.f32.mrb[0].mxu0
      %v1838 = vadd.f32 %v1701, %v1837
      %v1839 = vpop.f32.mrb[0].mxu0
      %v1840 = vpop.f32.mrb[0].mxu0
      %v1841 = vadd.f32 %v1704, %v1840
      %v1842 = vpop.f32.mrb[0].mxu0
      %1843 = vmatprep.mubr.bf16.mxu0 0
      %1844 = vmatmul.mubr.bf16.gmra.mrb[0].mxu0 %v1368
      %v1845 = vpop.f32.mrb[0].mxu0
      %v1846 = vadd.f32 %v1709, %v1845
      %v1847 = vpop.f32.mrb[0].mxu0
      %v1848 = vpop.f32.mrb[0].mxu0
      %v1849 = vadd.f32 %v1712, %v1848
      %v1850 = vpop.f32.mrb[0].mxu0
      %1851 = vmatprep.mubr.bf16.mxu0 0
      %1852 = vmatmul.mubr.bf16.gmra.mrb[0].mxu0 %v1371
      %v1853 = vpop.f32.mrb[0].mxu0
      %v1854 = vadd.f32 %v1717, %v1853
      %v1855 = vpop.f32.mrb[0].mxu0
      %v1856 = vpop.f32.mrb[0].mxu0
      %v1857 = vadd.f32 %v1720, %v1856
      %v1858 = vpop.f32.mrb[0].mxu0
      %1859 = vmatprep.mubr.bf16.mxu0 0
      %1860 = vmatmul.mubr.bf16.gmra.mrb[0].mxu0 %v1374
      %v1861 = vpop.f32.mrb[0].mxu0
      %v1862 = vadd.f32 %v1725, %v1861
      %v1863 = vpop.f32.mrb[0].mxu0
      %v1864 = vpop.f32.mrb[0].mxu0
      %v1865 = vadd.f32 %v1728, %v1864
      %v1866 = vpop.f32.mrb[0].mxu0
      %1867 = vmatprep.mubr.bf16.mxu0 0
      %1868 = vmatmul.mubr.bf16.gmra.mrb[0].mxu0 %v1377
      %v1869 = vpop.f32.mrb[0].mxu0
      %v1870 = vadd.f32 %v1733, %v1869
      %v1871 = vpop.f32.mrb[0].mxu0
      %v1872 = vpop.f32.mrb[0].mxu0
      %v1873 = vadd.f32 %v1736, %v1872
      %v1874 = vpop.f32.mrb[0].mxu0
      %1875 = vmatprep.mubr.bf16.mxu0 0
      %1876 = vmatmul.mubr.bf16.gmra.mrb[0].mxu0 %v1380
      %v1877 = vpop.f32.mrb[0].mxu0
      %v1878 = vadd.f32 %v1741, %v1877
      %v1879 = vpop.f32.mrb[0].mxu0
      %v1880 = vpop.f32.mrb[0].mxu0
      %v1881 = vadd.f32 %v1744, %v1880
      %v1882 = vpop.f32.mrb[0].mxu0
      %1883 = vmatprep.mubr.bf16.mxu0 0
      %1884 = vmatmul.mubr.bf16.gmra.mrb[0].mxu0 %v1383
      %v1885 = vpop.f32.mrb[0].mxu0
      %v1886 = vadd.f32 %v1749, %v1885
      %v1887 = vpop.f32.mrb[0].mxu0
      %v1888 = vpop.f32.mrb[0].mxu0
      %v1889 = vadd.f32 %v1752, %v1888
      %v1890 = vpop.f32.mrb[0].mxu0
      %1891 = vmatprep.mubr.bf16.mxu0 0
      %1892 = vmatmul.mubr.bf16.gmra.mrb[0].mxu0 %v1386
      %v1893 = vpop.f32.mrb[0].mxu0
      %v1894 = vadd.f32 %v1757, %v1893
      %v1895 = vpop.f32.mrb[0].mxu0
      %v1896 = vpop.f32.mrb[0].mxu0
      %v1897 = vadd.f32 %v1760, %v1896
      %v1898 = vpop.f32.mrb[0].mxu0
      %1899 = vmatprep.mubr.bf16.mxu0 0
      %1900 = vmatmul.mubr.bf16.gmra.mrb[0].mxu0 %v1440
      %v1901 = vpop.f32.mrb[0].mxu0
      %v1902 = vadd.f32 %v1765, %v1901
      %v1903 = vpop.f32.mrb[0].mxu0
      %v1904 = vpop.f32.mrb[0].mxu0
      %v1905 = vadd.f32 %v1768, %v1904
      %v1906 = vpop.f32.mrb[0].mxu0
      %1907 = vdwg.mxu0
      %vm1950 = vcmask 1044480
      %v1951 = vrot.slane %v1348, 3
      %v1952 = vrot.slane %v1351, 3
      %v1953 = vsel %vm1950, %v1951, %v1952
      %v1954 = vrot.slane %v1349, 3
      %v1955 = vrot.slane %v1352, 3
      %v1956 = vsel %vm1950, %v1954, %v1955
      %v1957 = vrot.slane %v1350, 3
      %v1958 = vrot.slane %v1353, 3
      %v1959 = vsel %vm1950, %v1957, %v1958
      %v1960 = vrot.slane %v1354, 3
      %v1961 = vsel %vm1950, %v1952, %v1960
      %v1962 = vrot.slane %v1355, 3
      %v1963 = vsel %vm1950, %v1955, %v1962
      %v1964 = vrot.slane %v1356, 3
      %v1965 = vsel %vm1950, %v1958, %v1964
      %v1966 = vrot.slane %v1357, 3
      %v1967 = vsel %vm1950, %v1960, %v1966
      %v1968 = vrot.slane %v1358, 3
      %v1969 = vsel %vm1950, %v1962, %v1968
      %v1970 = vrot.slane %v1359, 3
      %v1971 = vsel %vm1950, %v1964, %v1970
      %v1972 = vrot.slane %v1360, 3
      %v1973 = vsel %vm1950, %v1966, %v1972
      %v1974 = vrot.slane %v1361, 3
      %v1975 = vsel %vm1950, %v1968, %v1974
      %v1976 = vrot.slane %v1362, 3
      %v1977 = vsel %vm1950, %v1970, %v1976
      %v1978 = vrot.slane %v1363, 3
      %v1979 = vsel %vm1950, %v1972, %v1978
      %v1980 = vrot.slane %v1364, 3
      %v1981 = vsel %vm1950, %v1974, %v1980
      %v1982 = vrot.slane %v1365, 3
      %v1983 = vsel %vm1950, %v1976, %v1982
      %v1984 = vrot.slane %v1366, 3
      %v1985 = vsel %vm1950, %v1978, %v1984
      %v1986 = vrot.slane %v1367, 3
      %v1987 = vsel %vm1950, %v1980, %v1986
      %v1988 = vrot.slane %v1368, 3
      %v1989 = vsel %vm1950, %v1982, %v1988
      %v1990 = vrot.slane %v1369, 3
      %v1991 = vsel %vm1950, %v1984, %v1990
      %v1992 = vrot.slane %v1370, 3
      %v1993 = vsel %vm1950, %v1986, %v1992
      %v1994 = vrot.slane %v1371, 3
      %v1995 = vsel %vm1950, %v1988, %v1994
      %v1996 = vrot.slane %v1372, 3
      %v1997 = vsel %vm1950, %v1990, %v1996
      %v1998 = vrot.slane %v1373, 3
      %v1999 = vsel %vm1950, %v1992, %v1998
      %v2000 = vrot.slane %v1374, 3
      %v2001 = vsel %vm1950, %v1994, %v2000
      %v2002 = vrot.slane %v1375, 3
      %v2003 = vsel %vm1950, %v1996, %v2002
      %v2004 = vrot.slane %v1376, 3
      %v2005 = vsel %vm1950, %v1998, %v2004
      %v2006 = vrot.slane %v1377, 3
      %v2007 = vsel %vm1950, %v2000, %v2006
      %v2008 = vrot.slane %v1378, 3
      %v2009 = vsel %vm1950, %v2002, %v2008
      %v2010 = vrot.slane %v1379, 3
      %v2011 = vsel %vm1950, %v2004, %v2010
      %v2012 = vrot.slane %v1380, 3
      %v2013 = vsel %vm1950, %v2006, %v2012
      %v2014 = vrot.slane %v1381, 3
      %v2015 = vsel %vm1950, %v2008, %v2014
      %v2016 = vrot.slane %v1382, 3
      %v2017 = vsel %vm1950, %v2010, %v2016
      %v2018 = vrot.slane %v1383, 3
      %v2019 = vsel %vm1950, %v2012, %v2018
      %v2020 = vrot.slane %v1384, 3
      %v2021 = vsel %vm1950, %v2014, %v2020
      %v2022 = vrot.slane %v1385, 3
      %v2023 = vsel %vm1950, %v2016, %v2022
      %v2024 = vrot.slane %v1386, 3
      %v2025 = vsel %vm1950, %v2018, %v2024
      %v2026 = vrot.slane %v1387, 3
      %v2027 = vsel %vm1950, %v2020, %v2026
      %v2028 = vrot.slane %v1388, 3
      %v2029 = vsel %vm1950, %v2022, %v2028
      %v2030 = vrot.slane %v1389, 3
      %v2031 = vsel %vm1950, %v2024, %v2030
      %v2119 = vunpack.c.l.b16 %v1390
      %v2120 = vunpack.c.l.b16 %v1391
      %v2121 = vunpack.c.l.b16 %v1392
      %v2122 = vunpack.c.l.b16 %v1393
      %v2123 = vunpack.c.l.b16 %v1394
      %v2124 = vunpack.c.l.b16 %v1395
      %v2125 = vunpack.c.l.b16 %v1396
      %v2126 = vunpack.c.l.b16 %v1397
      %v2127 = vunpack.c.l.b16 %v1398
      %v2128 = vunpack.c.l.b16 %v1399
      %v2129 = vunpack.c.l.b16 %v1400
      %v2130 = vunpack.c.l.b16 %v1401
      %v2131 = vunpack.c.l.b16 %v1402
      %v2132 = vunpack.c.l.b16 %v1403
      %v2133 = vunpack.c.l.b16 %v1404
      %v2134 = vunpack.c.l.b16 %v1405
      %v2135 = vunpack.c.l.b16 %v1406
      %v2136 = vunpack.c.l.b16 %v1407
      %v2137 = vunpack.c.l.b16 %v1408
      %v2138 = vunpack.c.l.b16 %v1409
      %v2139 = vunpack.c.l.b16 %v1410
      %v2140 = vunpack.c.l.b16 %v1411
      %v2141 = vunpack.c.l.b16 %v1412
      %v2142 = vunpack.c.l.b16 %v1413
      %v2143 = vunpack.c.l.b16 %v1414
      %v2144 = vunpack.c.l.b16 %v1415
      %v2145 = vunpack.c.l.b16 %v1416
      %v2146 = vunpack.c.l.b16 %v1417
      %v2147 = vunpack.c.l.b16 %v1418
      %v2148 = vunpack.c.l.b16 %v1419
      %v2149 = vunpack.c.l.b16 %v1420
      %v2150 = vunpack.c.l.b16 %v1421
      %v2151 = vunpack.c.l.b16 %v1422
      %v2152 = vunpack.c.l.b16 %v1423
      %v2153 = vunpack.c.l.b16 %v1424
      %v2154 = vunpack.c.l.b16 %v1425
      %v2155 = vunpack.c.l.b16 %v1426
      %v2156 = vunpack.c.l.b16 %v1427
      %v2157 = vunpack.c.l.b16 %v1428
      %v2158 = vunpack.c.l.b16 %v1429
      %v2159 = vunpack.c.l.b16 %v1430
      %v2160 = vunpack.c.l.b16 %v1431
      %v2161 = vunpack.c.l.b16 %v1432
      %v2162 = vunpack.c.l.b16 %v1433
      %v2163 = vunpack.c.l.b16 %v1434
      %v2164 = vunpack.c.l.b16 %v1435
      %v2165 = vunpack.c.l.b16 %v1436
      %v2166 = vunpack.c.l.b16 %v1437
      %v2167 = vpack.c.b16 %v2120, %v2119
      %v2168 = vpack.c.b16 %v2122, %v2121
      %v2169 = vpack.c.b16 %v2124, %v2123
      %v2170 = vpack.c.b16 %v2126, %v2125
      %v2171 = vpack.c.b16 %v2128, %v2127
      %v2172 = vpack.c.b16 %v2130, %v2129
      %v2173 = vpack.c.b16 %v2132, %v2131
      %v2174 = vpack.c.b16 %v2134, %v2133
      %v2175 = vpack.c.b16 %v2136, %v2135
      %v2176 = vpack.c.b16 %v2138, %v2137
      %v2177 = vpack.c.b16 %v2140, %v2139
      %v2178 = vpack.c.b16 %v2142, %v2141
      %v2179 = vpack.c.b16 %v2144, %v2143
      %v2180 = vpack.c.b16 %v2146, %v2145
      %v2181 = vpack.c.b16 %v2148, %v2147
      %v2182 = vpack.c.b16 %v2150, %v2149
      %v2183 = vpack.c.b16 %v2152, %v2151
      %v2184 = vpack.c.b16 %v2154, %v2153
      %v2185 = vpack.c.b16 %v2156, %v2155
      %v2186 = vpack.c.b16 %v2158, %v2157
      %v2187 = vpack.c.b16 %v2160, %v2159
      %v2188 = vpack.c.b16 %v2162, %v2161
      %v2189 = vpack.c.b16 %v2164, %v2163
      %v2190 = vpack.c.b16 %v2166, %v2165
      %2215 = vmatprep.subr.bf16.mxu0 0
      %2216 = vmatpush1.bf16.msra.mxu0 %v2167
      %2217 = vmatprep.subr.bf16.mxu0 0
      %2218 = vmatpush1.bf16.msra.mxu0 %v2168
      %2219 = vmatprep.subr.bf16.mxu0 0
      %2220 = vmatpush1.bf16.msra.mxu0 %v2169
      %2221 = vmatprep.subr.bf16.mxu0 0
      %2222 = vmatpush1.bf16.msra.mxu0 %v2170
      %2223 = vmatprep.subr.bf16.mxu0 0
      %2224 = vmatpush1.bf16.msra.mxu0 %v2171
      %2225 = vmatprep.subr.bf16.mxu0 0
      %2226 = vmatpush1.bf16.msra.mxu0 %v2172
      %2227 = vmatprep.subr.bf16.mxu0 0
      %2228 = vmatpush1.bf16.msra.mxu0 %v2173
      %2229 = vmatprep.subr.bf16.mxu0 0
      %2230 = vmatpush1.bf16.msra.mxu0 %v2174
      %2231 = vmatprep.subr.bf16.mxu0 0
      %2232 = vmatpush1.bf16.msra.mxu0 %v2175
      %2233 = vmatprep.subr.bf16.mxu0 0
      %2234 = vmatpush1.bf16.msra.mxu0 %v2176
      %2235 = vmatprep.subr.bf16.mxu0 0
      %2236 = vmatpush1.bf16.msra.mxu0 %v2177
      %2237 = vmatprep.subr.bf16.mxu0 0
      %2238 = vmatpush1.bf16.msra.mxu0 %v2178
      %2239 = vmatprep.subr.bf16.mxu0 0
      %2240 = vmatpush1.bf16.msra.mxu0 %v2179
      %2241 = vmatprep.subr.bf16.mxu0 0
      %2242 = vmatpush1.bf16.msra.mxu0 %v2180
      %2243 = vmatprep.subr.bf16.mxu0 0
      %2244 = vmatpush1.bf16.msra.mxu0 %v2181
      %2245 = vmatprep.subr.bf16.mxu0 0
      %2246 = vmatpush1.bf16.msra.mxu0 %v2182
      %2247 = vmatprep.mubr.bf16.mxu0 %v1956
      %2248 = vmatmul.mubr.bf16.gmra.mrb[0].mxu0 %v1953
      %v2249 = vpop.f32.mrb[0].mxu0
      %v2250 = vadd.f32 %v1806, %v2249
      %v2251 = vpop.f32.mrb[0].mxu0
      %v2252 = vpop.f32.mrb[0].mxu0
      %v2253 = vadd.f32 %v1809, %v2252
      %v2254 = vpop.f32.mrb[0].mxu0
      %2255 = vmatprep.mubr.bf16.mxu0 %v1963
      %2256 = vmatmul.mubr.bf16.gmra.mrb[0].mxu0 %v1961
      %v2257 = vpop.f32.mrb[0].mxu0
      %v2258 = vadd.f32 %v1814, %v2257
      %v2259 = vpop.f32.mrb[0].mxu0
      %v2260 = vpop.f32.mrb[0].mxu0
      %v2261 = vadd.f32 %v1817, %v2260
      %v2262 = vpop.f32.mrb[0].mxu0
      %2263 = vmatprep.mubr.bf16.mxu0 %v1969
      %2264 = vmatmul.mubr.bf16.gmra.mrb[0].mxu0 %v1967
      %v2265 = vpop.f32.mrb[0].mxu0
      %v2266 = vadd.f32 %v1822, %v2265
      %v2267 = vpop.f32.mrb[0].mxu0
      %v2268 = vpop.f32.mrb[0].mxu0
      %v2269 = vadd.f32 %v1825, %v2268
      %v2270 = vpop.f32.mrb[0].mxu0
      %2271 = vmatprep.mubr.bf16.mxu0 %v1975
      %2272 = vmatmul.mubr.bf16.gmra.mrb[0].mxu0 %v1973
      %v2273 = vpop.f32.mrb[0].mxu0
      %v2274 = vadd.f32 %v1830, %v2273
      %v2275 = vpop.f32.mrb[0].mxu0
      %v2276 = vpop.f32.mrb[0].mxu0
      %v2277 = vadd.f32 %v1833, %v2276
      %v2278 = vpop.f32.mrb[0].mxu0
      %2279 = vmatprep.mubr.bf16.mxu0 %v1981
      %2280 = vmatmul.mubr.bf16.gmra.mrb[0].mxu0 %v1979
      %v2281 = vpop.f32.mrb[0].mxu0
      %v2282 = vadd.f32 %v1838, %v2281
      %v2283 = vpop.f32.mrb[0].mxu0
      %v2284 = vpop.f32.mrb[0].mxu0
      %v2285 = vadd.f32 %v1841, %v2284
      %v2286 = vpop.f32.mrb[0].mxu0
      %2287 = vmatprep.mubr.bf16.mxu0 %v1987
      %2288 = vmatmul.mubr.bf16.gmra.mrb[0].mxu0 %v1985
      %v2289 = vpop.f32.mrb[0].mxu0
      %v2290 = vadd.f32 %v1846, %v2289
      %v2291 = vpop.f32.mrb[0].mxu0
      %v2292 = vpop.f32.mrb[0].mxu0
      %v2293 = vadd.f32 %v1849, %v2292
      %v2294 = vpop.f32.mrb[0].mxu0
      %2295 = vmatprep.mubr.bf16.mxu0 %v1993
      %2296 = vmatmul.mubr.bf16.gmra.mrb[0].mxu0 %v1991
      %v2297 = vpop.f32.mrb[0].mxu0
      %v2298 = vadd.f32 %v1854, %v2297
      %v2299 = vpop.f32.mrb[0].mxu0
      %v2300 = vpop.f32.mrb[0].mxu0
      %v2301 = vadd.f32 %v1857, %v2300
      %v2302 = vpop.f32.mrb[0].mxu0
      %2303 = vmatprep.mubr.bf16.mxu0 %v1999
      %2304 = vmatmul.mubr.bf16.gmra.mrb[0].mxu0 %v1997
      %v2305 = vpop.f32.mrb[0].mxu0
      %v2306 = vadd.f32 %v1862, %v2305
      %v2307 = vpop.f32.mrb[0].mxu0
      %v2308 = vpop.f32.mrb[0].mxu0
      %v2309 = vadd.f32 %v1865, %v2308
      %v2310 = vpop.f32.mrb[0].mxu0
      %2311 = vmatprep.mubr.bf16.mxu0 %v2005
      %2312 = vmatmul.mubr.bf16.gmra.mrb[0].mxu0 %v2003
      %v2313 = vpop.f32.mrb[0].mxu0
      %v2314 = vadd.f32 %v1870, %v2313
      %v2315 = vpop.f32.mrb[0].mxu0
      %v2316 = vpop.f32.mrb[0].mxu0
      %v2317 = vadd.f32 %v1873, %v2316
      %v2318 = vpop.f32.mrb[0].mxu0
      %2319 = vmatprep.mubr.bf16.mxu0 %v2011
      %2320 = vmatmul.mubr.bf16.gmra.mrb[0].mxu0 %v2009
      %v2321 = vpop.f32.mrb[0].mxu0
      %v2322 = vadd.f32 %v1878, %v2321
      %v2323 = vpop.f32.mrb[0].mxu0
      %v2324 = vpop.f32.mrb[0].mxu0
      %v2325 = vadd.f32 %v1881, %v2324
      %v2326 = vpop.f32.mrb[0].mxu0
      %2327 = vmatprep.mubr.bf16.mxu0 %v2017
      %2328 = vmatmul.mubr.bf16.gmra.mrb[0].mxu0 %v2015
      %v2329 = vpop.f32.mrb[0].mxu0
      %v2330 = vadd.f32 %v1886, %v2329
      %v2331 = vpop.f32.mrb[0].mxu0
      %v2332 = vpop.f32.mrb[0].mxu0
      %v2333 = vadd.f32 %v1889, %v2332
      %v2334 = vpop.f32.mrb[0].mxu0
      %2335 = vmatprep.mubr.bf16.mxu0 %v2023
      %2336 = vmatmul.mubr.bf16.gmra.mrb[0].mxu0 %v2021
      %v2337 = vpop.f32.mrb[0].mxu0
      %v2338 = vadd.f32 %v1894, %v2337
      %v2339 = vpop.f32.mrb[0].mxu0
      %v2340 = vpop.f32.mrb[0].mxu0
      %v2341 = vadd.f32 %v1897, %v2340
      %v2342 = vpop.f32.mrb[0].mxu0
      %2343 = vmatprep.mubr.bf16.mxu0 %v2029
      %2344 = vmatmul.mubr.bf16.gmra.mrb[0].mxu0 %v2027
      %v2345 = vpop.f32.mrb[0].mxu0
      %v2346 = vadd.f32 %v1902, %v2345
      %v2347 = vpop.f32.mrb[0].mxu0
      %v2348 = vpop.f32.mrb[0].mxu0
      %v2349 = vadd.f32 %v1905, %v2348
      %v2350 = vpop.f32.mrb[0].mxu0
      %2351 = vdwg.mxu0
      %2352 = vmatprep.subr.bf16.mxu0 0
      %2353 = vmatpush1.bf16.msra.mxu0 %v2183
      %2354 = vmatprep.subr.bf16.mxu0 0
      %2355 = vmatpush1.bf16.msra.mxu0 %v2184
      %2356 = vmatprep.subr.bf16.mxu0 0
      %2357 = vmatpush1.bf16.msra.mxu0 %v2185
      %2358 = vmatprep.subr.bf16.mxu0 0
      %2359 = vmatpush1.bf16.msra.mxu0 %v2186
      %2360 = vmatprep.subr.bf16.mxu0 0
      %2361 = vmatpush1.bf16.msra.mxu0 %v2187
      %2362 = vmatprep.subr.bf16.mxu0 0
      %2363 = vmatpush1.bf16.msra.mxu0 %v2188
      %2364 = vmatprep.subr.bf16.mxu0 0
      %2365 = vmatpush1.bf16.msra.mxu0 %v2189
      %2366 = vmatprep.subr.bf16.mxu0 0
      %2367 = vmatpush1.bf16.msra.mxu0 %v2190
      %2368 = vmatprep.subr.bf16.mxu0 0
      %2369 = vmatpush1.bf16.msra.mxu0 0
      %2370 = vmatprep.subr.bf16.mxu0 0
      %2371 = vmatpush1.bf16.msra.mxu0 0
      %2372 = vmatprep.subr.bf16.mxu0 0
      %2373 = vmatpush1.bf16.msra.mxu0 0
      %2374 = vmatprep.subr.bf16.mxu0 0
      %2375 = vmatpush1.bf16.msra.mxu0 0
      %2376 = vmatprep.subr.bf16.mxu0 0
      %2377 = vmatpush1.bf16.msra.mxu0 0
      %2378 = vmatprep.subr.bf16.mxu0 0
      %2379 = vmatpush1.bf16.msra.mxu0 0
      %2380 = vmatprep.subr.bf16.mxu0 0
      %2381 = vmatpush1.bf16.msra.mxu0 0
      %2382 = vmatprep.subr.bf16.mxu0 0
      %2383 = vmatpush1.bf16.msra.mxu0 0
      %2384 = vmatprep.mubr.bf16.mxu0 0
      %2385 = vmatmul.mubr.bf16.gmra.mrb[0].mxu0 %v1959
      %v2386 = vpop.f32.mrb[0].mxu0
      %v2387 = vadd.f32 %v2250, %v2386
      %v2388 = vpop.f32.mrb[0].mxu0
      %v2389 = vpop.f32.mrb[0].mxu0
      %v2390 = vadd.f32 %v2253, %v2389
      %v2391 = vpop.f32.mrb[0].mxu0
      %2392 = vmatprep.mubr.bf16.mxu0 0
      %2393 = vmatmul.mubr.bf16.gmra.mrb[0].mxu0 %v1965
      %v2394 = vpop.f32.mrb[0].mxu0
      %v2395 = vadd.f32 %v2258, %v2394
      %v2396 = vpop.f32.mrb[0].mxu0
      %v2397 = vpop.f32.mrb[0].mxu0
      %v2398 = vadd.f32 %v2261, %v2397
      %v2399 = vpop.f32.mrb[0].mxu0
      %2400 = vmatprep.mubr.bf16.mxu0 0
      %2401 = vmatmul.mubr.bf16.gmra.mrb[0].mxu0 %v1971
      %v2402 = vpop.f32.mrb[0].mxu0
      %v2403 = vadd.f32 %v2266, %v2402
      %v2404 = vpop.f32.mrb[0].mxu0
      %v2405 = vpop.f32.mrb[0].mxu0
      %v2406 = vadd.f32 %v2269, %v2405
      %v2407 = vpop.f32.mrb[0].mxu0
      %2408 = vmatprep.mubr.bf16.mxu0 0
      %2409 = vmatmul.mubr.bf16.gmra.mrb[0].mxu0 %v1977
      %v2410 = vpop.f32.mrb[0].mxu0
      %v2411 = vadd.f32 %v2274, %v2410
      %v2412 = vpop.f32.mrb[0].mxu0
      %v2413 = vpop.f32.mrb[0].mxu0
      %v2414 = vadd.f32 %v2277, %v2413
      %v2415 = vpop.f32.mrb[0].mxu0
      %2416 = vmatprep.mubr.bf16.mxu0 0
      %2417 = vmatmul.mubr.bf16.gmra.mrb[0].mxu0 %v1983
      %v2418 = vpop.f32.mrb[0].mxu0
      %v2419 = vadd.f32 %v2282, %v2418
      %v2420 = vpop.f32.mrb[0].mxu0
      %v2421 = vpop.f32.mrb[0].mxu0
      %v2422 = vadd.f32 %v2285, %v2421
      %v2423 = vpop.f32.mrb[0].mxu0
      %2424 = vmatprep.mubr.bf16.mxu0 0
      %2425 = vmatmul.mubr.bf16.gmra.mrb[0].mxu0 %v1989
      %v2426 = vpop.f32.mrb[0].mxu0
      %v2427 = vadd.f32 %v2290, %v2426
      %v2428 = vpop.f32.mrb[0].mxu0
      %v2429 = vpop.f32.mrb[0].mxu0
      %v2430 = vadd.f32 %v2293, %v2429
      %v2431 = vpop.f32.mrb[0].mxu0
      %2432 = vmatprep.mubr.bf16.mxu0 0
      %2433 = vmatmul.mubr.bf16.gmra.mrb[0].mxu0 %v1995
      %v2434 = vpop.f32.mrb[0].mxu0
      %v2435 = vadd.f32 %v2298, %v2434
      %v2436 = vpop.f32.mrb[0].mxu0
      %v2437 = vpop.f32.mrb[0].mxu0
      %v2438 = vadd.f32 %v2301, %v2437
      %v2439 = vpop.f32.mrb[0].mxu0
      %2440 = vmatprep.mubr.bf16.mxu0 0
      %2441 = vmatmul.mubr.bf16.gmra.mrb[0].mxu0 %v2001
      %v2442 = vpop.f32.mrb[0].mxu0
      %v2443 = vadd.f32 %v2306, %v2442
      %v2444 = vpop.f32.mrb[0].mxu0
      %v2445 = vpop.f32.mrb[0].mxu0
      %v2446 = vadd.f32 %v2309, %v2445
      %v2447 = vpop.f32.mrb[0].mxu0
      %2448 = vmatprep.mubr.bf16.mxu0 0
      %2449 = vmatmul.mubr.bf16.gmra.mrb[0].mxu0 %v2007
      %v2450 = vpop.f32.mrb[0].mxu0
      %v2451 = vadd.f32 %v2314, %v2450
      %v2452 = vpop.f32.mrb[0].mxu0
      %v2453 = vpop.f32.mrb[0].mxu0
      %v2454 = vadd.f32 %v2317, %v2453
      %v2455 = vpop.f32.mrb[0].mxu0
      %2456 = vmatprep.mubr.bf16.mxu0 0
      %2457 = vmatmul.mubr.bf16.gmra.mrb[0].mxu0 %v2013
      %v2458 = vpop.f32.mrb[0].mxu0
      %v2459 = vadd.f32 %v2322, %v2458
      %v2460 = vpop.f32.mrb[0].mxu0
      %v2461 = vpop.f32.mrb[0].mxu0
      %v2462 = vadd.f32 %v2325, %v2461
      %v2463 = vpop.f32.mrb[0].mxu0
      %2464 = vmatprep.mubr.bf16.mxu0 0
      %2465 = vmatmul.mubr.bf16.gmra.mrb[0].mxu0 %v2019
      %v2466 = vpop.f32.mrb[0].mxu0
      %v2467 = vadd.f32 %v2330, %v2466
      %v2468 = vpop.f32.mrb[0].mxu0
      %v2469 = vpop.f32.mrb[0].mxu0
      %v2470 = vadd.f32 %v2333, %v2469
      %v2471 = vpop.f32.mrb[0].mxu0
      %2472 = vmatprep.mubr.bf16.mxu0 0
      %2473 = vmatmul.mubr.bf16.gmra.mrb[0].mxu0 %v2025
      %v2474 = vpop.f32.mrb[0].mxu0
      %v2475 = vadd.f32 %v2338, %v2474
      %v2476 = vpop.f32.mrb[0].mxu0
      %v2477 = vpop.f32.mrb[0].mxu0
      %v2478 = vadd.f32 %v2341, %v2477
      %v2479 = vpop.f32.mrb[0].mxu0
      %2480 = vmatprep.mubr.bf16.mxu0 0
      %2481 = vmatmul.mubr.bf16.gmra.mrb[0].mxu0 %v2031
      %v2482 = vpop.f32.mrb[0].mxu0
      %v2483 = vadd.f32 %v2346, %v2482
      %v2484 = vpop.f32.mrb[0].mxu0
      %v2485 = vpop.f32.mrb[0].mxu0
      %v2486 = vadd.f32 %v2349, %v2485
      %v2487 = vpop.f32.mrb[0].mxu0
      %2488 = vdwg.mxu0
      %v2489 = vld [vmem:[#allocation2 + $0x18] sm:$0xe0]
      %v2490 = vld [vmem:[#allocation2 + $0x20] sm:$0xe0]
      %v2491 = vld [vmem:[#allocation2 + $0x28] sm:$0xe0]
      %v2492 = vld [vmem:[#allocation2 + $0x30] sm:$0xff]
      %v2493 = vld [vmem:[#allocation2 + $0x38] sm:$0xff]
      %v2494 = vld [vmem:[#allocation2 + $0x40] sm:$0xff]
      %v2495 = vld [vmem:[#allocation2 + $0x48] sm:$0xff]
      %v2496 = vld [vmem:[#allocation2 + $0x50] sm:$0xff]
      %v2497 = vld [vmem:[#allocation2 + $0x58] sm:$0xff]
      %v2498 = vld [vmem:[#allocation2 + $0x60] sm:$0xff]
      %v2499 = vld [vmem:[#allocation2 + $0x68] sm:$0xff]
      %v2500 = vld [vmem:[#allocation2 + $0x70] sm:$0xff]
      %v2501 = vld [vmem:[#allocation2 + $0x78] sm:$0xff]
      %v2502 = vld [vmem:[#allocation2 + $0x80] sm:$0xff]
      %v2503 = vld [vmem:[#allocation2 + $0x88] sm:$0xff]
      %v2504 = vld [vmem:[#allocation2 + $0x90] sm:$0xff]
      %v2505 = vld [vmem:[#allocation2 + $0x98] sm:$0xff]
      %v2506 = vld [vmem:[#allocation2 + $0xa0] sm:$0xff]
      %v2507 = vld [vmem:[#allocation2 + $0xa8] sm:$0xff]
      %v2508 = vld [vmem:[#allocation2 + $0xb0] sm:$0xff]
      %v2509 = vld [vmem:[#allocation2 + $0xb8] sm:$0xff]
      %v2510 = vld [vmem:[#allocation2 + $0xc0] sm:$0xff]
      %v2511 = vld [vmem:[#allocation2 + $0xc8] sm:$0xff]
      %v2512 = vld [vmem:[#allocation2 + $0xd0] sm:$0xff]
      %v2513 = vld [vmem:[#allocation2 + $0xd8] sm:$0xff]
      %v2514 = vld [vmem:[#allocation2 + $0xe0] sm:$0xff]
      %v2515 = vld [vmem:[#allocation2 + $0xe8] sm:$0xff]
      %v2516 = vld [vmem:[#allocation2 + $0xf0] sm:$0xff]
      %v2517 = vld [vmem:[#allocation2 + $0xf8] sm:$0xff]
      %v2518 = vld [vmem:[#allocation2 + $0x100] sm:$0xff]
      %v2519 = vld [vmem:[#allocation2 + $0x108] sm:$0xff]
      %v2520 = vld [vmem:[#allocation2 + $0x110] sm:$0xff]
      %v2521 = vld [vmem:[#allocation2 + $0x118] sm:$0xff]
      %v2522 = vld [vmem:[#allocation2 + $0x120] sm:$0xff]
      %v2523 = vld [vmem:[#allocation2 + $0x128] sm:$0xff]
      %v2524 = vld [vmem:[#allocation2 + $0x130] sm:$0xff]
      %v2525 = vld [vmem:[#allocation2 + $0x138] sm:$0xff]
      %v2526 = vld [vmem:[#allocation2 + $0x140] sm:$0xff]
      %v2527 = vld [vmem:[#allocation2 + $0x148] sm:$0xff]
      %v2528 = vld [vmem:[#allocation2 + $0x150] sm:$0x1f]
      %v2529 = vld [vmem:[#allocation2 + $0x158] sm:$0x1f]
      %v2530 = vld [vmem:[#allocation2 + $0x160] sm:$0x1f]
      %s2531 = scalar_lea.vmem %s5, 384
      %v2532 = vld [vmem:[%s2531] sm:$0xf]
      %v2533 = vld [vmem:[%s2531 + $0x4] sm:$0xf]
      %v2534 = vld [vmem:[%s2531 + $0x8] sm:$0xf]
      %v2535 = vld [vmem:[%s2531 + $0xc] sm:$0xf]
      %v2536 = vld [vmem:[%s2531 + $0x10] sm:$0xf]
      %v2537 = vld [vmem:[%s2531 + $0x14] sm:$0xf]
      %v2538 = vld [vmem:[%s2531 + $0x18] sm:$0xf]
      %v2539 = vld [vmem:[%s2531 + $0x1c] sm:$0xf]
      %v2540 = vld [vmem:[%s2531 + $0x20] sm:$0xf]
      %v2541 = vld [vmem:[%s2531 + $0x24] sm:$0xf]
      %v2542 = vld [vmem:[%s2531 + $0x28] sm:$0xf]
      %v2543 = vld [vmem:[%s2531 + $0x2c] sm:$0xf]
      %v2544 = vld [vmem:[%s2531 + $0x30] sm:$0xf]
      %v2545 = vld [vmem:[%s2531 + $0x34] sm:$0xf]
      %v2546 = vld [vmem:[%s2531 + $0x38] sm:$0xf]
      %v2547 = vld [vmem:[%s2531 + $0x3c] sm:$0xf]
      %v2548 = vld [vmem:[%s2531 + $0x40] sm:$0xf]
      %v2549 = vld [vmem:[%s2531 + $0x44] sm:$0xf]
      %v2550 = vld [vmem:[%s2531 + $0x48] sm:$0xf]
      %v2551 = vld [vmem:[%s2531 + $0x4c] sm:$0xf]
      %v2552 = vld [vmem:[%s2531 + $0x50] sm:$0xf]
      %v2553 = vld [vmem:[%s2531 + $0x54] sm:$0xf]
      %v2554 = vld [vmem:[%s2531 + $0x58] sm:$0xf]
      %v2555 = vld [vmem:[%s2531 + $0x5c] sm:$0xf]
      %v2556 = vld [vmem:[%s2531 + $0x60] sm:$0xf]
      %v2557 = vld [vmem:[%s2531 + $0x64] sm:$0xf]
      %v2558 = vld [vmem:[%s2531 + $0x68] sm:$0xf]
      %v2559 = vld [vmem:[%s2531 + $0x6c] sm:$0xf]
      %v2560 = vld [vmem:[%s2531 + $0x70] sm:$0xf]
      %v2561 = vld [vmem:[%s2531 + $0x74] sm:$0xf]
      %v2562 = vld [vmem:[%s2531 + $0x78] sm:$0xf]
      %v2563 = vld [vmem:[%s2531 + $0x7c] sm:$0xf]
      %v2564 = vld [vmem:[%s2531 + $0x80] sm:$0xf]
      %v2565 = vld [vmem:[%s2531 + $0x84] sm:$0xf]
      %v2566 = vld [vmem:[%s2531 + $0x88] sm:$0xf]
      %v2567 = vld [vmem:[%s2531 + $0x8c] sm:$0xf]
      %v2568 = vld [vmem:[%s2531 + $0x90] sm:$0xf]
      %v2569 = vld [vmem:[%s2531 + $0x94] sm:$0xf]
      %v2570 = vld [vmem:[%s2531 + $0x98] sm:$0xf]
      %v2571 = vld [vmem:[%s2531 + $0x9c] sm:$0xf]
      %v2572 = vld [vmem:[%s2531 + $0xa0] sm:$0xf]
      %v2573 = vld [vmem:[%s2531 + $0xa4] sm:$0xf]
      %v2574 = vld [vmem:[%s2531 + $0xa8] sm:$0xf]
      %v2575 = vld [vmem:[%s2531 + $0xac] sm:$0xf]
      %v2576 = vld [vmem:[%s2531 + $0xb0] sm:$0xf]
      %v2577 = vld [vmem:[%s2531 + $0xb4] sm:$0xf]
      %v2578 = vld [vmem:[%s2531 + $0xb8] sm:$0xf]
      %v2579 = vld [vmem:[%s2531 + $0xbc] sm:$0xf]
      %vm2622 = vcmask 1042432
      %v2623 = vrot.slane %v2489, 5
      %v2624 = vrot.slane %v2492, 5
      %v2625 = vsel %vm2622, %v2623, %v2624
      %v2626 = vrot.slane %v2490, 5
      %v2627 = vrot.slane %v2493, 5
      %v2628 = vsel %vm2622, %v2626, %v2627
      %v2629 = vrot.slane %v2491, 5
      %v2630 = vrot.slane %v2494, 5
      %v2631 = vsel %vm2622, %v2629, %v2630
      %v2632 = vrot.slane %v2495, 5
      %v2633 = vsel %vm2622, %v2624, %v2632
      %v2634 = vrot.slane %v2496, 5
      %v2635 = vsel %vm2622, %v2627, %v2634
      %v2636 = vrot.slane %v2497, 5
      %v2637 = vsel %vm2622, %v2630, %v2636
      %v2638 = vrot.slane %v2498, 5
      %v2639 = vsel %vm2622, %v2632, %v2638
      %v2640 = vrot.slane %v2499, 5
      %v2641 = vsel %vm2622, %v2634, %v2640
      %v2642 = vrot.slane %v2500, 5
      %v2643 = vsel %vm2622, %v2636, %v2642
      %v2644 = vrot.slane %v2501, 5
      %v2645 = vsel %vm2622, %v2638, %v2644
      %v2646 = vrot.slane %v2502, 5
      %v2647 = vsel %vm2622, %v2640, %v2646
      %v2648 = vrot.slane %v2503, 5
      %v2649 = vsel %vm2622, %v2642, %v2648
      %v2650 = vrot.slane %v2504, 5
      %v2651 = vsel %vm2622, %v2644, %v2650
      %v2652 = vrot.slane %v2505, 5
      %v2653 = vsel %vm2622, %v2646, %v2652
      %v2654 = vrot.slane %v2506, 5
      %v2655 = vsel %vm2622, %v2648, %v2654
      %v2656 = vrot.slane %v2507, 5
      %v2657 = vsel %vm2622, %v2650, %v2656
      %v2658 = vrot.slane %v2508, 5
      %v2659 = vsel %vm2622, %v2652, %v2658
      %v2660 = vrot.slane %v2509, 5
      %v2661 = vsel %vm2622, %v2654, %v2660
      %v2662 = vrot.slane %v2510, 5
      %v2663 = vsel %vm2622, %v2656, %v2662
      %v2664 = vrot.slane %v2511, 5
      %v2665 = vsel %vm2622, %v2658, %v2664
      %v2666 = vrot.slane %v2512, 5
      %v2667 = vsel %vm2622, %v2660, %v2666
      %v2668 = vrot.slane %v2513, 5
      %v2669 = vsel %vm2622, %v2662, %v2668
      %v2670 = vrot.slane %v2514, 5
      %v2671 = vsel %vm2622, %v2664, %v2670
      %v2672 = vrot.slane %v2515, 5
      %v2673 = vsel %vm2622, %v2666, %v2672
      %v2674 = vrot.slane %v2516, 5
      %v2675 = vsel %vm2622, %v2668, %v2674
      %v2676 = vrot.slane %v2517, 5
      %v2677 = vsel %vm2622, %v2670, %v2676
      %v2678 = vrot.slane %v2518, 5
      %v2679 = vsel %vm2622, %v2672, %v2678
      %v2680 = vrot.slane %v2519, 5
      %v2681 = vsel %vm2622, %v2674, %v2680
      %v2682 = vrot.slane %v2520, 5
      %v2683 = vsel %vm2622, %v2676, %v2682
      %v2684 = vrot.slane %v2521, 5
      %v2685 = vsel %vm2622, %v2678, %v2684
      %v2686 = vrot.slane %v2522, 5
      %v2687 = vsel %vm2622, %v2680, %v2686
      %v2688 = vrot.slane %v2523, 5
      %v2689 = vsel %vm2622, %v2682, %v2688
      %v2690 = vrot.slane %v2524, 5
      %v2691 = vsel %vm2622, %v2684, %v2690
      %v2692 = vrot.slane %v2525, 5
      %v2693 = vsel %vm2622, %v2686, %v2692
      %v2694 = vrot.slane %v2526, 5
      %v2695 = vsel %vm2622, %v2688, %v2694
      %v2696 = vrot.slane %v2527, 5
      %v2697 = vsel %vm2622, %v2690, %v2696
      %v2698 = vrot.slane %v2528, 5
      %v2699 = vsel %vm2622, %v2692, %v2698
      %v2700 = vrot.slane %v2529, 5
      %v2701 = vsel %vm2622, %v2694, %v2700
      %v2702 = vrot.slane %v2530, 5
      %v2703 = vsel %vm2622, %v2696, %v2702
      %v2791 = vunpack.c.l.b16 %v2532
      %v2792 = vunpack.c.l.b16 %v2533
      %v2793 = vunpack.c.l.b16 %v2534
      %v2794 = vunpack.c.l.b16 %v2535
      %v2795 = vunpack.c.l.b16 %v2536
      %v2796 = vunpack.c.l.b16 %v2537
      %v2797 = vunpack.c.l.b16 %v2538
      %v2798 = vunpack.c.l.b16 %v2539
      %v2799 = vunpack.c.l.b16 %v2540
      %v2800 = vunpack.c.l.b16 %v2541
      %v2801 = vunpack.c.l.b16 %v2542
      %v2802 = vunpack.c.l.b16 %v2543
      %v2803 = vunpack.c.l.b16 %v2544
      %v2804 = vunpack.c.l.b16 %v2545
      %v2805 = vunpack.c.l.b16 %v2546
      %v2806 = vunpack.c.l.b16 %v2547
      %v2807 = vunpack.c.l.b16 %v2548
      %v2808 = vunpack.c.l.b16 %v2549
      %v2809 = vunpack.c.l.b16 %v2550
      %v2810 = vunpack.c.l.b16 %v2551
      %v2811 = vunpack.c.l.b16 %v2552
      %v2812 = vunpack.c.l.b16 %v2553
      %v2813 = vunpack.c.l.b16 %v2554
      %v2814 = vunpack.c.l.b16 %v2555
      %v2815 = vunpack.c.l.b16 %v2556
      %v2816 = vunpack.c.l.b16 %v2557
      %v2817 = vunpack.c.l.b16 %v2558
      %v2818 = vunpack.c.l.b16 %v2559
      %v2819 = vunpack.c.l.b16 %v2560
      %v2820 = vunpack.c.l.b16 %v2561
      %v2821 = vunpack.c.l.b16 %v2562
      %v2822 = vunpack.c.l.b16 %v2563
      %v2823 = vunpack.c.l.b16 %v2564
      %v2824 = vunpack.c.l.b16 %v2565
      %v2825 = vunpack.c.l.b16 %v2566
      %v2826 = vunpack.c.l.b16 %v2567
      %v2827 = vunpack.c.l.b16 %v2568
      %v2828 = vunpack.c.l.b16 %v2569
      %v2829 = vunpack.c.l.b16 %v2570
      %v2830 = vunpack.c.l.b16 %v2571
      %v2831 = vunpack.c.l.b16 %v2572
      %v2832 = vunpack.c.l.b16 %v2573
      %v2833 = vunpack.c.l.b16 %v2574
      %v2834 = vunpack.c.l.b16 %v2575
      %v2835 = vunpack.c.l.b16 %v2576
      %v2836 = vunpack.c.l.b16 %v2577
      %v2837 = vunpack.c.l.b16 %v2578
      %v2838 = vunpack.c.l.b16 %v2579
      %v2839 = vpack.c.b16 %v2792, %v2791
      %v2840 = vpack.c.b16 %v2794, %v2793
      %v2841 = vpack.c.b16 %v2796, %v2795
      %v2842 = vpack.c.b16 %v2798, %v2797
      %v2843 = vpack.c.b16 %v2800, %v2799
      %v2844 = vpack.c.b16 %v2802, %v2801
      %v2845 = vpack.c.b16 %v2804, %v2803
      %v2846 = vpack.c.b16 %v2806, %v2805
      %v2847 = vpack.c.b16 %v2808, %v2807
      %v2848 = vpack.c.b16 %v2810, %v2809
      %v2849 = vpack.c.b16 %v2812, %v2811
      %v2850 = vpack.c.b16 %v2814, %v2813
      %v2851 = vpack.c.b16 %v2816, %v2815
      %v2852 = vpack.c.b16 %v2818, %v2817
      %v2853 = vpack.c.b16 %v2820, %v2819
      %v2854 = vpack.c.b16 %v2822, %v2821
      %v2855 = vpack.c.b16 %v2824, %v2823
      %v2856 = vpack.c.b16 %v2826, %v2825
      %v2857 = vpack.c.b16 %v2828, %v2827
      %v2858 = vpack.c.b16 %v2830, %v2829
      %v2859 = vpack.c.b16 %v2832, %v2831
      %v2860 = vpack.c.b16 %v2834, %v2833
      %v2861 = vpack.c.b16 %v2836, %v2835
      %v2862 = vpack.c.b16 %v2838, %v2837
      %2887 = vmatprep.subr.bf16.mxu0 0
      %2888 = vmatpush1.bf16.msra.mxu0 %v2839
      %2889 = vmatprep.subr.bf16.mxu0 0
      %2890 = vmatpush1.bf16.msra.mxu0 %v2840
      %2891 = vmatprep.subr.bf16.mxu0 0
      %2892 = vmatpush1.bf16.msra.mxu0 %v2841
      %2893 = vmatprep.subr.bf16.mxu0 0
      %2894 = vmatpush1.bf16.msra.mxu0 %v2842
      %2895 = vmatprep.subr.bf16.mxu0 0
      %2896 = vmatpush1.bf16.msra.mxu0 %v2843
      %2897 = vmatprep.subr.bf16.mxu0 0
      %2898 = vmatpush1.bf16.msra.mxu0 %v2844
      %2899 = vmatprep.subr.bf16.mxu0 0
      %2900 = vmatpush1.bf16.msra.mxu0 %v2845
      %2901 = vmatprep.subr.bf16.mxu0 0
      %2902 = vmatpush1.bf16.msra.mxu0 %v2846
      %2903 = vmatprep.subr.bf16.mxu0 0
      %2904 = vmatpush1.bf16.msra.mxu0 %v2847
      %2905 = vmatprep.subr.bf16.mxu0 0
      %2906 = vmatpush1.bf16.msra.mxu0 %v2848
      %2907 = vmatprep.subr.bf16.mxu0 0
      %2908 = vmatpush1.bf16.msra.mxu0 %v2849
      %2909 = vmatprep.subr.bf16.mxu0 0
      %2910 = vmatpush1.bf16.msra.mxu0 %v2850
      %2911 = vmatprep.subr.bf16.mxu0 0
      %2912 = vmatpush1.bf16.msra.mxu0 %v2851
      %2913 = vmatprep.subr.bf16.mxu0 0
      %2914 = vmatpush1.bf16.msra.mxu0 %v2852
      %2915 = vmatprep.subr.bf16.mxu0 0
      %2916 = vmatpush1.bf16.msra.mxu0 %v2853
      %2917 = vmatprep.subr.bf16.mxu0 0
      %2918 = vmatpush1.bf16.msra.mxu0 %v2854
      %2919 = vmatprep.mubr.bf16.mxu0 %v2628
      %2920 = vmatmul.mubr.bf16.gmra.mrb[0].mxu0 %v2625
      %v2921 = vpop.f32.mrb[0].mxu0
      %v2922 = vadd.f32 0.0, %v2921
      %v2923 = vpop.f32.mrb[0].mxu0
      %v2924 = vpop.f32.mrb[0].mxu0
      %v2925 = vadd.f32 0.0, %v2924
      %v2926 = vpop.f32.mrb[0].mxu0
      %2927 = vmatprep.mubr.bf16.mxu0 %v2635
      %2928 = vmatmul.mubr.bf16.gmra.mrb[0].mxu0 %v2633
      %v2929 = vpop.f32.mrb[0].mxu0
      %v2930 = vadd.f32 0.0, %v2929
      %v2931 = vpop.f32.mrb[0].mxu0
      %v2932 = vpop.f32.mrb[0].mxu0
      %v2933 = vadd.f32 0.0, %v2932
      %v2934 = vpop.f32.mrb[0].mxu0
      %2935 = vmatprep.mubr.bf16.mxu0 %v2641
      %2936 = vmatmul.mubr.bf16.gmra.mrb[0].mxu0 %v2639
      %v2937 = vpop.f32.mrb[0].mxu0
      %v2938 = vadd.f32 0.0, %v2937
      %v2939 = vpop.f32.mrb[0].mxu0
      %v2940 = vpop.f32.mrb[0].mxu0
      %v2941 = vadd.f32 0.0, %v2940
      %v2942 = vpop.f32.mrb[0].mxu0
      %2943 = vmatprep.mubr.bf16.mxu0 %v2647
      %2944 = vmatmul.mubr.bf16.gmra.mrb[0].mxu0 %v2645
      %v2945 = vpop.f32.mrb[0].mxu0
      %v2946 = vadd.f32 0.0, %v2945
      %v2947 = vpop.f32.mrb[0].mxu0
      %v2948 = vpop.f32.mrb[0].mxu0
      %v2949 = vadd.f32 0.0, %v2948
      %v2950 = vpop.f32.mrb[0].mxu0
      %2951 = vmatprep.mubr.bf16.mxu0 %v2653
      %2952 = vmatmul.mubr.bf16.gmra.mrb[0].mxu0 %v2651
      %v2953 = vpop.f32.mrb[0].mxu0
      %v2954 = vadd.f32 0.0, %v2953
      %v2955 = vpop.f32.mrb[0].mxu0
      %v2956 = vpop.f32.mrb[0].mxu0
      %v2957 = vadd.f32 0.0, %v2956
      %v2958 = vpop.f32.mrb[0].mxu0
      %2959 = vmatprep.mubr.bf16.mxu0 %v2659
      %2960 = vmatmul.mubr.bf16.gmra.mrb[0].mxu0 %v2657
      %v2961 = vpop.f32.mrb[0].mxu0
      %v2962 = vadd.f32 0.0, %v2961
      %v2963 = vpop.f32.mrb[0].mxu0
      %v2964 = vpop.f32.mrb[0].mxu0
      %v2965 = vadd.f32 0.0, %v2964
      %v2966 = vpop.f32.mrb[0].mxu0
      %2967 = vmatprep.mubr.bf16.mxu0 %v2665
      %2968 = vmatmul.mubr.bf16.gmra.mrb[0].mxu0 %v2663
      %v2969 = vpop.f32.mrb[0].mxu0
      %v2970 = vadd.f32 0.0, %v2969
      %v2971 = vpop.f32.mrb[0].mxu0
      %v2972 = vpop.f32.mrb[0].mxu0
      %v2973 = vadd.f32 0.0, %v2972
      %v2974 = vpop.f32.mrb[0].mxu0
      %2975 = vmatprep.mubr.bf16.mxu0 %v2671
      %2976 = vmatmul.mubr.bf16.gmra.mrb[0].mxu0 %v2669
      %v2977 = vpop.f32.mrb[0].mxu0
      %v2978 = vadd.f32 0.0, %v2977
      %v2979 = vpop.f32.mrb[0].mxu0
      %v2980 = vpop.f32.mrb[0].mxu0
      %v2981 = vadd.f32 0.0, %v2980
      %v2982 = vpop.f32.mrb[0].mxu0
      %2983 = vmatprep.mubr.bf16.mxu0 %v2677
      %2984 = vmatmul.mubr.bf16.gmra.mrb[0].mxu0 %v2675
      %v2985 = vpop.f32.mrb[0].mxu0
      %v2986 = vadd.f32 0.0, %v2985
      %v2987 = vpop.f32.mrb[0].mxu0
      %v2988 = vpop.f32.mrb[0].mxu0
      %v2989 = vadd.f32 0.0, %v2988
      %v2990 = vpop.f32.mrb[0].mxu0
      %2991 = vmatprep.mubr.bf16.mxu0 %v2683
      %2992 = vmatmul.mubr.bf16.gmra.mrb[0].mxu0 %v2681
      %v2993 = vpop.f32.mrb[0].mxu0
      %v2994 = vadd.f32 0.0, %v2993
      %v2995 = vpop.f32.mrb[0].mxu0
      %v2996 = vpop.f32.mrb[0].mxu0
      %v2997 = vadd.f32 0.0, %v2996
      %v2998 = vpop.f32.mrb[0].mxu0
      %2999 = vmatprep.mubr.bf16.mxu0 %v2689
      %3000 = vmatmul.mubr.bf16.gmra.mrb[0].mxu0 %v2687
      %v3001 = vpop.f32.mrb[0].mxu0
      %v3002 = vadd.f32 0.0, %v3001
      %v3003 = vpop.f32.mrb[0].mxu0
      %v3004 = vpop.f32.mrb[0].mxu0
      %v3005 = vadd.f32 0.0, %v3004
      %v3006 = vpop.f32.mrb[0].mxu0
      %3007 = vmatprep.mubr.bf16.mxu0 %v2695
      %3008 = vmatmul.mubr.bf16.gmra.mrb[0].mxu0 %v2693
      %v3009 = vpop.f32.mrb[0].mxu0
      %v3010 = vadd.f32 0.0, %v3009
      %v3011 = vpop.f32.mrb[0].mxu0
      %v3012 = vpop.f32.mrb[0].mxu0
      %v3013 = vadd.f32 0.0, %v3012
      %v3014 = vpop.f32.mrb[0].mxu0
      %3015 = vmatprep.mubr.bf16.mxu0 %v2701
      %3016 = vmatmul.mubr.bf16.gmra.mrb[0].mxu0 %v2699
      %v3017 = vpop.f32.mrb[0].mxu0
      %v3018 = vadd.f32 0.0, %v3017
      %v3019 = vpop.f32.mrb[0].mxu0
      %v3020 = vpop.f32.mrb[0].mxu0
      %v3021 = vadd.f32 0.0, %v3020
      %v3022 = vpop.f32.mrb[0].mxu0
      %3023 = vdwg.mxu0
      %3024 = vmatprep.subr.bf16.mxu0 0
      %3025 = vmatpush1.bf16.msra.mxu0 %v2855
      %3026 = vmatprep.subr.bf16.mxu0 0
      %3027 = vmatpush1.bf16.msra.mxu0 %v2856
      %3028 = vmatprep.subr.bf16.mxu0 0
      %3029 = vmatpush1.bf16.msra.mxu0 %v2857
      %3030 = vmatprep.subr.bf16.mxu0 0
      %3031 = vmatpush1.bf16.msra.mxu0 %v2858
      %3032 = vmatprep.subr.bf16.mxu0 0
      %3033 = vmatpush1.bf16.msra.mxu0 %v2859
      %3034 = vmatprep.subr.bf16.mxu0 0
      %3035 = vmatpush1.bf16.msra.mxu0 %v2860
      %3036 = vmatprep.subr.bf16.mxu0 0
      %3037 = vmatpush1.bf16.msra.mxu0 %v2861
      %3038 = vmatprep.subr.bf16.mxu0 0
      %3039 = vmatpush1.bf16.msra.mxu0 %v2862
      %3040 = vmatprep.subr.bf16.mxu0 0
      %3041 = vmatpush1.bf16.msra.mxu0 0
      %3042 = vmatprep.subr.bf16.mxu0 0
      %3043 = vmatpush1.bf16.msra.mxu0 0
      %3044 = vmatprep.subr.bf16.mxu0 0
      %3045 = vmatpush1.bf16.msra.mxu0 0
      %3046 = vmatprep.subr.bf16.mxu0 0
      %3047 = vmatpush1.bf16.msra.mxu0 0
      %3048 = vmatprep.subr.bf16.mxu0 0
      %3049 = vmatpush1.bf16.msra.mxu0 0
      %3050 = vmatprep.subr.bf16.mxu0 0
      %3051 = vmatpush1.bf16.msra.mxu0 0
      %3052 = vmatprep.subr.bf16.mxu0 0
      %3053 = vmatpush1.bf16.msra.mxu0 0
      %3054 = vmatprep.subr.bf16.mxu0 0
      %3055 = vmatpush1.bf16.msra.mxu0 0
      %3056 = vmatprep.mubr.bf16.mxu0 0
      %3057 = vmatmul.mubr.bf16.gmra.mrb[0].mxu0 %v2631
      %v3058 = vpop.f32.mrb[0].mxu0
      %v3059 = vadd.f32 %v2922, %v3058
      %v3060 = vpop.f32.mrb[0].mxu0
      %v3061 = vpop.f32.mrb[0].mxu0
      %v3062 = vadd.f32 %v2925, %v3061
      %v3063 = vpop.f32.mrb[0].mxu0
      %3064 = vmatprep.mubr.bf16.mxu0 0
      %3065 = vmatmul.mubr.bf16.gmra.mrb[0].mxu0 %v2637
      %v3066 = vpop.f32.mrb[0].mxu0
      %v3067 = vadd.f32 %v2930, %v3066
      %v3068 = vpop.f32.mrb[0].mxu0
      %v3069 = vpop.f32.mrb[0].mxu0
      %v3070 = vadd.f32 %v2933, %v3069
      %v3071 = vpop.f32.mrb[0].mxu0
      %3072 = vmatprep.mubr.bf16.mxu0 0
      %3073 = vmatmul.mubr.bf16.gmra.mrb[0].mxu0 %v2643
      %v3074 = vpop.f32.mrb[0].mxu0
      %v3075 = vadd.f32 %v2938, %v3074
      %v3076 = vpop.f32.mrb[0].mxu0
      %v3077 = vpop.f32.mrb[0].mxu0
      %v3078 = vadd.f32 %v2941, %v3077
      %v3079 = vpop.f32.mrb[0].mxu0
      %3080 = vmatprep.mubr.bf16.mxu0 0
      %3081 = vmatmul.mubr.bf16.gmra.mrb[0].mxu0 %v2649
      %v3082 = vpop.f32.mrb[0].mxu0
      %v3083 = vadd.f32 %v2946, %v3082
      %v3084 = vpop.f32.mrb[0].mxu0
      %v3085 = vpop.f32.mrb[0].mxu0
      %v3086 = vadd.f32 %v2949, %v3085
      %v3087 = vpop.f32.mrb[0].mxu0
      %3088 = vmatprep.mubr.bf16.mxu0 0
      %3089 = vmatmul.mubr.bf16.gmra.mrb[0].mxu0 %v2655
      %v3090 = vpop.f32.mrb[0].mxu0
      %v3091 = vadd.f32 %v2954, %v3090
      %v3092 = vpop.f32.mrb[0].mxu0
      %v3093 = vpop.f32.mrb[0].mxu0
      %v3094 = vadd.f32 %v2957, %v3093
      %v3095 = vpop.f32.mrb[0].mxu0
      %3096 = vmatprep.mubr.bf16.mxu0 0
      %3097 = vmatmul.mubr.bf16.gmra.mrb[0].mxu0 %v2661
      %v3098 = vpop.f32.mrb[0].mxu0
      %v3099 = vadd.f32 %v2962, %v3098
      %v3100 = vpop.f32.mrb[0].mxu0
      %v3101 = vpop.f32.mrb[0].mxu0
      %v3102 = vadd.f32 %v2965, %v3101
      %v3103 = vpop.f32.mrb[0].mxu0
      %3104 = vmatprep.mubr.bf16.mxu0 0
      %3105 = vmatmul.mubr.bf16.gmra.mrb[0].mxu0 %v2667
      %v3106 = vpop.f32.mrb[0].mxu0
      %v3107 = vadd.f32 %v2970, %v3106
      %v3108 = vpop.f32.mrb[0].mxu0
      %v3109 = vpop.f32.mrb[0].mxu0
      %v3110 = vadd.f32 %v2973, %v3109
      %v3111 = vpop.f32.mrb[0].mxu0
      %3112 = vmatprep.mubr.bf16.mxu0 0
      %3113 = vmatmul.mubr.bf16.gmra.mrb[0].mxu0 %v2673
      %v3114 = vpop.f32.mrb[0].mxu0
      %v3115 = vadd.f32 %v2978, %v3114
      %v3116 = vpop.f32.mrb[0].mxu0
      %v3117 = vpop.f32.mrb[0].mxu0
      %v3118 = vadd.f32 %v2981, %v3117
      %v3119 = vpop.f32.mrb[0].mxu0
      %3120 = vmatprep.mubr.bf16.mxu0 0
      %3121 = vmatmul.mubr.bf16.gmra.mrb[0].mxu0 %v2679
      %v3122 = vpop.f32.mrb[0].mxu0
      %v3123 = vadd.f32 %v2986, %v3122
      %v3124 = vpop.f32.mrb[0].mxu0
      %v3125 = vpop.f32.mrb[0].mxu0
      %v3126 = vadd.f32 %v2989, %v3125
      %v3127 = vpop.f32.mrb[0].mxu0
      %3128 = vmatprep.mubr.bf16.mxu0 0
      %3129 = vmatmul.mubr.bf16.gmra.mrb[0].mxu0 %v2685
      %v3130 = vpop.f32.mrb[0].mxu0
      %v3131 = vadd.f32 %v2994, %v3130
      %v3132 = vpop.f32.mrb[0].mxu0
      %v3133 = vpop.f32.mrb[0].mxu0
      %v3134 = vadd.f32 %v2997, %v3133
      %v3135 = vpop.f32.mrb[0].mxu0
      %3136 = vmatprep.mubr.bf16.mxu0 0
      %3137 = vmatmul.mubr.bf16.gmra.mrb[0].mxu0 %v2691
      %v3138 = vpop.f32.mrb[0].mxu0
      %v3139 = vadd.f32 %v3002, %v3138
      %v3140 = vpop.f32.mrb[0].mxu0
      %v3141 = vpop.f32.mrb[0].mxu0
      %v3142 = vadd.f32 %v3005, %v3141
      %v3143 = vpop.f32.mrb[0].mxu0
      %3144 = vmatprep.mubr.bf16.mxu0 0
      %3145 = vmatmul.mubr.bf16.gmra.mrb[0].mxu0 %v2697
      %v3146 = vpop.f32.mrb[0].mxu0
      %v3147 = vadd.f32 %v3010, %v3146
      %v3148 = vpop.f32.mrb[0].mxu0
      %v3149 = vpop.f32.mrb[0].mxu0
      %v3150 = vadd.f32 %v3013, %v3149
      %v3151 = vpop.f32.mrb[0].mxu0
      %3152 = vmatprep.mubr.bf16.mxu0 0
      %3153 = vmatmul.mubr.bf16.gmra.mrb[0].mxu0 %v2703
      %v3154 = vpop.f32.mrb[0].mxu0
      %v3155 = vadd.f32 %v3018, %v3154
      %v3156 = vpop.f32.mrb[0].mxu0
      %v3157 = vpop.f32.mrb[0].mxu0
      %v3158 = vadd.f32 %v3021, %v3157
      %v3159 = vpop.f32.mrb[0].mxu0
      %3160 = vdwg.mxu0
      %v3161 = vadd.f32 %v2387, %v3059
      %v3162 = vadd.f32 %v2390, %v3062
      %v3163 = vadd.f32 %v2395, %v3067
      %v3164 = vadd.f32 %v2398, %v3070
      %v3165 = vadd.f32 %v2403, %v3075
      %v3166 = vadd.f32 %v2406, %v3078
      %v3167 = vadd.f32 %v2411, %v3083
      %v3168 = vadd.f32 %v2414, %v3086
      %v3169 = vadd.f32 %v2419, %v3091
      %v3170 = vadd.f32 %v2422, %v3094
      %v3171 = vadd.f32 %v2427, %v3099
      %v3172 = vadd.f32 %v2430, %v3102
      %v3173 = vadd.f32 %v2435, %v3107
      %v3174 = vadd.f32 %v2438, %v3110
      %v3175 = vadd.f32 %v2443, %v3115
      %v3176 = vadd.f32 %v2446, %v3118
      %v3177 = vadd.f32 %v2451, %v3123
      %v3178 = vadd.f32 %v2454, %v3126
      %v3179 = vadd.f32 %v2459, %v3131
      %v3180 = vadd.f32 %v2462, %v3134
      %v3181 = vadd.f32 %v2467, %v3139
      %v3182 = vadd.f32 %v2470, %v3142
      %v3183 = vadd.f32 %v2475, %v3147
      %v3184 = vadd.f32 %v2478, %v3150
      %v3185 = vadd.f32 %v2483, %v3155
      %v3186 = vadd.f32 %v2486, %v3158
      %v3187 = vld [vmem:[%s6] sm:$0x1]
      %v3189 = vlaneseq
      %v3190 = vshrl.u32 %v3189, 7
      %v3191 = vsub.s32 0, %v3190
      %v3192 = vrot.slane %v3187, %v3191
      %v3194 = vmul.f32 %v3161, %v3192
      %v3195 = vmul.f32 %v3162, %v3192
      %v3196 = vmul.f32 %v3163, %v3192
      %v3197 = vmul.f32 %v3164, %v3192
      %v3198 = vmul.f32 %v3165, %v3192
      %v3199 = vmul.f32 %v3166, %v3192
      %v3200 = vmul.f32 %v3167, %v3192
      %v3201 = vmul.f32 %v3168, %v3192
      %v3202 = vmul.f32 %v3169, %v3192
      %v3203 = vmul.f32 %v3170, %v3192
      %v3204 = vmul.f32 %v3171, %v3192
      %v3205 = vmul.f32 %v3172, %v3192
      %v3206 = vmul.f32 %v3173, %v3192
      %v3207 = vmul.f32 %v3174, %v3192
      %v3208 = vmul.f32 %v3175, %v3192
      %v3209 = vmul.f32 %v3176, %v3192
      %v3210 = vmul.f32 %v3177, %v3192
      %v3211 = vmul.f32 %v3178, %v3192
      %v3212 = vmul.f32 %v3179, %v3192
      %v3213 = vmul.f32 %v3180, %v3192
      %v3214 = vmul.f32 %v3181, %v3192
      %v3215 = vmul.f32 %v3182, %v3192
      %v3216 = vmul.f32 %v3183, %v3192
      %v3217 = vmul.f32 %v3184, %v3192
      %v3218 = vmul.f32 %v3185, %v3192
      %v3219 = vmul.f32 %v3186, %v3192
      %v3220 = vld [vmem:[%s7] sm:$0x1]
      %v3222 = vlaneseq
      %v3223 = vshrl.u32 %v3222, 7
      %v3224 = vsub.s32 0, %v3223
      %v3225 = vrot.slane %v3220, %v3224
      %v3227 = vadd.f32 %v3194, %v3225
      %v3228 = vadd.f32 %v3195, %v3225
      %v3229 = vadd.f32 %v3196, %v3225
      %v3230 = vadd.f32 %v3197, %v3225
      %v3231 = vadd.f32 %v3198, %v3225
      %v3232 = vadd.f32 %v3199, %v3225
      %v3233 = vadd.f32 %v3200, %v3225
      %v3234 = vadd.f32 %v3201, %v3225
      %v3235 = vadd.f32 %v3202, %v3225
      %v3236 = vadd.f32 %v3203, %v3225
      %v3237 = vadd.f32 %v3204, %v3225
      %v3238 = vadd.f32 %v3205, %v3225
      %v3239 = vadd.f32 %v3206, %v3225
      %v3240 = vadd.f32 %v3207, %v3225
      %v3241 = vadd.f32 %v3208, %v3225
      %v3242 = vadd.f32 %v3209, %v3225
      %v3243 = vadd.f32 %v3210, %v3225
      %v3244 = vadd.f32 %v3211, %v3225
      %v3245 = vadd.f32 %v3212, %v3225
      %v3246 = vadd.f32 %v3213, %v3225
      %v3247 = vadd.f32 %v3214, %v3225
      %v3248 = vadd.f32 %v3215, %v3225
      %v3249 = vadd.f32 %v3216, %v3225
      %v3250 = vadd.f32 %v3217, %v3225
      %v3251 = vadd.f32 %v3218, %v3225
      %v3252 = vadd.f32 %v3219, %v3225
      %v3253 = vld [vmem:[%s353] sm:$0xf]
      %v3254 = vld [vmem:[%s353 + $0x4] sm:$0xf]
      %v3255 = vld [vmem:[%s353 + $0x8] sm:$0xf]
      %v3256 = vld [vmem:[%s353 + $0xc] sm:$0xf]
      %v3257 = vld [vmem:[%s353 + $0x10] sm:$0xf]
      %v3258 = vld [vmem:[%s353 + $0x14] sm:$0xf]
      %v3259 = vld [vmem:[%s353 + $0x18] sm:$0xf]
      %v3260 = vld [vmem:[%s353 + $0x1c] sm:$0xf]
      %v3261 = vld [vmem:[%s353 + $0x20] sm:$0xf]
      %v3262 = vld [vmem:[%s353 + $0x24] sm:$0xf]
      %v3263 = vld [vmem:[%s353 + $0x28] sm:$0xf]
      %v3264 = vld [vmem:[%s353 + $0x2c] sm:$0xf]
      %v3265 = vld [vmem:[%s353 + $0x30] sm:$0xf]
      %v3266 = vld [vmem:[%s353 + $0x34] sm:$0xf]
      %v3267 = vld [vmem:[%s353 + $0x38] sm:$0xf]
      %v3268 = vld [vmem:[%s353 + $0x3c] sm:$0xf]
      %v3269 = vld [vmem:[%s353 + $0x40] sm:$0xf]
      %v3270 = vld [vmem:[%s353 + $0x44] sm:$0xf]
      %v3271 = vld [vmem:[%s353 + $0x48] sm:$0xf]
      %v3272 = vld [vmem:[%s353 + $0x4c] sm:$0xf]
      %v3273 = vld [vmem:[%s353 + $0x50] sm:$0xf]
      %v3274 = vld [vmem:[%s353 + $0x54] sm:$0xf]
      %v3275 = vld [vmem:[%s353 + $0x58] sm:$0xf]
      %v3276 = vld [vmem:[%s353 + $0x5c] sm:$0xf]
      %v3277 = vld [vmem:[%s353 + $0x60] sm:$0xf]
      %v3278 = vld [vmem:[%s353 + $0x64] sm:$0xf]
      %v3279 = vunpack.c.l.bf16 %v3253
      %v3280 = vunpack.c.l.bf16 %v3254
      %v3281 = vunpack.c.l.bf16 %v3255
      %v3282 = vunpack.c.l.bf16 %v3256
      %v3283 = vunpack.c.l.bf16 %v3257
      %v3284 = vunpack.c.l.bf16 %v3258
      %v3285 = vunpack.c.l.bf16 %v3259
      %v3286 = vunpack.c.l.bf16 %v3260
      %v3287 = vunpack.c.l.bf16 %v3261
      %v3288 = vunpack.c.l.bf16 %v3262
      %v3289 = vunpack.c.l.bf16 %v3263
      %v3290 = vunpack.c.l.bf16 %v3264
      %v3291 = vunpack.c.l.bf16 %v3265
      %v3292 = vunpack.c.l.bf16 %v3266
      %v3293 = vunpack.c.l.bf16 %v3267
      %v3294 = vunpack.c.l.bf16 %v3268
      %v3295 = vunpack.c.l.bf16 %v3269
      %v3296 = vunpack.c.l.bf16 %v3270
      %v3297 = vunpack.c.l.bf16 %v3271
      %v3298 = vunpack.c.l.bf16 %v3272
      %v3299 = vunpack.c.l.bf16 %v3273
      %v3300 = vunpack.c.l.bf16 %v3274
      %v3301 = vunpack.c.l.bf16 %v3275
      %v3302 = vunpack.c.l.bf16 %v3276
      %v3303 = vunpack.c.l.bf16 %v3277
      %v3304 = vunpack.c.l.bf16 %v3278
      %v3305 = vadd.f32 %v3227, %v3279
      %v3306 = vadd.f32 %v3228, %v3280
      %v3307 = vadd.f32 %v3229, %v3281
      %v3308 = vadd.f32 %v3230, %v3282
      %v3309 = vadd.f32 %v3231, %v3283
      %v3310 = vadd.f32 %v3232, %v3284
      %v3311 = vadd.f32 %v3233, %v3285
      %v3312 = vadd.f32 %v3234, %v3286
      %v3313 = vadd.f32 %v3235, %v3287
      %v3314 = vadd.f32 %v3236, %v3288
      %v3315 = vadd.f32 %v3237, %v3289
      %v3316 = vadd.f32 %v3238, %v3290
      %v3317 = vadd.f32 %v3239, %v3291
      %v3318 = vadd.f32 %v3240, %v3292
      %v3319 = vadd.f32 %v3241, %v3293
      %v3320 = vadd.f32 %v3242, %v3294
      %v3321 = vadd.f32 %v3243, %v3295
      %v3322 = vadd.f32 %v3244, %v3296
      %v3323 = vadd.f32 %v3245, %v3297
      %v3324 = vadd.f32 %v3246, %v3298
      %v3325 = vadd.f32 %v3247, %v3299
      %v3326 = vadd.f32 %v3248, %v3300
      %v3327 = vadd.f32 %v3249, %v3301
      %v3328 = vadd.f32 %v3250, %v3302
      %v3329 = vadd.f32 %v3251, %v3303
      %v3330 = vadd.f32 %v3252, %v3304
      %v3331 = vmax.f32 %v3305, 0.0
      %v3332 = vmax.f32 %v3306, 0.0
      %v3333 = vmax.f32 %v3307, 0.0
      %v3334 = vmax.f32 %v3308, 0.0
      %v3335 = vmax.f32 %v3309, 0.0
      %v3336 = vmax.f32 %v3310, 0.0
      %v3337 = vmax.f32 %v3311, 0.0
      %v3338 = vmax.f32 %v3312, 0.0
      %v3339 = vmax.f32 %v3313, 0.0
      %v3340 = vmax.f32 %v3314, 0.0
      %v3341 = vmax.f32 %v3315, 0.0
      %v3342 = vmax.f32 %v3316, 0.0
      %v3343 = vmax.f32 %v3317, 0.0
      %v3344 = vmax.f32 %v3318, 0.0
      %v3345 = vmax.f32 %v3319, 0.0
      %v3346 = vmax.f32 %v3320, 0.0
      %v3347 = vmax.f32 %v3321, 0.0
      %v3348 = vmax.f32 %v3322, 0.0
      %v3349 = vmax.f32 %v3323, 0.0
      %v3350 = vmax.f32 %v3324, 0.0
      %v3351 = vmax.f32 %v3325, 0.0
      %v3352 = vmax.f32 %v3326, 0.0
      %v3353 = vmax.f32 %v3327, 0.0
      %v3354 = vmax.f32 %v3328, 0.0
      %v3355 = vmax.f32 %v3329, 0.0
      %v3356 = vmax.f32 %v3330, 0.0
      %v3357 = vpack.c.bf16 %v3332, %v3331
      %v3358 = vpack.c.bf16 %v3334, %v3333
      %v3359 = vpack.c.bf16 %v3336, %v3335
      %v3360 = vpack.c.bf16 %v3338, %v3337
      %v3361 = vpack.c.bf16 %v3340, %v3339
      %v3362 = vpack.c.bf16 %v3342, %v3341
      %v3363 = vpack.c.bf16 %v3344, %v3343
      %v3364 = vpack.c.bf16 %v3346, %v3345
      %v3365 = vpack.c.bf16 %v3348, %v3347
      %v3366 = vpack.c.bf16 %v3350, %v3349
      %v3367 = vpack.c.bf16 %v3352, %v3351
      %v3368 = vpack.c.bf16 %v3354, %v3353
      %v3369 = vpack.c.bf16 %v3356, %v3355
      %v3383 = vunpack.c.l.b16 %v3357
      %v3384 = vunpack.c.h.b16 %v3357
      %v3385 = vunpack.c.l.b16 %v3358
      %v3386 = vunpack.c.h.b16 %v3358
      %v3387 = vunpack.c.l.b16 %v3359
      %v3388 = vunpack.c.h.b16 %v3359
      %v3389 = vunpack.c.l.b16 %v3360
      %v3390 = vunpack.c.h.b16 %v3360
      %v3391 = vunpack.c.l.b16 %v3361
      %v3392 = vunpack.c.h.b16 %v3361
      %v3393 = vunpack.c.l.b16 %v3362
      %v3394 = vunpack.c.h.b16 %v3362
      %v3395 = vunpack.c.l.b16 %v3363
      %v3396 = vunpack.c.h.b16 %v3363
      %v3397 = vunpack.c.l.b16 %v3364
      %v3398 = vunpack.c.h.b16 %v3364
      %v3399 = vunpack.c.l.b16 %v3365
      %v3400 = vunpack.c.h.b16 %v3365
      %v3401 = vunpack.c.l.b16 %v3366
      %v3402 = vunpack.c.h.b16 %v3366
      %v3403 = vunpack.c.l.b16 %v3367
      %v3404 = vunpack.c.h.b16 %v3367
      %v3405 = vunpack.c.l.b16 %v3368
      %v3406 = vunpack.c.h.b16 %v3368
      %v3407 = vunpack.c.l.b16 %v3369
      %v3408 = vunpack.c.h.b16 %v3369
      %v3409 = vpack.c.b16 %v3383, %v3383
      %v3410 = vpack.c.b16 %v3384, %v3384
      %v3411 = vpack.c.b16 %v3385, %v3385
      %v3412 = vpack.c.b16 %v3386, %v3386
      %v3413 = vpack.c.b16 %v3387, %v3387
      %v3414 = vpack.c.b16 %v3388, %v3388
      %v3415 = vpack.c.b16 %v3389, %v3389
      %v3416 = vpack.c.b16 %v3390, %v3390
      %v3417 = vpack.c.b16 %v3391, %v3391
      %v3418 = vpack.c.b16 %v3392, %v3392
      %v3419 = vpack.c.b16 %v3393, %v3393
      %v3420 = vpack.c.b16 %v3394, %v3394
      %v3421 = vpack.c.b16 %v3395, %v3395
      %v3422 = vpack.c.b16 %v3396, %v3396
      %v3423 = vpack.c.b16 %v3397, %v3397
      %v3424 = vpack.c.b16 %v3398, %v3398
      %v3425 = vpack.c.b16 %v3399, %v3399
      %v3426 = vpack.c.b16 %v3400, %v3400
      %v3427 = vpack.c.b16 %v3401, %v3401
      %v3428 = vpack.c.b16 %v3402, %v3402
      %v3429 = vpack.c.b16 %v3403, %v3403
      %v3430 = vpack.c.b16 %v3404, %v3404
      %v3431 = vpack.c.b16 %v3405, %v3405
      %v3432 = vpack.c.b16 %v3406, %v3406
      %v3433 = vpack.c.b16 %v3407, %v3407
      %v3434 = vpack.c.b16 %v3408, %v3408
      %3461 = vst [vmem:[%s359] sm:$0xf] %v3409
      %3462 = vst [vmem:[%s359 + $0x4] sm:$0xf] %v3410
      %3463 = vst [vmem:[%s359 + $0x8] sm:$0xf] %v3411
      %3464 = vst [vmem:[%s359 + $0xc] sm:$0xf] %v3412
      %3465 = vst [vmem:[%s359 + $0x10] sm:$0xf] %v3413
      %3466 = vst [vmem:[%s359 + $0x14] sm:$0xf] %v3414
      %3467 = vst [vmem:[%s359 + $0x18] sm:$0xf] %v3415
      %3468 = vst [vmem:[%s359 + $0x1c] sm:$0xf] %v3416
      %3469 = vst [vmem:[%s359 + $0x20] sm:$0xf] %v3417
      %3470 = vst [vmem:[%s359 + $0x24] sm:$0xf] %v3418
      %3471 = vst [vmem:[%s359 + $0x28] sm:$0xf] %v3419
      %3472 = vst [vmem:[%s359 + $0x2c] sm:$0xf] %v3420
      %3473 = vst [vmem:[%s359 + $0x30] sm:$0xf] %v3421
      %3474 = vst [vmem:[%s359 + $0x34] sm:$0xf] %v3422
      %3475 = vst [vmem:[%s359 + $0x38] sm:$0xf] %v3423
      %3476 = vst [vmem:[%s359 + $0x3c] sm:$0xf] %v3424
      %3477 = vst [vmem:[%s359 + $0x40] sm:$0xf] %v3425
      %3478 = vst [vmem:[%s359 + $0x44] sm:$0xf] %v3426
      %3479 = vst [vmem:[%s359 + $0x48] sm:$0xf] %v3427
      %3480 = vst [vmem:[%s359 + $0x4c] sm:$0xf] %v3428
      %3481 = vst [vmem:[%s359 + $0x50] sm:$0xf] %v3429
      %3482 = vst [vmem:[%s359 + $0x54] sm:$0xf] %v3430
      %3483 = vst [vmem:[%s359 + $0x58] sm:$0xf] %v3431
      %3484 = vst [vmem:[%s359 + $0x5c] sm:$0xf] %v3432
      %3485 = vst [vmem:[%s359 + $0x60] sm:$0xf] %v3433
      %3486 = vst [vmem:[%s359 + $0x64] sm:$0xf] %v3434
      %s3487 = smul.u32 26, %s20
      %p3488 = scmp.lt.s32.totalorder %s3487, 51
      %s3489 = scalar_select %p3488, %s3487, 51
      %s3490 = smul.addr %s3489, 4
      %s3491 = scalar_lea.vmem %s9, %s3490
      // Predicated region
      $region61: #{basic_block_forward.1} parent=55 // pred_check
        %p3492 = pneg %p237
      $region62: #{basic_block_forward.1} parent=55 // pred_check_branch
        %3494 = sbr.rel (%p3492) target = $region64
      $region63: #{basic_block_forward.1} parent=55 // pred_region
        %s3495 = smul.u32 26, %s20
      $region64: #{basic_block_forward.1} parent=55 // pred_fallthru
        _
    $region56: #{basic_block_forward.1} parent=5 // pred_fallthru
      _
    %p3496 = scmp.le.s32.totalorder 2, %s15
    // Predicated region
    $region65: #{basic_block_forward.1} parent=5 // pred_check
      %p3497 = pneg %p3496
    $region66: #{basic_block_forward.1} parent=5 // pred_check_branch
      %3499 = sbr.rel (%p3497) target = $region68
    $region67: #{basic_block_forward.1} parent=5 // pred_region
      %s3500 = ssub.s32 %s15, 2
      // Predicated region
      $region69: #{basic_block_forward.1} parent=67 // pred_check
        %p3501 = pneg %p243
      $region70: #{basic_block_forward.1} parent=67 // pred_check_branch
        %3503 = sbr.rel (%p3501) target = $region72
      $region71: #{basic_block_forward.1} parent=67 // pred_region
        %s3504 = smul.u32 26, %s21
        %p3505 = scmp.lt.s32.totalorder %s3504, 51
        %s3506 = scalar_select %p3505, %s3504, 51
        %s3507 = smul.addr %s3506, 4
        %s3508 = scalar_lea.vmem %s9, %s3507
      $region72: #{basic_block_forward.1} parent=67 // pred_fallthru
        _
    $region68: #{basic_block_forward.1} parent=5 // pred_fallthru
      _
  $region6: #{basic_block_forward.1} parent=0 // loop_footer
    %s19 = sadd.s32 1, %s15
  $region7: #{basic_block_forward.1} parent=0 // loop_footer_branch
    %14 = sbr.rel target = $region3
  $region8: #{basic_block_forward.1} parent=0 // loop_exit
    _

</llo_original>
